<compile_context>
chip_gen: v7x
topology: tpu7x:2x2x1
jax: 0.10.0
libtpu: 0.0.40
codegen_flags: <defaults>
</compile_context>

<pallas_src>
import functools

import jax
import jax.numpy as jnp
from jax.experimental import pallas as pl
from jax.experimental.pallas import tpu as pltpu

EPS = 1e-5
HEAD_LANES = 128  # lane-dense head/output width (value col 0, logits cols 1..A, zero pad)

# Residual-block index (0..5) -> downsample param index (first block of layer2/layer3).
_DS_IDX = {2: 0, 4: 1}

# Row layout of the packed (27, H) vector slab.
_ROW_FC_B = 0
_ROW_BN0_G = 1
_ROW_BN0_B = 2
_ROW_BLK_B = 3     # 6 rows
_ROW_BLK_G = 9     # 6 rows
_ROW_BLK_BE = 15   # 6 rows
_ROW_DS_B = 21     # 2 rows
_ROW_DS_G = 23     # 2 rows
_ROW_DS_BE = 25    # 2 rows
_N_VEC_ROWS = 27


def _actor_critic_kernel(
    x_ref, fc_w_ref, wblob_ref, vecs_ref, head_w_ref, head_b_ref,
    out_ref, *, num_actions,
):
    hidden = fc_w_ref.shape[1]

    def linear(h_bf16, w_bf16):
        # bf16 operands on the MXU, f32 accumulation.
        return jnp.dot(h_bf16, w_bf16, preferred_element_type=jnp.float32)

    def batchnorm(h, gamma, beta):
        # BatchNorm1d in training mode (biased batch statistics), folded to one affine.
        # ONE fused sublane reduction produces both E[h] and E[h^2] (review item #2).
        # Note: one-pass var = E[h^2] - mu^2 (clamped >= 0); acceptable for RL-scale
        # activations, two-pass mean((h-mu)^2) would need a second serial reduction.
        stats = jnp.mean(jnp.concatenate([h, h * h], axis=-1), axis=0, keepdims=True)
        mu = stats[:, :hidden]
        ex2 = stats[:, hidden:]
        var = jnp.maximum(ex2 - mu * mu, 0.0)
        scale = gamma * jax.lax.rsqrt(var + EPS)     # rsqrt on the EUP
        shift = beta - mu * scale
        return h * scale + shift

    vecs = vecs_ref[...]  # (27, H) f32, single packed load

    # ResNet stem: fc -> bn -> relu
    out = linear(x_ref[...].astype(jnp.bfloat16), fc_w_ref[...]) + vecs[_ROW_FC_B:_ROW_FC_B + 1]
    out = jnp.maximum(
        batchnorm(out, vecs[_ROW_BN0_G:_ROW_BN0_G + 1], vecs[_ROW_BN0_B:_ROW_BN0_B + 1]),
        0.0,
    )

    # 3 layers x 2 ResidualBlocks. Each block reuses its single fc and single bn twice,
    # exactly as the PyTorch module does (fc -> bn -> relu -> fc -> relu -> bn).
    for i in range(6):
        w = wblob_ref[i]                            # (H, H) bf16, shared by both dots
        b = vecs[_ROW_BLK_B + i:_ROW_BLK_B + i + 1]
        g = vecs[_ROW_BLK_G + i:_ROW_BLK_G + i + 1]
        be = vecs[_ROW_BLK_BE + i:_ROW_BLK_BE + i + 1]

        residual = out
        out_bf16 = out.astype(jnp.bfloat16)          # hoisted: cast once, reused below
        h = linear(out_bf16, w) + b
        h = batchnorm(h, g, be)
        h = jnp.maximum(h, 0.0)
        h = linear(h.astype(jnp.bfloat16), w) + b
        h = jnp.maximum(h, 0.0)
        h = batchnorm(h, g, be)
        if i in _DS_IDX:
            j = _DS_IDX[i]
            residual = batchnorm(
                linear(out_bf16, wblob_ref[6 + j]) + vecs[_ROW_DS_B + j:_ROW_DS_B + j + 1],
                vecs[_ROW_DS_G + j:_ROW_DS_G + j + 1],
                vecs[_ROW_DS_BE + j:_ROW_DS_BE + j + 1],
            )
        out = jnp.maximum(h + residual, 0.0)

    # Fused heads: one lane-dense (B, 128) matmul, kept in f32 for the small head weight.
    #   column 0        -> value head
    #   columns 1..A    -> (pi o dist_layer) logits (folded in the wrapper)
    #   columns A+1..   -> zero padding
    head = jnp.dot(out, head_w_ref[...], preferred_element_type=jnp.float32) + head_b_ref[...]

    lane = jax.lax.broadcasted_iota(jnp.int32, head.shape, 1)
    is_logit = jnp.logical_and(lane >= 1, lane <= num_actions)
    neg_big = jnp.float32(-1e30)

    masked = jnp.where(is_logit, head, neg_big)
    m = jnp.max(masked, axis=-1, keepdims=True)
    p = jnp.exp(masked - m)                                  # 0 on non-logit lanes
    lse = jnp.log(jnp.sum(p, axis=-1, keepdims=True))
    logp = head - m - lse                                    # log_softmax on logit lanes

    # Lane-dense output slab: [value | log_probs | (don't care)]
    out_ref[...] = jnp.where(lane == 0, head, logp)


def pack_params(params):
    """Fold heads, pack tiny vectors into one slab, cast matmul weights to bf16."""
    H = params["pi_w"].shape[0]
    A = params["dist_w"].shape[1]

    # Fuse pi head + dist_layer (no nonlinearity between them in the module),
    # then fold the value head in as column 0 of the same (H, 128) weight.
    pi_dist_w = params["pi_w"] @ params["dist_w"]                          # (H, A)
    pi_dist_b = params["pi_b"] @ params["dist_w"] + params["dist_b"]       # (1, A)
    head_w = jnp.zeros((H, HEAD_LANES), jnp.float32)
    head_w = head_w.at[:, 0:1].set(params["v_w"]).at[:, 1:1 + A].set(pi_dist_w)
    head_b = jnp.zeros((1, HEAD_LANES), jnp.float32)
    head_b = head_b.at[:, 0:1].set(params["v_b"]).at[:, 1:1 + A].set(pi_dist_b)

    # All (1,H) bias / BN vectors -> one (27, H) slab (single DMA, single VMEM tile).
    vecs = jnp.concatenate(
        [
            params["fc_b"], params["bn0_g"], params["bn0_b"],
            params["blk_fc_b"].reshape(6, H),
            params["blk_bn_g"].reshape(6, H),
            params["blk_bn_b"].reshape(6, H),
            params["ds_b"].reshape(2, H),
            params["ds_bn_g"].reshape(2, H),
            params["ds_bn_b"].reshape(2, H),
        ],
        axis=0,
    ).astype(jnp.float32)
    assert vecs.shape[0] == _N_VEC_ROWS

    # Block fc weights + downsample weights -> one (8, H, H) bf16 blob.
    wblob = jnp.concatenate([params["blk_fc_w"], params["ds_w"]], axis=0).astype(jnp.bfloat16)

    return {
        "fc_w": params["fc_w"].astype(jnp.bfloat16),
        "wblob": wblob,
        "vecs": vecs,
        "head_w": head_w,          # kept f32 (tiny; avoids bf16 perturbation of logits)
        "head_b": head_b,
        "num_actions": A,
    }


def actor_critic_forward(packed, x, sample_key):
    """Returns (value [B,1], action [B], log_prob [B,1]) like ActorCritic.forward."""
    B, D = x.shape
    H = packed["fc_w"].shape[1]
    A = packed["num_actions"]

    flops = 2 * B * (D * H + 14 * H * H + H * HEAD_LANES)
    transcendentals = 15 * H + B * HEAD_LANES
    in_bytes = (
        x.size * 4
        + packed["fc_w"].size * 2
        + packed["wblob"].size * 2
        + packed["vecs"].size * 4
        + packed["head_w"].size * 4
        + packed["head_b"].size * 4
    )
    out_bytes = B * HEAD_LANES * 4
    bytes_accessed = in_bytes + out_bytes

    # Scoped VMEM budget: actual resident footprint + activation headroom, clamped so it
    # never exceeds v7x's 64 MiB physical VMEM but rises above the 16/32 MiB defaults
    # whenever the resident weights need it (review items: v5e scoped limit, v7x budget).
    act_bytes = 8 * B * max(2 * H, HEAD_LANES) * 4
    vmem_limit = int(min(max(2 * (in_bytes + out_bytes) + act_bytes + (4 << 20), 32 << 20),
                         64 << 20))

    vmem = pl.BlockSpec(memory_space=pltpu.MemorySpace.VMEM)
    kernel = functools.partial(_actor_critic_kernel, num_actions=A)
    slab = pl.pallas_call(
        kernel,
        out_shape=jax.ShapeDtypeStruct((B, HEAD_LANES), jnp.float32),
        in_specs=[vmem] * 6,
        out_specs=vmem,
        compiler_params=pltpu.CompilerParams(vmem_limit_bytes=vmem_limit),
        cost_estimate=pl.CostEstimate(
            flops=flops, transcendentals=transcendentals, bytes_accessed=bytes_accessed
        ),
    )(x, packed["fc_w"], packed["wblob"], packed["vecs"], packed["head_w"], packed["head_b"])

    value = slab[:, 0:1]
    log_probs = slab[:, 1:1 + A]

    # Glue: sample the Categorical and gather log pi(a) (dist.sample / dist.log_probs).
    action = jax.random.categorical(sample_key, log_probs, axis=-1)
    log_prob = jnp.take_along_axis(log_probs, action[:, None], axis=-1)
    return value, action, log_prob


def init_params(key, num_inputs, hidden_size, num_outputs):
    """Deterministic synthetic parameters matching the module's shapes."""
    ks = jax.random.split(key, 16)
    H, D, A = hidden_size, num_inputs, num_outputs
    n = lambda k, shape, s=0.1: (s * jax.random.normal(k, shape)).astype(jnp.float32)
    params = {
        # stem
        "fc_w": n(ks[0], (D, H)), "fc_b": jnp.zeros((1, H), jnp.float32),
        "bn0_g": jnp.ones((1, H), jnp.float32), "bn0_b": jnp.zeros((1, H), jnp.float32),
        # 6 residual blocks
        "blk_fc_w": n(ks[1], (6, H, H)), "blk_fc_b": n(ks[2], (6, 1, H), 0.01),
        "blk_bn_g": jnp.ones((6, 1, H), jnp.float32),
        "blk_bn_b": jnp.zeros((6, 1, H), jnp.float32),
        # downsample branches (first block of layer2 and layer3)
        "ds_w": n(ks[3], (2, H, H)), "ds_b": n(ks[4], (2, 1, H), 0.01),
        "ds_bn_g": jnp.ones((2, 1, H), jnp.float32),
        "ds_bn_b": jnp.zeros((2, 1, H), jnp.float32),
        # heads
        "pi_w": n(ks[5], (H, H)), "pi_b": jnp.zeros((1, H), jnp.float32),
        "v_w": n(ks[6], (H, 1)), "v_b": jnp.zeros((1, 1), jnp.float32),
        # dist layer (orthogonal gain=0.01 approximated with small normal, bias 0)
        "dist_w": n(ks[7], (H, A), 0.01), "dist_b": jnp.zeros((1, A), jnp.float32),
    }
    return params


if __name__ == "__main__":
    # B=128: fills the MXU M dimension / 8-sublane tiles (review item #1) while the whole
    # batch still runs in one gridless kernel so BatchNorm statistics stay exact.
    B, D, H, A = 128, 32, 16, 6  # batch, num_inputs, hidden_size, num_outputs
    key = jax.random.PRNGKey(0)
    k_param, k_x, k_sample = jax.random.split(key, 3)

    params = init_params(k_param, D, H, A)
    packed = pack_params(params)
    x = jax.random.normal(k_x, (B, D), dtype=jnp.float32)

    # Params closed over -> jit constants (no per-step re-staging of the tiny arrays).
    fwd = jax.jit(functools.partial(actor_critic_forward, packed))
    value, action, log_prob = fwd(x, k_sample)
    jax.block_until_ready((value, action, log_prob))

    assert value.shape == (B, 1) and action.shape == (B,) and log_prob.shape == (B, 1)
    assert bool(jnp.all(jnp.isfinite(value))) and bool(jnp.all(jnp.isfinite(log_prob)))
    assert bool(jnp.all(log_prob <= 0.0)) and bool(jnp.all(action >= 0)) and bool(jnp.all(action < A))
    print("KERNEL_OK")
</pallas_src>

<mosaic_0001>
module attributes {stable_mosaic.version = 11 : i64} {
  func.func @_actor_critic_kernel(%arg0: memref<128x32xf32, #tpu.memory_space<vmem>>, %arg1: memref<32x16xbf16, #tpu.memory_space<vmem>>, %arg2: memref<8x16x16xbf16, #tpu.memory_space<vmem>>, %arg3: memref<27x16xf32, #tpu.memory_space<vmem>>, %arg4: memref<16x128xf32, #tpu.memory_space<vmem>>, %arg5: memref<1x128xf32, #tpu.memory_space<vmem>>, %arg6: memref<128x128xf32, #tpu.memory_space<vmem>>) attributes {dimension_semantics = [], scalar_prefetch = 0 : i64, scratch_operands = 0 : i64, tpu.core_type = #tpu.core_type<tc>} {
    %c0 = arith.constant 0 : index
    %c0_0 = arith.constant 0 : index
    %0 = vector.load %arg3[%c0, %c0_0] : memref<27x16xf32, #tpu.memory_space<vmem>>, vector<27x16xf32>
    %c0_1 = arith.constant 0 : index
    %c0_2 = arith.constant 0 : index
    %1 = vector.load %arg0[%c0_1, %c0_2] : memref<128x32xf32, #tpu.memory_space<vmem>>, vector<128x32xf32>
    %2 = arith.truncf %1 : vector<128x32xf32> to vector<128x32xbf16>
    %c0_3 = arith.constant 0 : index
    %c0_4 = arith.constant 0 : index
    %3 = vector.load %arg1[%c0_3, %c0_4] : memref<32x16xbf16, #tpu.memory_space<vmem>>, vector<32x16xbf16>
    %cst = arith.constant dense<0.000000e+00> : vector<128x16xf32>
    %4 = tpu.matmul %2, %3, %cst {dimension_numbers = #tpu.dot_dimension_numbers<[1], [0], [0], [1], [0, 0, 1, 1], [], []>} : vector<128x32xbf16>, vector<32x16xbf16>, vector<128x16xf32> -> vector<128x16xf32>
    %5 = vector.extract_strided_slice %0 {offsets = [0, 0], sizes = [1, 16], strides = [1, 1]} : vector<27x16xf32> to vector<1x16xf32>
    %6 = vector.broadcast %5 : vector<1x16xf32> to vector<128x16xf32>
    %7 = arith.addf %4, %6 : vector<128x16xf32>
    %8 = vector.extract_strided_slice %0 {offsets = [1, 0], sizes = [1, 16], strides = [1, 1]} : vector<27x16xf32> to vector<1x16xf32>
    %9 = vector.extract_strided_slice %0 {offsets = [2, 0], sizes = [1, 16], strides = [1, 1]} : vector<27x16xf32> to vector<1x16xf32>
    %10 = arith.mulf %7, %7 : vector<128x16xf32>
    %11 = tpu.concatenate %7, %10 in 1 : vector<128x16xf32>, vector<128x16xf32> -> vector<128x32xf32>
    %cst_5 = arith.constant dense<0.000000e+00> : vector<32xf32>
    %12 = vector.multi_reduction <add>, %11, %cst_5 [0] : vector<128x32xf32> to vector<32xf32>
    %13 = vector.shape_cast %12 : vector<32xf32> to vector<1x32xf32>
    %cst_6 = arith.constant 1.280000e+02 : f32
    %14 = vector.broadcast %cst_6 : f32 to vector<1x32xf32>
    %15 = arith.divf %13, %14 : vector<1x32xf32>
    %16 = vector.extract_strided_slice %15 {offsets = [0, 0], sizes = [1, 16], strides = [1, 1]} : vector<1x32xf32> to vector<1x16xf32>
    %17 = vector.extract_strided_slice %15 {offsets = [0, 16], sizes = [1, 16], strides = [1, 1]} : vector<1x32xf32> to vector<1x16xf32>
    %18 = arith.mulf %16, %16 : vector<1x16xf32>
    %19 = arith.subf %17, %18 : vector<1x16xf32>
    %cst_7 = arith.constant 0.000000e+00 : f32
    %20 = vector.broadcast %cst_7 : f32 to vector<1x16xf32>
    %21 = arith.maximumf %19, %20 : vector<1x16xf32>
    %cst_8 = arith.constant 9.99999974E-6 : f32
    %22 = vector.broadcast %cst_8 : f32 to vector<1x16xf32>
    %23 = arith.addf %21, %22 : vector<1x16xf32>
    %24 = math.rsqrt %23 : vector<1x16xf32>
    %25 = arith.mulf %8, %24 : vector<1x16xf32>
    %26 = arith.mulf %16, %25 : vector<1x16xf32>
    %27 = arith.subf %9, %26 : vector<1x16xf32>
    %28 = vector.broadcast %25 : vector<1x16xf32> to vector<128x16xf32>
    %29 = arith.mulf %7, %28 : vector<128x16xf32>
    %30 = vector.broadcast %27 : vector<1x16xf32> to vector<128x16xf32>
    %31 = arith.addf %29, %30 : vector<128x16xf32>
    %cst_9 = arith.constant 0.000000e+00 : f32
    %32 = vector.broadcast %cst_9 : f32 to vector<128x16xf32>
    %33 = arith.maximumf %31, %32 : vector<128x16xf32>
    %c0_10 = arith.constant 0 : index
    %c0_11 = arith.constant 0 : index
    %c0_12 = arith.constant 0 : index
    %34 = vector.load %arg2[%c0_10, %c0_11, %c0_12] : memref<8x16x16xbf16, #tpu.memory_space<vmem>>, vector<1x16x16xbf16>
    %35 = vector.shape_cast %34 : vector<1x16x16xbf16> to vector<16x16xbf16>
    %36 = vector.extract_strided_slice %0 {offsets = [3, 0], sizes = [1, 16], strides = [1, 1]} : vector<27x16xf32> to vector<1x16xf32>
    %37 = vector.extract_strided_slice %0 {offsets = [9, 0], sizes = [1, 16], strides = [1, 1]} : vector<27x16xf32> to vector<1x16xf32>
    %38 = vector.extract_strided_slice %0 {offsets = [15, 0], sizes = [1, 16], strides = [1, 1]} : vector<27x16xf32> to vector<1x16xf32>
    %39 = arith.truncf %33 : vector<128x16xf32> to vector<128x16xbf16>
    %cst_13 = arith.constant dense<0.000000e+00> : vector<128x16xf32>
    %40 = tpu.matmul %39, %35, %cst_13 {dimension_numbers = #tpu.dot_dimension_numbers<[1], [0], [0], [1], [0, 0, 1, 1], [], []>} : vector<128x16xbf16>, vector<16x16xbf16>, vector<128x16xf32> -> vector<128x16xf32>
    %41 = vector.broadcast %36 : vector<1x16xf32> to vector<128x16xf32>
    %42 = arith.addf %40, %41 : vector<128x16xf32>
    %43 = arith.mulf %42, %42 : vector<128x16xf32>
    %44 = tpu.concatenate %42, %43 in 1 : vector<128x16xf32>, vector<128x16xf32> -> vector<128x32xf32>
    %cst_14 = arith.constant dense<0.000000e+00> : vector<32xf32>
    %45 = vector.multi_reduction <add>, %44, %cst_14 [0] : vector<128x32xf32> to vector<32xf32>
    %46 = vector.shape_cast %45 : vector<32xf32> to vector<1x32xf32>
    %cst_15 = arith.constant 1.280000e+02 : f32
    %47 = vector.broadcast %cst_15 : f32 to vector<1x32xf32>
    %48 = arith.divf %46, %47 : vector<1x32xf32>
    %49 = vector.extract_strided_slice %48 {offsets = [0, 0], sizes = [1, 16], strides = [1, 1]} : vector<1x32xf32> to vector<1x16xf32>
    %50 = vector.extract_strided_slice %48 {offsets = [0, 16], sizes = [1, 16], strides = [1, 1]} : vector<1x32xf32> to vector<1x16xf32>
    %51 = arith.mulf %49, %49 : vector<1x16xf32>
    %52 = arith.subf %50, %51 : vector<1x16xf32>
    %cst_16 = arith.constant 0.000000e+00 : f32
    %53 = vector.broadcast %cst_16 : f32 to vector<1x16xf32>
    %54 = arith.maximumf %52, %53 : vector<1x16xf32>
    %cst_17 = arith.constant 9.99999974E-6 : f32
    %55 = vector.broadcast %cst_17 : f32 to vector<1x16xf32>
    %56 = arith.addf %54, %55 : vector<1x16xf32>
    %57 = math.rsqrt %56 : vector<1x16xf32>
    %58 = arith.mulf %37, %57 : vector<1x16xf32>
    %59 = arith.mulf %49, %58 : vector<1x16xf32>
    %60 = arith.subf %38, %59 : vector<1x16xf32>
    %61 = vector.broadcast %58 : vector<1x16xf32> to vector<128x16xf32>
    %62 = arith.mulf %42, %61 : vector<128x16xf32>
    %63 = vector.broadcast %60 : vector<1x16xf32> to vector<128x16xf32>
    %64 = arith.addf %62, %63 : vector<128x16xf32>
    %cst_18 = arith.constant 0.000000e+00 : f32
    %65 = vector.broadcast %cst_18 : f32 to vector<128x16xf32>
    %66 = arith.maximumf %64, %65 : vector<128x16xf32>
    %67 = arith.truncf %66 : vector<128x16xf32> to vector<128x16xbf16>
    %cst_19 = arith.constant dense<0.000000e+00> : vector<128x16xf32>
    %68 = tpu.matmul %67, %35, %cst_19 {dimension_numbers = #tpu.dot_dimension_numbers<[1], [0], [0], [1], [0, 0, 1, 1], [], []>} : vector<128x16xbf16>, vector<16x16xbf16>, vector<128x16xf32> -> vector<128x16xf32>
    %69 = vector.broadcast %36 : vector<1x16xf32> to vector<128x16xf32>
    %70 = arith.addf %68, %69 : vector<128x16xf32>
    %cst_20 = arith.constant 0.000000e+00 : f32
    %71 = vector.broadcast %cst_20 : f32 to vector<128x16xf32>
    %72 = arith.maximumf %70, %71 : vector<128x16xf32>
    %73 = arith.mulf %72, %72 : vector<128x16xf32>
    %74 = tpu.concatenate %72, %73 in 1 : vector<128x16xf32>, vector<128x16xf32> -> vector<128x32xf32>
    %cst_21 = arith.constant dense<0.000000e+00> : vector<32xf32>
    %75 = vector.multi_reduction <add>, %74, %cst_21 [0] : vector<128x32xf32> to vector<32xf32>
    %76 = vector.shape_cast %75 : vector<32xf32> to vector<1x32xf32>
    %cst_22 = arith.constant 1.280000e+02 : f32
    %77 = vector.broadcast %cst_22 : f32 to vector<1x32xf32>
    %78 = arith.divf %76, %77 : vector<1x32xf32>
    %79 = vector.extract_strided_slice %78 {offsets = [0, 0], sizes = [1, 16], strides = [1, 1]} : vector<1x32xf32> to vector<1x16xf32>
    %80 = vector.extract_strided_slice %78 {offsets = [0, 16], sizes = [1, 16], strides = [1, 1]} : vector<1x32xf32> to vector<1x16xf32>
    %81 = arith.mulf %79, %79 : vector<1x16xf32>
    %82 = arith.subf %80, %81 : vector<1x16xf32>
    %cst_23 = arith.constant 0.000000e+00 : f32
    %83 = vector.broadcast %cst_23 : f32 to vector<1x16xf32>
    %84 = arith.maximumf %82, %83 : vector<1x16xf32>
    %cst_24 = arith.constant 9.99999974E-6 : f32
    %85 = vector.broadcast %cst_24 : f32 to vector<1x16xf32>
    %86 = arith.addf %84, %85 : vector<1x16xf32>
    %87 = math.rsqrt %86 : vector<1x16xf32>
    %88 = arith.mulf %37, %87 : vector<1x16xf32>
    %89 = arith.mulf %79, %88 : vector<1x16xf32>
    %90 = arith.subf %38, %89 : vector<1x16xf32>
    %91 = vector.broadcast %88 : vector<1x16xf32> to vector<128x16xf32>
    %92 = arith.mulf %72, %91 : vector<128x16xf32>
    %93 = vector.broadcast %90 : vector<1x16xf32> to vector<128x16xf32>
    %94 = arith.addf %92, %93 : vector<128x16xf32>
    %95 = arith.addf %94, %33 : vector<128x16xf32>
    %cst_25 = arith.constant 0.000000e+00 : f32
    %96 = vector.broadcast %cst_25 : f32 to vector<128x16xf32>
    %97 = arith.maximumf %95, %96 : vector<128x16xf32>
    %c1 = arith.constant 1 : index
    %c0_26 = arith.constant 0 : index
    %c0_27 = arith.constant 0 : index
    %98 = vector.load %arg2[%c1, %c0_26, %c0_27] : memref<8x16x16xbf16, #tpu.memory_space<vmem>>, vector<1x16x16xbf16>
    %99 = vector.shape_cast %98 : vector<1x16x16xbf16> to vector<16x16xbf16>
    %100 = vector.extract_strided_slice %0 {offsets = [4, 0], sizes = [1, 16], strides = [1, 1]} : vector<27x16xf32> to vector<1x16xf32>
    %101 = vector.extract_strided_slice %0 {offsets = [10, 0], sizes = [1, 16], strides = [1, 1]} : vector<27x16xf32> to vector<1x16xf32>
    %102 = vector.extract_strided_slice %0 {offsets = [16, 0], sizes = [1, 16], strides = [1, 1]} : vector<27x16xf32> to vector<1x16xf32>
    %103 = arith.truncf %97 : vector<128x16xf32> to vector<128x16xbf16>
    %cst_28 = arith.constant dense<0.000000e+00> : vector<128x16xf32>
    %104 = tpu.matmul %103, %99, %cst_28 {dimension_numbers = #tpu.dot_dimension_numbers<[1], [0], [0], [1], [0, 0, 1, 1], [], []>} : vector<128x16xbf16>, vector<16x16xbf16>, vector<128x16xf32> -> vector<128x16xf32>
    %105 = vector.broadcast %100 : vector<1x16xf32> to vector<128x16xf32>
    %106 = arith.addf %104, %105 : vector<128x16xf32>
    %107 = arith.mulf %106, %106 : vector<128x16xf32>
    %108 = tpu.concatenate %106, %107 in 1 : vector<128x16xf32>, vector<128x16xf32> -> vector<128x32xf32>
    %cst_29 = arith.constant dense<0.000000e+00> : vector<32xf32>
    %109 = vector.multi_reduction <add>, %108, %cst_29 [0] : vector<128x32xf32> to vector<32xf32>
    %110 = vector.shape_cast %109 : vector<32xf32> to vector<1x32xf32>
    %cst_30 = arith.constant 1.280000e+02 : f32
    %111 = vector.broadcast %cst_30 : f32 to vector<1x32xf32>
    %112 = arith.divf %110, %111 : vector<1x32xf32>
    %113 = vector.extract_strided_slice %112 {offsets = [0, 0], sizes = [1, 16], strides = [1, 1]} : vector<1x32xf32> to vector<1x16xf32>
    %114 = vector.extract_strided_slice %112 {offsets = [0, 16], sizes = [1, 16], strides = [1, 1]} : vector<1x32xf32> to vector<1x16xf32>
    %115 = arith.mulf %113, %113 : vector<1x16xf32>
    %116 = arith.subf %114, %115 : vector<1x16xf32>
    %cst_31 = arith.constant 0.000000e+00 : f32
    %117 = vector.broadcast %cst_31 : f32 to vector<1x16xf32>
    %118 = arith.maximumf %116, %117 : vector<1x16xf32>
    %cst_32 = arith.constant 9.99999974E-6 : f32
    %119 = vector.broadcast %cst_32 : f32 to vector<1x16xf32>
    %120 = arith.addf %118, %119 : vector<1x16xf32>
    %121 = math.rsqrt %120 : vector<1x16xf32>
    %122 = arith.mulf %101, %121 : vector<1x16xf32>
    %123 = arith.mulf %113, %122 : vector<1x16xf32>
    %124 = arith.subf %102, %123 : vector<1x16xf32>
    %125 = vector.broadcast %122 : vector<1x16xf32> to vector<128x16xf32>
    %126 = arith.mulf %106, %125 : vector<128x16xf32>
    %127 = vector.broadcast %124 : vector<1x16xf32> to vector<128x16xf32>
    %128 = arith.addf %126, %127 : vector<128x16xf32>
    %cst_33 = arith.constant 0.000000e+00 : f32
    %129 = vector.broadcast %cst_33 : f32 to vector<128x16xf32>
    %130 = arith.maximumf %128, %129 : vector<128x16xf32>
    %131 = arith.truncf %130 : vector<128x16xf32> to vector<128x16xbf16>
    %cst_34 = arith.constant dense<0.000000e+00> : vector<128x16xf32>
    %132 = tpu.matmul %131, %99, %cst_34 {dimension_numbers = #tpu.dot_dimension_numbers<[1], [0], [0], [1], [0, 0, 1, 1], [], []>} : vector<128x16xbf16>, vector<16x16xbf16>, vector<128x16xf32> -> vector<128x16xf32>
    %133 = vector.broadcast %100 : vector<1x16xf32> to vector<128x16xf32>
    %134 = arith.addf %132, %133 : vector<128x16xf32>
    %cst_35 = arith.constant 0.000000e+00 : f32
    %135 = vector.broadcast %cst_35 : f32 to vector<128x16xf32>
    %136 = arith.maximumf %134, %135 : vector<128x16xf32>
    %137 = arith.mulf %136, %136 : vector<128x16xf32>
    %138 = tpu.concatenate %136, %137 in 1 : vector<128x16xf32>, vector<128x16xf32> -> vector<128x32xf32>
    %cst_36 = arith.constant dense<0.000000e+00> : vector<32xf32>
    %139 = vector.multi_reduction <add>, %138, %cst_36 [0] : vector<128x32xf32> to vector<32xf32>
    %140 = vector.shape_cast %139 : vector<32xf32> to vector<1x32xf32>
    %cst_37 = arith.constant 1.280000e+02 : f32
    %141 = vector.broadcast %cst_37 : f32 to vector<1x32xf32>
    %142 = arith.divf %140, %141 : vector<1x32xf32>
    %143 = vector.extract_strided_slice %142 {offsets = [0, 0], sizes = [1, 16], strides = [1, 1]} : vector<1x32xf32> to vector<1x16xf32>
    %144 = vector.extract_strided_slice %142 {offsets = [0, 16], sizes = [1, 16], strides = [1, 1]} : vector<1x32xf32> to vector<1x16xf32>
    %145 = arith.mulf %143, %143 : vector<1x16xf32>
    %146 = arith.subf %144, %145 : vector<1x16xf32>
    %cst_38 = arith.constant 0.000000e+00 : f32
    %147 = vector.broadcast %cst_38 : f32 to vector<1x16xf32>
    %148 = arith.maximumf %146, %147 : vector<1x16xf32>
    %cst_39 = arith.constant 9.99999974E-6 : f32
    %149 = vector.broadcast %cst_39 : f32 to vector<1x16xf32>
    %150 = arith.addf %148, %149 : vector<1x16xf32>
    %151 = math.rsqrt %150 : vector<1x16xf32>
    %152 = arith.mulf %101, %151 : vector<1x16xf32>
    %153 = arith.mulf %143, %152 : vector<1x16xf32>
    %154 = arith.subf %102, %153 : vector<1x16xf32>
    %155 = vector.broadcast %152 : vector<1x16xf32> to vector<128x16xf32>
    %156 = arith.mulf %136, %155 : vector<128x16xf32>
    %157 = vector.broadcast %154 : vector<1x16xf32> to vector<128x16xf32>
    %158 = arith.addf %156, %157 : vector<128x16xf32>
    %159 = arith.addf %158, %97 : vector<128x16xf32>
    %cst_40 = arith.constant 0.000000e+00 : f32
    %160 = vector.broadcast %cst_40 : f32 to vector<128x16xf32>
    %161 = arith.maximumf %159, %160 : vector<128x16xf32>
    %c2 = arith.constant 2 : index
    %c0_41 = arith.constant 0 : index
    %c0_42 = arith.constant 0 : index
    %162 = vector.load %arg2[%c2, %c0_41, %c0_42] : memref<8x16x16xbf16, #tpu.memory_space<vmem>>, vector<1x16x16xbf16>
    %163 = vector.shape_cast %162 : vector<1x16x16xbf16> to vector<16x16xbf16>
    %164 = vector.extract_strided_slice %0 {offsets = [5, 0], sizes = [1, 16], strides = [1, 1]} : vector<27x16xf32> to vector<1x16xf32>
    %165 = vector.extract_strided_slice %0 {offsets = [11, 0], sizes = [1, 16], strides = [1, 1]} : vector<27x16xf32> to vector<1x16xf32>
    %166 = vector.extract_strided_slice %0 {offsets = [17, 0], sizes = [1, 16], strides = [1, 1]} : vector<27x16xf32> to vector<1x16xf32>
    %167 = arith.truncf %161 : vector<128x16xf32> to vector<128x16xbf16>
    %cst_43 = arith.constant dense<0.000000e+00> : vector<128x16xf32>
    %168 = tpu.matmul %167, %163, %cst_43 {dimension_numbers = #tpu.dot_dimension_numbers<[1], [0], [0], [1], [0, 0, 1, 1], [], []>} : vector<128x16xbf16>, vector<16x16xbf16>, vector<128x16xf32> -> vector<128x16xf32>
    %169 = vector.broadcast %164 : vector<1x16xf32> to vector<128x16xf32>
    %170 = arith.addf %168, %169 : vector<128x16xf32>
    %171 = arith.mulf %170, %170 : vector<128x16xf32>
    %172 = tpu.concatenate %170, %171 in 1 : vector<128x16xf32>, vector<128x16xf32> -> vector<128x32xf32>
    %cst_44 = arith.constant dense<0.000000e+00> : vector<32xf32>
    %173 = vector.multi_reduction <add>, %172, %cst_44 [0] : vector<128x32xf32> to vector<32xf32>
    %174 = vector.shape_cast %173 : vector<32xf32> to vector<1x32xf32>
    %cst_45 = arith.constant 1.280000e+02 : f32
    %175 = vector.broadcast %cst_45 : f32 to vector<1x32xf32>
    %176 = arith.divf %174, %175 : vector<1x32xf32>
    %177 = vector.extract_strided_slice %176 {offsets = [0, 0], sizes = [1, 16], strides = [1, 1]} : vector<1x32xf32> to vector<1x16xf32>
    %178 = vector.extract_strided_slice %176 {offsets = [0, 16], sizes = [1, 16], strides = [1, 1]} : vector<1x32xf32> to vector<1x16xf32>
    %179 = arith.mulf %177, %177 : vector<1x16xf32>
    %180 = arith.subf %178, %179 : vector<1x16xf32>
    %cst_46 = arith.constant 0.000000e+00 : f32
    %181 = vector.broadcast %cst_46 : f32 to vector<1x16xf32>
    %182 = arith.maximumf %180, %181 : vector<1x16xf32>
    %cst_47 = arith.constant 9.99999974E-6 : f32
    %183 = vector.broadcast %cst_47 : f32 to vector<1x16xf32>
    %184 = arith.addf %182, %183 : vector<1x16xf32>
    %185 = math.rsqrt %184 : vector<1x16xf32>
    %186 = arith.mulf %165, %185 : vector<1x16xf32>
    %187 = arith.mulf %177, %186 : vector<1x16xf32>
    %188 = arith.subf %166, %187 : vector<1x16xf32>
    %189 = vector.broadcast %186 : vector<1x16xf32> to vector<128x16xf32>
    %190 = arith.mulf %170, %189 : vector<128x16xf32>
    %191 = vector.broadcast %188 : vector<1x16xf32> to vector<128x16xf32>
    %192 = arith.addf %190, %191 : vector<128x16xf32>
    %cst_48 = arith.constant 0.000000e+00 : f32
    %193 = vector.broadcast %cst_48 : f32 to vector<128x16xf32>
    %194 = arith.maximumf %192, %193 : vector<128x16xf32>
    %195 = arith.truncf %194 : vector<128x16xf32> to vector<128x16xbf16>
    %cst_49 = arith.constant dense<0.000000e+00> : vector<128x16xf32>
    %196 = tpu.matmul %195, %163, %cst_49 {dimension_numbers = #tpu.dot_dimension_numbers<[1], [0], [0], [1], [0, 0, 1, 1], [], []>} : vector<128x16xbf16>, vector<16x16xbf16>, vector<128x16xf32> -> vector<128x16xf32>
    %197 = vector.broadcast %164 : vector<1x16xf32> to vector<128x16xf32>
    %198 = arith.addf %196, %197 : vector<128x16xf32>
    %cst_50 = arith.constant 0.000000e+00 : f32
    %199 = vector.broadcast %cst_50 : f32 to vector<128x16xf32>
    %200 = arith.maximumf %198, %199 : vector<128x16xf32>
    %201 = arith.mulf %200, %200 : vector<128x16xf32>
    %202 = tpu.concatenate %200, %201 in 1 : vector<128x16xf32>, vector<128x16xf32> -> vector<128x32xf32>
    %cst_51 = arith.constant dense<0.000000e+00> : vector<32xf32>
    %203 = vector.multi_reduction <add>, %202, %cst_51 [0] : vector<128x32xf32> to vector<32xf32>
    %204 = vector.shape_cast %203 : vector<32xf32> to vector<1x32xf32>
    %cst_52 = arith.constant 1.280000e+02 : f32
    %205 = vector.broadcast %cst_52 : f32 to vector<1x32xf32>
    %206 = arith.divf %204, %205 : vector<1x32xf32>
    %207 = vector.extract_strided_slice %206 {offsets = [0, 0], sizes = [1, 16], strides = [1, 1]} : vector<1x32xf32> to vector<1x16xf32>
    %208 = vector.extract_strided_slice %206 {offsets = [0, 16], sizes = [1, 16], strides = [1, 1]} : vector<1x32xf32> to vector<1x16xf32>
    %209 = arith.mulf %207, %207 : vector<1x16xf32>
    %210 = arith.subf %208, %209 : vector<1x16xf32>
    %cst_53 = arith.constant 0.000000e+00 : f32
    %211 = vector.broadcast %cst_53 : f32 to vector<1x16xf32>
    %212 = arith.maximumf %210, %211 : vector<1x16xf32>
    %cst_54 = arith.constant 9.99999974E-6 : f32
    %213 = vector.broadcast %cst_54 : f32 to vector<1x16xf32>
    %214 = arith.addf %212, %213 : vector<1x16xf32>
    %215 = math.rsqrt %214 : vector<1x16xf32>
    %216 = arith.mulf %165, %215 : vector<1x16xf32>
    %217 = arith.mulf %207, %216 : vector<1x16xf32>
    %218 = arith.subf %166, %217 : vector<1x16xf32>
    %219 = vector.broadcast %216 : vector<1x16xf32> to vector<128x16xf32>
    %220 = arith.mulf %200, %219 : vector<128x16xf32>
    %221 = vector.broadcast %218 : vector<1x16xf32> to vector<128x16xf32>
    %222 = arith.addf %220, %221 : vector<128x16xf32>
    %c6 = arith.constant 6 : index
    %c0_55 = arith.constant 0 : index
    %c0_56 = arith.constant 0 : index
    %223 = vector.load %arg2[%c6, %c0_55, %c0_56] : memref<8x16x16xbf16, #tpu.memory_space<vmem>>, vector<1x16x16xbf16>
    %224 = vector.shape_cast %223 : vector<1x16x16xbf16> to vector<16x16xbf16>
    %cst_57 = arith.constant dense<0.000000e+00> : vector<128x16xf32>
    %225 = tpu.matmul %167, %224, %cst_57 {dimension_numbers = #tpu.dot_dimension_numbers<[1], [0], [0], [1], [0, 0, 1, 1], [], []>} : vector<128x16xbf16>, vector<16x16xbf16>, vector<128x16xf32> -> vector<128x16xf32>
    %226 = vector.extract_strided_slice %0 {offsets = [21, 0], sizes = [1, 16], strides = [1, 1]} : vector<27x16xf32> to vector<1x16xf32>
    %227 = vector.broadcast %226 : vector<1x16xf32> to vector<128x16xf32>
    %228 = arith.addf %225, %227 : vector<128x16xf32>
    %229 = vector.extract_strided_slice %0 {offsets = [23, 0], sizes = [1, 16], strides = [1, 1]} : vector<27x16xf32> to vector<1x16xf32>
    %230 = vector.extract_strided_slice %0 {offsets = [25, 0], sizes = [1, 16], strides = [1, 1]} : vector<27x16xf32> to vector<1x16xf32>
    %231 = arith.mulf %228, %228 : vector<128x16xf32>
    %232 = tpu.concatenate %228, %231 in 1 : vector<128x16xf32>, vector<128x16xf32> -> vector<128x32xf32>
    %cst_58 = arith.constant dense<0.000000e+00> : vector<32xf32>
    %233 = vector.multi_reduction <add>, %232, %cst_58 [0] : vector<128x32xf32> to vector<32xf32>
    %234 = vector.shape_cast %233 : vector<32xf32> to vector<1x32xf32>
    %cst_59 = arith.constant 1.280000e+02 : f32
    %235 = vector.broadcast %cst_59 : f32 to vector<1x32xf32>
    %236 = arith.divf %234, %235 : vector<1x32xf32>
    %237 = vector.extract_strided_slice %236 {offsets = [0, 0], sizes = [1, 16], strides = [1, 1]} : vector<1x32xf32> to vector<1x16xf32>
    %238 = vector.extract_strided_slice %236 {offsets = [0, 16], sizes = [1, 16], strides = [1, 1]} : vector<1x32xf32> to vector<1x16xf32>
    %239 = arith.mulf %237, %237 : vector<1x16xf32>
    %240 = arith.subf %238, %239 : vector<1x16xf32>
    %cst_60 = arith.constant 0.000000e+00 : f32
    %241 = vector.broadcast %cst_60 : f32 to vector<1x16xf32>
    %242 = arith.maximumf %240, %241 : vector<1x16xf32>
    %cst_61 = arith.constant 9.99999974E-6 : f32
    %243 = vector.broadcast %cst_61 : f32 to vector<1x16xf32>
    %244 = arith.addf %242, %243 : vector<1x16xf32>
    %245 = math.rsqrt %244 : vector<1x16xf32>
    %246 = arith.mulf %229, %245 : vector<1x16xf32>
    %247 = arith.mulf %237, %246 : vector<1x16xf32>
    %248 = arith.subf %230, %247 : vector<1x16xf32>
    %249 = vector.broadcast %246 : vector<1x16xf32> to vector<128x16xf32>
    %250 = arith.mulf %228, %249 : vector<128x16xf32>
    %251 = vector.broadcast %248 : vector<1x16xf32> to vector<128x16xf32>
    %252 = arith.addf %250, %251 : vector<128x16xf32>
    %253 = arith.addf %222, %252 : vector<128x16xf32>
    %cst_62 = arith.constant 0.000000e+00 : f32
    %254 = vector.broadcast %cst_62 : f32 to vector<128x16xf32>
    %255 = arith.maximumf %253, %254 : vector<128x16xf32>
    %c3 = arith.constant 3 : index
    %c0_63 = arith.constant 0 : index
    %c0_64 = arith.constant 0 : index
    %256 = vector.load %arg2[%c3, %c0_63, %c0_64] : memref<8x16x16xbf16, #tpu.memory_space<vmem>>, vector<1x16x16xbf16>
    %257 = vector.shape_cast %256 : vector<1x16x16xbf16> to vector<16x16xbf16>
    %258 = vector.extract_strided_slice %0 {offsets = [6, 0], sizes = [1, 16], strides = [1, 1]} : vector<27x16xf32> to vector<1x16xf32>
    %259 = vector.extract_strided_slice %0 {offsets = [12, 0], sizes = [1, 16], strides = [1, 1]} : vector<27x16xf32> to vector<1x16xf32>
    %260 = vector.extract_strided_slice %0 {offsets = [18, 0], sizes = [1, 16], strides = [1, 1]} : vector<27x16xf32> to vector<1x16xf32>
    %261 = arith.truncf %255 : vector<128x16xf32> to vector<128x16xbf16>
    %cst_65 = arith.constant dense<0.000000e+00> : vector<128x16xf32>
    %262 = tpu.matmul %261, %257, %cst_65 {dimension_numbers = #tpu.dot_dimension_numbers<[1], [0], [0], [1], [0, 0, 1, 1], [], []>} : vector<128x16xbf16>, vector<16x16xbf16>, vector<128x16xf32> -> vector<128x16xf32>
    %263 = vector.broadcast %258 : vector<1x16xf32> to vector<128x16xf32>
    %264 = arith.addf %262, %263 : vector<128x16xf32>
    %265 = arith.mulf %264, %264 : vector<128x16xf32>
    %266 = tpu.concatenate %264, %265 in 1 : vector<128x16xf32>, vector<128x16xf32> -> vector<128x32xf32>
    %cst_66 = arith.constant dense<0.000000e+00> : vector<32xf32>
    %267 = vector.multi_reduction <add>, %266, %cst_66 [0] : vector<128x32xf32> to vector<32xf32>
    %268 = vector.shape_cast %267 : vector<32xf32> to vector<1x32xf32>
    %cst_67 = arith.constant 1.280000e+02 : f32
    %269 = vector.broadcast %cst_67 : f32 to vector<1x32xf32>
    %270 = arith.divf %268, %269 : vector<1x32xf32>
    %271 = vector.extract_strided_slice %270 {offsets = [0, 0], sizes = [1, 16], strides = [1, 1]} : vector<1x32xf32> to vector<1x16xf32>
    %272 = vector.extract_strided_slice %270 {offsets = [0, 16], sizes = [1, 16], strides = [1, 1]} : vector<1x32xf32> to vector<1x16xf32>
    %273 = arith.mulf %271, %271 : vector<1x16xf32>
    %274 = arith.subf %272, %273 : vector<1x16xf32>
    %cst_68 = arith.constant 0.000000e+00 : f32
    %275 = vector.broadcast %cst_68 : f32 to vector<1x16xf32>
    %276 = arith.maximumf %274, %275 : vector<1x16xf32>
    %cst_69 = arith.constant 9.99999974E-6 : f32
    %277 = vector.broadcast %cst_69 : f32 to vector<1x16xf32>
    %278 = arith.addf %276, %277 : vector<1x16xf32>
    %279 = math.rsqrt %278 : vector<1x16xf32>
    %280 = arith.mulf %259, %279 : vector<1x16xf32>
    %281 = arith.mulf %271, %280 : vector<1x16xf32>
    %282 = arith.subf %260, %281 : vector<1x16xf32>
    %283 = vector.broadcast %280 : vector<1x16xf32> to vector<128x16xf32>
    %284 = arith.mulf %264, %283 : vector<128x16xf32>
    %285 = vector.broadcast %282 : vector<1x16xf32> to vector<128x16xf32>
    %286 = arith.addf %284, %285 : vector<128x16xf32>
    %cst_70 = arith.constant 0.000000e+00 : f32
    %287 = vector.broadcast %cst_70 : f32 to vector<128x16xf32>
    %288 = arith.maximumf %286, %287 : vector<128x16xf32>
    %289 = arith.truncf %288 : vector<128x16xf32> to vector<128x16xbf16>
    %cst_71 = arith.constant dense<0.000000e+00> : vector<128x16xf32>
    %290 = tpu.matmul %289, %257, %cst_71 {dimension_numbers = #tpu.dot_dimension_numbers<[1], [0], [0], [1], [0, 0, 1, 1], [], []>} : vector<128x16xbf16>, vector<16x16xbf16>, vector<128x16xf32> -> vector<128x16xf32>
    %291 = vector.broadcast %258 : vector<1x16xf32> to vector<128x16xf32>
    %292 = arith.addf %290, %291 : vector<128x16xf32>
    %cst_72 = arith.constant 0.000000e+00 : f32
    %293 = vector.broadcast %cst_72 : f32 to vector<128x16xf32>
    %294 = arith.maximumf %292, %293 : vector<128x16xf32>
    %295 = arith.mulf %294, %294 : vector<128x16xf32>
    %296 = tpu.concatenate %294, %295 in 1 : vector<128x16xf32>, vector<128x16xf32> -> vector<128x32xf32>
    %cst_73 = arith.constant dense<0.000000e+00> : vector<32xf32>
    %297 = vector.multi_reduction <add>, %296, %cst_73 [0] : vector<128x32xf32> to vector<32xf32>
    %298 = vector.shape_cast %297 : vector<32xf32> to vector<1x32xf32>
    %cst_74 = arith.constant 1.280000e+02 : f32
    %299 = vector.broadcast %cst_74 : f32 to vector<1x32xf32>
    %300 = arith.divf %298, %299 : vector<1x32xf32>
    %301 = vector.extract_strided_slice %300 {offsets = [0, 0], sizes = [1, 16], strides = [1, 1]} : vector<1x32xf32> to vector<1x16xf32>
    %302 = vector.extract_strided_slice %300 {offsets = [0, 16], sizes = [1, 16], strides = [1, 1]} : vector<1x32xf32> to vector<1x16xf32>
    %303 = arith.mulf %301, %301 : vector<1x16xf32>
    %304 = arith.subf %302, %303 : vector<1x16xf32>
    %cst_75 = arith.constant 0.000000e+00 : f32
    %305 = vector.broadcast %cst_75 : f32 to vector<1x16xf32>
    %306 = arith.maximumf %304, %305 : vector<1x16xf32>
    %cst_76 = arith.constant 9.99999974E-6 : f32
    %307 = vector.broadcast %cst_76 : f32 to vector<1x16xf32>
    %308 = arith.addf %306, %307 : vector<1x16xf32>
    %309 = math.rsqrt %308 : vector<1x16xf32>
    %310 = arith.mulf %259, %309 : vector<1x16xf32>
    %311 = arith.mulf %301, %310 : vector<1x16xf32>
    %312 = arith.subf %260, %311 : vector<1x16xf32>
    %313 = vector.broadcast %310 : vector<1x16xf32> to vector<128x16xf32>
    %314 = arith.mulf %294, %313 : vector<128x16xf32>
    %315 = vector.broadcast %312 : vector<1x16xf32> to vector<128x16xf32>
    %316 = arith.addf %314, %315 : vector<128x16xf32>
    %317 = arith.addf %316, %255 : vector<128x16xf32>
    %cst_77 = arith.constant 0.000000e+00 : f32
    %318 = vector.broadcast %cst_77 : f32 to vector<128x16xf32>
    %319 = arith.maximumf %317, %318 : vector<128x16xf32>
    %c4 = arith.constant 4 : index
    %c0_78 = arith.constant 0 : index
    %c0_79 = arith.constant 0 : index
    %320 = vector.load %arg2[%c4, %c0_78, %c0_79] : memref<8x16x16xbf16, #tpu.memory_space<vmem>>, vector<1x16x16xbf16>
    %321 = vector.shape_cast %320 : vector<1x16x16xbf16> to vector<16x16xbf16>
    %322 = vector.extract_strided_slice %0 {offsets = [7, 0], sizes = [1, 16], strides = [1, 1]} : vector<27x16xf32> to vector<1x16xf32>
    %323 = vector.extract_strided_slice %0 {offsets = [13, 0], sizes = [1, 16], strides = [1, 1]} : vector<27x16xf32> to vector<1x16xf32>
    %324 = vector.extract_strided_slice %0 {offsets = [19, 0], sizes = [1, 16], strides = [1, 1]} : vector<27x16xf32> to vector<1x16xf32>
    %325 = arith.truncf %319 : vector<128x16xf32> to vector<128x16xbf16>
    %cst_80 = arith.constant dense<0.000000e+00> : vector<128x16xf32>
    %326 = tpu.matmul %325, %321, %cst_80 {dimension_numbers = #tpu.dot_dimension_numbers<[1], [0], [0], [1], [0, 0, 1, 1], [], []>} : vector<128x16xbf16>, vector<16x16xbf16>, vector<128x16xf32> -> vector<128x16xf32>
    %327 = vector.broadcast %322 : vector<1x16xf32> to vector<128x16xf32>
    %328 = arith.addf %326, %327 : vector<128x16xf32>
    %329 = arith.mulf %328, %328 : vector<128x16xf32>
    %330 = tpu.concatenate %328, %329 in 1 : vector<128x16xf32>, vector<128x16xf32> -> vector<128x32xf32>
    %cst_81 = arith.constant dense<0.000000e+00> : vector<32xf32>
    %331 = vector.multi_reduction <add>, %330, %cst_81 [0] : vector<128x32xf32> to vector<32xf32>
    %332 = vector.shape_cast %331 : vector<32xf32> to vector<1x32xf32>
    %cst_82 = arith.constant 1.280000e+02 : f32
    %333 = vector.broadcast %cst_82 : f32 to vector<1x32xf32>
    %334 = arith.divf %332, %333 : vector<1x32xf32>
    %335 = vector.extract_strided_slice %334 {offsets = [0, 0], sizes = [1, 16], strides = [1, 1]} : vector<1x32xf32> to vector<1x16xf32>
    %336 = vector.extract_strided_slice %334 {offsets = [0, 16], sizes = [1, 16], strides = [1, 1]} : vector<1x32xf32> to vector<1x16xf32>
    %337 = arith.mulf %335, %335 : vector<1x16xf32>
    %338 = arith.subf %336, %337 : vector<1x16xf32>
    %cst_83 = arith.constant 0.000000e+00 : f32
    %339 = vector.broadcast %cst_83 : f32 to vector<1x16xf32>
    %340 = arith.maximumf %338, %339 : vector<1x16xf32>
    %cst_84 = arith.constant 9.99999974E-6 : f32
    %341 = vector.broadcast %cst_84 : f32 to vector<1x16xf32>
    %342 = arith.addf %340, %341 : vector<1x16xf32>
    %343 = math.rsqrt %342 : vector<1x16xf32>
    %344 = arith.mulf %323, %343 : vector<1x16xf32>
    %345 = arith.mulf %335, %344 : vector<1x16xf32>
    %346 = arith.subf %324, %345 : vector<1x16xf32>
    %347 = vector.broadcast %344 : vector<1x16xf32> to vector<128x16xf32>
    %348 = arith.mulf %328, %347 : vector<128x16xf32>
    %349 = vector.broadcast %346 : vector<1x16xf32> to vector<128x16xf32>
    %350 = arith.addf %348, %349 : vector<128x16xf32>
    %cst_85 = arith.constant 0.000000e+00 : f32
    %351 = vector.broadcast %cst_85 : f32 to vector<128x16xf32>
    %352 = arith.maximumf %350, %351 : vector<128x16xf32>
    %353 = arith.truncf %352 : vector<128x16xf32> to vector<128x16xbf16>
    %cst_86 = arith.constant dense<0.000000e+00> : vector<128x16xf32>
    %354 = tpu.matmul %353, %321, %cst_86 {dimension_numbers = #tpu.dot_dimension_numbers<[1], [0], [0], [1], [0, 0, 1, 1], [], []>} : vector<128x16xbf16>, vector<16x16xbf16>, vector<128x16xf32> -> vector<128x16xf32>
    %355 = vector.broadcast %322 : vector<1x16xf32> to vector<128x16xf32>
    %356 = arith.addf %354, %355 : vector<128x16xf32>
    %cst_87 = arith.constant 0.000000e+00 : f32
    %357 = vector.broadcast %cst_87 : f32 to vector<128x16xf32>
    %358 = arith.maximumf %356, %357 : vector<128x16xf32>
    %359 = arith.mulf %358, %358 : vector<128x16xf32>
    %360 = tpu.concatenate %358, %359 in 1 : vector<128x16xf32>, vector<128x16xf32> -> vector<128x32xf32>
    %cst_88 = arith.constant dense<0.000000e+00> : vector<32xf32>
    %361 = vector.multi_reduction <add>, %360, %cst_88 [0] : vector<128x32xf32> to vector<32xf32>
    %362 = vector.shape_cast %361 : vector<32xf32> to vector<1x32xf32>
    %cst_89 = arith.constant 1.280000e+02 : f32
    %363 = vector.broadcast %cst_89 : f32 to vector<1x32xf32>
    %364 = arith.divf %362, %363 : vector<1x32xf32>
    %365 = vector.extract_strided_slice %364 {offsets = [0, 0], sizes = [1, 16], strides = [1, 1]} : vector<1x32xf32> to vector<1x16xf32>
    %366 = vector.extract_strided_slice %364 {offsets = [0, 16], sizes = [1, 16], strides = [1, 1]} : vector<1x32xf32> to vector<1x16xf32>
    %367 = arith.mulf %365, %365 : vector<1x16xf32>
    %368 = arith.subf %366, %367 : vector<1x16xf32>
    %cst_90 = arith.constant 0.000000e+00 : f32
    %369 = vector.broadcast %cst_90 : f32 to vector<1x16xf32>
    %370 = arith.maximumf %368, %369 : vector<1x16xf32>
    %cst_91 = arith.constant 9.99999974E-6 : f32
    %371 = vector.broadcast %cst_91 : f32 to vector<1x16xf32>
    %372 = arith.addf %370, %371 : vector<1x16xf32>
    %373 = math.rsqrt %372 : vector<1x16xf32>
    %374 = arith.mulf %323, %373 : vector<1x16xf32>
    %375 = arith.mulf %365, %374 : vector<1x16xf32>
    %376 = arith.subf %324, %375 : vector<1x16xf32>
    %377 = vector.broadcast %374 : vector<1x16xf32> to vector<128x16xf32>
    %378 = arith.mulf %358, %377 : vector<128x16xf32>
    %379 = vector.broadcast %376 : vector<1x16xf32> to vector<128x16xf32>
    %380 = arith.addf %378, %379 : vector<128x16xf32>
    %c7 = arith.constant 7 : index
    %c0_92 = arith.constant 0 : index
    %c0_93 = arith.constant 0 : index
    %381 = vector.load %arg2[%c7, %c0_92, %c0_93] : memref<8x16x16xbf16, #tpu.memory_space<vmem>>, vector<1x16x16xbf16>
    %382 = vector.shape_cast %381 : vector<1x16x16xbf16> to vector<16x16xbf16>
    %cst_94 = arith.constant dense<0.000000e+00> : vector<128x16xf32>
    %383 = tpu.matmul %325, %382, %cst_94 {dimension_numbers = #tpu.dot_dimension_numbers<[1], [0], [0], [1], [0, 0, 1, 1], [], []>} : vector<128x16xbf16>, vector<16x16xbf16>, vector<128x16xf32> -> vector<128x16xf32>
    %384 = vector.extract_strided_slice %0 {offsets = [22, 0], sizes = [1, 16], strides = [1, 1]} : vector<27x16xf32> to vector<1x16xf32>
    %385 = vector.broadcast %384 : vector<1x16xf32> to vector<128x16xf32>
    %386 = arith.addf %383, %385 : vector<128x16xf32>
    %387 = vector.extract_strided_slice %0 {offsets = [24, 0], sizes = [1, 16], strides = [1, 1]} : vector<27x16xf32> to vector<1x16xf32>
    %388 = vector.extract_strided_slice %0 {offsets = [26, 0], sizes = [1, 16], strides = [1, 1]} : vector<27x16xf32> to vector<1x16xf32>
    %389 = arith.mulf %386, %386 : vector<128x16xf32>
    %390 = tpu.concatenate %386, %389 in 1 : vector<128x16xf32>, vector<128x16xf32> -> vector<128x32xf32>
    %cst_95 = arith.constant dense<0.000000e+00> : vector<32xf32>
    %391 = vector.multi_reduction <add>, %390, %cst_95 [0] : vector<128x32xf32> to vector<32xf32>
    %392 = vector.shape_cast %391 : vector<32xf32> to vector<1x32xf32>
    %cst_96 = arith.constant 1.280000e+02 : f32
    %393 = vector.broadcast %cst_96 : f32 to vector<1x32xf32>
    %394 = arith.divf %392, %393 : vector<1x32xf32>
    %395 = vector.extract_strided_slice %394 {offsets = [0, 0], sizes = [1, 16], strides = [1, 1]} : vector<1x32xf32> to vector<1x16xf32>
    %396 = vector.extract_strided_slice %394 {offsets = [0, 16], sizes = [1, 16], strides = [1, 1]} : vector<1x32xf32> to vector<1x16xf32>
    %397 = arith.mulf %395, %395 : vector<1x16xf32>
    %398 = arith.subf %396, %397 : vector<1x16xf32>
    %cst_97 = arith.constant 0.000000e+00 : f32
    %399 = vector.broadcast %cst_97 : f32 to vector<1x16xf32>
    %400 = arith.maximumf %398, %399 : vector<1x16xf32>
    %cst_98 = arith.constant 9.99999974E-6 : f32
    %401 = vector.broadcast %cst_98 : f32 to vector<1x16xf32>
    %402 = arith.addf %400, %401 : vector<1x16xf32>
    %403 = math.rsqrt %402 : vector<1x16xf32>
    %404 = arith.mulf %387, %403 : vector<1x16xf32>
    %405 = arith.mulf %395, %404 : vector<1x16xf32>
    %406 = arith.subf %388, %405 : vector<1x16xf32>
    %407 = vector.broadcast %404 : vector<1x16xf32> to vector<128x16xf32>
    %408 = arith.mulf %386, %407 : vector<128x16xf32>
    %409 = vector.broadcast %406 : vector<1x16xf32> to vector<128x16xf32>
    %410 = arith.addf %408, %409 : vector<128x16xf32>
    %411 = arith.addf %380, %410 : vector<128x16xf32>
    %cst_99 = arith.constant 0.000000e+00 : f32
    %412 = vector.broadcast %cst_99 : f32 to vector<128x16xf32>
    %413 = arith.maximumf %411, %412 : vector<128x16xf32>
    %c5 = arith.constant 5 : index
    %c0_100 = arith.constant 0 : index
    %c0_101 = arith.constant 0 : index
    %414 = vector.load %arg2[%c5, %c0_100, %c0_101] : memref<8x16x16xbf16, #tpu.memory_space<vmem>>, vector<1x16x16xbf16>
    %415 = vector.shape_cast %414 : vector<1x16x16xbf16> to vector<16x16xbf16>
    %416 = vector.extract_strided_slice %0 {offsets = [8, 0], sizes = [1, 16], strides = [1, 1]} : vector<27x16xf32> to vector<1x16xf32>
    %417 = vector.extract_strided_slice %0 {offsets = [14, 0], sizes = [1, 16], strides = [1, 1]} : vector<27x16xf32> to vector<1x16xf32>
    %418 = vector.extract_strided_slice %0 {offsets = [20, 0], sizes = [1, 16], strides = [1, 1]} : vector<27x16xf32> to vector<1x16xf32>
    %419 = arith.truncf %413 : vector<128x16xf32> to vector<128x16xbf16>
    %cst_102 = arith.constant dense<0.000000e+00> : vector<128x16xf32>
    %420 = tpu.matmul %419, %415, %cst_102 {dimension_numbers = #tpu.dot_dimension_numbers<[1], [0], [0], [1], [0, 0, 1, 1], [], []>} : vector<128x16xbf16>, vector<16x16xbf16>, vector<128x16xf32> -> vector<128x16xf32>
    %421 = vector.broadcast %416 : vector<1x16xf32> to vector<128x16xf32>
    %422 = arith.addf %420, %421 : vector<128x16xf32>
    %423 = arith.mulf %422, %422 : vector<128x16xf32>
    %424 = tpu.concatenate %422, %423 in 1 : vector<128x16xf32>, vector<128x16xf32> -> vector<128x32xf32>
    %cst_103 = arith.constant dense<0.000000e+00> : vector<32xf32>
    %425 = vector.multi_reduction <add>, %424, %cst_103 [0] : vector<128x32xf32> to vector<32xf32>
    %426 = vector.shape_cast %425 : vector<32xf32> to vector<1x32xf32>
    %cst_104 = arith.constant 1.280000e+02 : f32
    %427 = vector.broadcast %cst_104 : f32 to vector<1x32xf32>
    %428 = arith.divf %426, %427 : vector<1x32xf32>
    %429 = vector.extract_strided_slice %428 {offsets = [0, 0], sizes = [1, 16], strides = [1, 1]} : vector<1x32xf32> to vector<1x16xf32>
    %430 = vector.extract_strided_slice %428 {offsets = [0, 16], sizes = [1, 16], strides = [1, 1]} : vector<1x32xf32> to vector<1x16xf32>
    %431 = arith.mulf %429, %429 : vector<1x16xf32>
    %432 = arith.subf %430, %431 : vector<1x16xf32>
    %cst_105 = arith.constant 0.000000e+00 : f32
    %433 = vector.broadcast %cst_105 : f32 to vector<1x16xf32>
    %434 = arith.maximumf %432, %433 : vector<1x16xf32>
    %cst_106 = arith.constant 9.99999974E-6 : f32
    %435 = vector.broadcast %cst_106 : f32 to vector<1x16xf32>
    %436 = arith.addf %434, %435 : vector<1x16xf32>
    %437 = math.rsqrt %436 : vector<1x16xf32>
    %438 = arith.mulf %417, %437 : vector<1x16xf32>
    %439 = arith.mulf %429, %438 : vector<1x16xf32>
    %440 = arith.subf %418, %439 : vector<1x16xf32>
    %441 = vector.broadcast %438 : vector<1x16xf32> to vector<128x16xf32>
    %442 = arith.mulf %422, %441 : vector<128x16xf32>
    %443 = vector.broadcast %440 : vector<1x16xf32> to vector<128x16xf32>
    %444 = arith.addf %442, %443 : vector<128x16xf32>
    %cst_107 = arith.constant 0.000000e+00 : f32
    %445 = vector.broadcast %cst_107 : f32 to vector<128x16xf32>
    %446 = arith.maximumf %444, %445 : vector<128x16xf32>
    %447 = arith.truncf %446 : vector<128x16xf32> to vector<128x16xbf16>
    %cst_108 = arith.constant dense<0.000000e+00> : vector<128x16xf32>
    %448 = tpu.matmul %447, %415, %cst_108 {dimension_numbers = #tpu.dot_dimension_numbers<[1], [0], [0], [1], [0, 0, 1, 1], [], []>} : vector<128x16xbf16>, vector<16x16xbf16>, vector<128x16xf32> -> vector<128x16xf32>
    %449 = vector.broadcast %416 : vector<1x16xf32> to vector<128x16xf32>
    %450 = arith.addf %448, %449 : vector<128x16xf32>
    %cst_109 = arith.constant 0.000000e+00 : f32
    %451 = vector.broadcast %cst_109 : f32 to vector<128x16xf32>
    %452 = arith.maximumf %450, %451 : vector<128x16xf32>
    %453 = arith.mulf %452, %452 : vector<128x16xf32>
    %454 = tpu.concatenate %452, %453 in 1 : vector<128x16xf32>, vector<128x16xf32> -> vector<128x32xf32>
    %cst_110 = arith.constant dense<0.000000e+00> : vector<32xf32>
    %455 = vector.multi_reduction <add>, %454, %cst_110 [0] : vector<128x32xf32> to vector<32xf32>
    %456 = vector.shape_cast %455 : vector<32xf32> to vector<1x32xf32>
    %cst_111 = arith.constant 1.280000e+02 : f32
    %457 = vector.broadcast %cst_111 : f32 to vector<1x32xf32>
    %458 = arith.divf %456, %457 : vector<1x32xf32>
    %459 = vector.extract_strided_slice %458 {offsets = [0, 0], sizes = [1, 16], strides = [1, 1]} : vector<1x32xf32> to vector<1x16xf32>
    %460 = vector.extract_strided_slice %458 {offsets = [0, 16], sizes = [1, 16], strides = [1, 1]} : vector<1x32xf32> to vector<1x16xf32>
    %461 = arith.mulf %459, %459 : vector<1x16xf32>
    %462 = arith.subf %460, %461 : vector<1x16xf32>
    %cst_112 = arith.constant 0.000000e+00 : f32
    %463 = vector.broadcast %cst_112 : f32 to vector<1x16xf32>
    %464 = arith.maximumf %462, %463 : vector<1x16xf32>
    %cst_113 = arith.constant 9.99999974E-6 : f32
    %465 = vector.broadcast %cst_113 : f32 to vector<1x16xf32>
    %466 = arith.addf %464, %465 : vector<1x16xf32>
    %467 = math.rsqrt %466 : vector<1x16xf32>
    %468 = arith.mulf %417, %467 : vector<1x16xf32>
    %469 = arith.mulf %459, %468 : vector<1x16xf32>
    %470 = arith.subf %418, %469 : vector<1x16xf32>
    %471 = vector.broadcast %468 : vector<1x16xf32> to vector<128x16xf32>
    %472 = arith.mulf %452, %471 : vector<128x16xf32>
    %473 = vector.broadcast %470 : vector<1x16xf32> to vector<128x16xf32>
    %474 = arith.addf %472, %473 : vector<128x16xf32>
    %475 = arith.addf %474, %413 : vector<128x16xf32>
    %cst_114 = arith.constant 0.000000e+00 : f32
    %476 = vector.broadcast %cst_114 : f32 to vector<128x16xf32>
    %477 = arith.maximumf %475, %476 : vector<128x16xf32>
    %c0_115 = arith.constant 0 : index
    %c0_116 = arith.constant 0 : index
    %478 = vector.load %arg4[%c0_115, %c0_116] : memref<16x128xf32, #tpu.memory_space<vmem>>, vector<16x128xf32>
    %cst_117 = arith.constant dense<0.000000e+00> : vector<128x128xf32>
    %479 = tpu.matmul %477, %478, %cst_117 {dimension_numbers = #tpu.dot_dimension_numbers<[1], [0], [0], [1], [0, 0, 1, 1], [], []>} : vector<128x16xf32>, vector<16x128xf32>, vector<128x128xf32> -> vector<128x128xf32>
    %c0_118 = arith.constant 0 : index
    %c0_119 = arith.constant 0 : index
    %480 = vector.load %arg5[%c0_118, %c0_119] : memref<1x128xf32, #tpu.memory_space<vmem>>, vector<1x128xf32>
    %481 = vector.broadcast %480 : vector<1x128xf32> to vector<128x128xf32>
    %482 = arith.addf %479, %481 : vector<128x128xf32>
    %483 = tpu.iota {dimensions = array<i32: 1>} : vector<128x128xi32>
    %c1_i32 = arith.constant 1 : i32
    %484 = vector.broadcast %c1_i32 : i32 to vector<128x128xi32>
    %485 = arith.cmpi sge, %483, %484 : vector<128x128xi32>
    %c6_i32 = arith.constant 6 : i32
    %486 = vector.broadcast %c6_i32 : i32 to vector<128x128xi32>
    %487 = arith.cmpi sle, %483, %486 : vector<128x128xi32>
    %488 = arith.andi %485, %487 : vector<128x128xi1>
    %cst_120 = arith.constant -1.000000e+30 : f32
    %489 = vector.broadcast %cst_120 : f32 to vector<128x128xf32>
    %490 = arith.select %488, %482, %489 : vector<128x128xi1>, vector<128x128xf32>
    %cst_121 = arith.constant dense<0xFF800000> : vector<128xf32>
    %491 = vector.multi_reduction <maximumf>, %490, %cst_121 [1] : vector<128x128xf32> to vector<128xf32>
    %492 = vector.shape_cast %491 : vector<128xf32> to vector<128x1xf32>
    %493 = vector.broadcast %492 : vector<128x1xf32> to vector<128x128xf32>
    %494 = arith.subf %490, %493 : vector<128x128xf32>
    %495 = math.exp %494 : vector<128x128xf32>
    %cst_122 = arith.constant dense<0.000000e+00> : vector<128xf32>
    %496 = vector.multi_reduction <add>, %495, %cst_122 [1] : vector<128x128xf32> to vector<128xf32>
    %497 = vector.shape_cast %496 : vector<128xf32> to vector<128x1xf32>
    %498 = math.log %497 : vector<128x1xf32>
    %499 = vector.broadcast %492 : vector<128x1xf32> to vector<128x128xf32>
    %500 = arith.subf %482, %499 : vector<128x128xf32>
    %501 = vector.broadcast %498 : vector<128x1xf32> to vector<128x128xf32>
    %502 = arith.subf %500, %501 : vector<128x128xf32>
    %c0_i32 = arith.constant 0 : i32
    %503 = vector.broadcast %c0_i32 : i32 to vector<128x128xi32>
    %504 = arith.cmpi eq, %483, %503 : vector<128x128xi32>
    %505 = arith.select %504, %482, %502 : vector<128x128xi1>, vector<128x128xf32>
    %c0_123 = arith.constant 0 : index
    %c0_124 = arith.constant 0 : index
    %506 = vector.load %arg6[%c0_123, %c0_124] : memref<128x128xf32, #tpu.memory_space<vmem>>, vector<128x128xf32>
    tpu.vector_store %arg6[%c0_123, %c0_124], %505 {strides = array<i32>} : memref<128x128xf32, #tpu.memory_space<vmem>>, vector<128x128xf32>,
    return
  }
}

</mosaic_0001>

<llo_original>
// kernel: actor_critic_forward.1
$region0: #{actor_critic_forward.1}
  #allocation0 [shape = 'u32[]', space=smem, size = 0x4, offset = 0x4, fixed_abs, tag = 'smem constant byte address 0x4 - core index']
  #allocation1 [shape = 'u32[144,128]{1,0:T(1,128)}', space=vmem, size = 0x12000, scoped, tag = 'internal scratch']
  %s0 = inlined_call_operand.vmem [shape: f32[128,32], index: 0, kind: input, shape index: {}]
  %s1 = inlined_call_operand.vmem [shape: bf16[32,16], index: 1, kind: input, shape index: {}]
  %s2 = inlined_call_operand.vmem [shape: bf16[8,16,16], index: 2, kind: input, shape index: {}]
  %s3 = inlined_call_operand.vmem [shape: f32[27,16], index: 3, kind: input, shape index: {}]
  %s4 = inlined_call_operand.vmem [shape: f32[16,128], index: 4, kind: input, shape index: {}]
  %s5 = inlined_call_operand.vmem [shape: f32[1,128], index: 5, kind: input, shape index: {}]
  %s6 = inlined_call_operand.vmem [shape: f32[128,128], index: 6, kind: output, shape index: {}]
  %s7 = sld [smem:[#allocation0]]
  $region34: #{actor_critic_forward.1} parent=0
    _
  %s9 = ssub.s32 1, %s7
  %s10 = scalar_select 0, %s9, %s7
  // Predicated region
  $region2: #{actor_critic_forward.1} parent=0 // pred_check
    _
  $region3: #{actor_critic_forward.1} parent=0 // pred_check_branch
    %12 = sbr.rel (0) target = $region5
  $region4: #{actor_critic_forward.1} parent=0 // pred_region
    _
  $region5: #{actor_critic_forward.1} parent=0 // pred_fallthru
    _
  // Predicated region
  $region6: #{actor_critic_forward.1} parent=0 // pred_check
    _
  $region7: #{actor_critic_forward.1} parent=0 // pred_check_branch
    %14 = sbr.rel (0) target = $region9
  $region8: #{actor_critic_forward.1} parent=0 // pred_region
    _
  $region9: #{actor_critic_forward.1} parent=0 // pred_fallthru
    _
  // Predicated region
  $region10: #{actor_critic_forward.1} parent=0 // pred_check
    _
  $region11: #{actor_critic_forward.1} parent=0 // pred_check_branch
    %16 = sbr.rel (0) target = $region13
  $region12: #{actor_critic_forward.1} parent=0 // pred_region
    _
  $region13: #{actor_critic_forward.1} parent=0 // pred_fallthru
    _
  // Predicated region
  $region14: #{actor_critic_forward.1} parent=0 // pred_check
    _
  $region15: #{actor_critic_forward.1} parent=0 // pred_check_branch
    %18 = sbr.rel (0) target = $region17
  $region16: #{actor_critic_forward.1} parent=0 // pred_region
    _
  $region17: #{actor_critic_forward.1} parent=0 // pred_fallthru
    _
  // Predicated region
  $region18: #{actor_critic_forward.1} parent=0 // pred_check
    _
  $region19: #{actor_critic_forward.1} parent=0 // pred_check_branch
    %20 = sbr.rel (0) target = $region21
  $region20: #{actor_critic_forward.1} parent=0 // pred_region
    _
  $region21: #{actor_critic_forward.1} parent=0 // pred_fallthru
    _
  // Predicated region
  $region22: #{actor_critic_forward.1} parent=0 // pred_check
    _
  $region23: #{actor_critic_forward.1} parent=0 // pred_check_branch
    %22 = sbr.rel (0) target = $region25
  $region24: #{actor_critic_forward.1} parent=0 // pred_region
    _
  $region25: #{actor_critic_forward.1} parent=0 // pred_fallthru
    _
  %v24 = vld [vmem:[%s3] sm:$0xff]
  %v25 = vld [vmem:[%s3 + $0x8] sm:$0xff]
  %v26 = vld [vmem:[%s3 + $0x10] sm:$0xff]
  %v27 = vld [vmem:[%s3 + $0x18] sm:$0x7]
  %v28 = vld [vmem:[%s0] sm:$0xff]
  %v29 = vld [vmem:[%s0 + $0x8] sm:$0xff]
  %v30 = vld [vmem:[%s0 + $0x10] sm:$0xff]
  %v31 = vld [vmem:[%s0 + $0x18] sm:$0xff]
  %v32 = vld [vmem:[%s0 + $0x20] sm:$0xff]
  %v33 = vld [vmem:[%s0 + $0x28] sm:$0xff]
  %v34 = vld [vmem:[%s0 + $0x30] sm:$0xff]
  %v35 = vld [vmem:[%s0 + $0x38] sm:$0xff]
  %v36 = vld [vmem:[%s0 + $0x40] sm:$0xff]
  %v37 = vld [vmem:[%s0 + $0x48] sm:$0xff]
  %v38 = vld [vmem:[%s0 + $0x50] sm:$0xff]
  %v39 = vld [vmem:[%s0 + $0x58] sm:$0xff]
  %v40 = vld [vmem:[%s0 + $0x60] sm:$0xff]
  %v41 = vld [vmem:[%s0 + $0x68] sm:$0xff]
  %v42 = vld [vmem:[%s0 + $0x70] sm:$0xff]
  %v43 = vld [vmem:[%s0 + $0x78] sm:$0xff]
  %v44 = vpack.c.bf16 %v29, %v28
  %v45 = vpack.c.bf16 %v31, %v30
  %v46 = vpack.c.bf16 %v33, %v32
  %v47 = vpack.c.bf16 %v35, %v34
  %v48 = vpack.c.bf16 %v37, %v36
  %v49 = vpack.c.bf16 %v39, %v38
  %v50 = vpack.c.bf16 %v41, %v40
  %v51 = vpack.c.bf16 %v43, %v42
  %v52 = vld [vmem:[%s1] sm:$0xf]
  %v53 = vld [vmem:[%s1 + $0x4] sm:$0xf]
  %v54 = vld [vmem:[%s1 + $0x8] sm:$0xf]
  %v55 = vld [vmem:[%s1 + $0xc] sm:$0xf]
  %v56 = vlaneseq
  %v57 = vshrl.u32 %v56, 7
  %v58 = vsub.s32 0, %v57
  %v59 = vrot.slane %v24, %v58
  %v64 = vunpack.c.l.b16 %v52
  %v65 = vunpack.c.l.b16 %v53
  %v66 = vunpack.c.l.b16 %v54
  %v67 = vunpack.c.l.b16 %v55
  %v68 = vpack.c.b16 %v65, %v64
  %v69 = vpack.c.b16 %v67, %v66
  %vm72 = vcmask 261120
  %v74 = vsel %vm72, %v44, 0
  %v77 = vsel %vm72, %v45, 0
  %v80 = vsel %vm72, %v46, 0
  %v83 = vsel %vm72, %v47, 0
  %v86 = vsel %vm72, %v48, 0
  %v89 = vsel %vm72, %v49, 0
  %v92 = vsel %vm72, %v50, 0
  %v95 = vsel %vm72, %v51, 0
  %97 = vmatprep.subr.bf16.mxu0 0
  %98 = vmatpush1.bf16.msra.mxu0 %v68
  %99 = vmatprep.subr.bf16.mxu0 0
  %100 = vmatpush1.bf16.msra.mxu0 %v69
  %101 = vmatprep.subr.bf16.mxu0 0
  %102 = vmatpush1.bf16.msra.mxu0 0
  %103 = vmatprep.subr.bf16.mxu0 0
  %104 = vmatpush1.bf16.msra.mxu0 0
  %105 = vmatprep.subr.bf16.mxu0 0
  %106 = vmatpush1.bf16.msra.mxu0 0
  %107 = vmatprep.subr.bf16.mxu0 0
  %108 = vmatpush1.bf16.msra.mxu0 0
  %109 = vmatprep.subr.bf16.mxu0 0
  %110 = vmatpush1.bf16.msra.mxu0 0
  %111 = vmatprep.subr.bf16.mxu0 0
  %112 = vmatpush1.bf16.msra.mxu0 0
  %113 = vmatprep.subr.bf16.mxu0 0
  %114 = vmatpush1.bf16.msra.mxu0 0
  %115 = vmatprep.subr.bf16.mxu0 0
  %116 = vmatpush1.bf16.msra.mxu0 0
  %117 = vmatprep.subr.bf16.mxu0 0
  %118 = vmatpush1.bf16.msra.mxu0 0
  %119 = vmatprep.subr.bf16.mxu0 0
  %120 = vmatpush1.bf16.msra.mxu0 0
  %121 = vmatprep.subr.bf16.mxu0 0
  %122 = vmatpush1.bf16.msra.mxu0 0
  %123 = vmatprep.subr.bf16.mxu0 0
  %124 = vmatpush1.bf16.msra.mxu0 0
  %125 = vmatprep.subr.bf16.mxu0 0
  %126 = vmatpush1.bf16.msra.mxu0 0
  %127 = vmatprep.subr.bf16.mxu0 0
  %128 = vmatpush1.bf16.msra.mxu0 0
  %129 = vmatprep.mubr.bf16.mxu0 0
  %130 = vmatmul.mubr.bf16.gmra.mrb[0].mxu0 %v74
  %v131 = vpop.f32.mrb[0].mxu0
  %v132 = vadd.f32 %v59, %v131
  %v133 = vpop.f32.mrb[0].mxu0
  %v134 = vpop.f32.mrb[0].mxu0
  %v135 = vadd.f32 %v59, %v134
  %v136 = vpop.f32.mrb[0].mxu0
  %137 = vmatprep.mubr.bf16.mxu0 0
  %138 = vmatmul.mubr.bf16.gmra.mrb[0].mxu0 %v77
  %v139 = vpop.f32.mrb[0].mxu0
  %v140 = vadd.f32 %v59, %v139
  %v141 = vpop.f32.mrb[0].mxu0
  %v142 = vpop.f32.mrb[0].mxu0
  %v143 = vadd.f32 %v59, %v142
  %v144 = vpop.f32.mrb[0].mxu0
  %145 = vmatprep.mubr.bf16.mxu0 0
  %146 = vmatmul.mubr.bf16.gmra.mrb[0].mxu0 %v80
  %v147 = vpop.f32.mrb[0].mxu0
  %v148 = vadd.f32 %v59, %v147
  %v149 = vpop.f32.mrb[0].mxu0
  %v150 = vpop.f32.mrb[0].mxu0
  %v151 = vadd.f32 %v59, %v150
  %v152 = vpop.f32.mrb[0].mxu0
  %153 = vmatprep.mubr.bf16.mxu0 0
  %154 = vmatmul.mubr.bf16.gmra.mrb[0].mxu0 %v83
  %v155 = vpop.f32.mrb[0].mxu0
  %v156 = vadd.f32 %v59, %v155
  %v157 = vpop.f32.mrb[0].mxu0
  %v158 = vpop.f32.mrb[0].mxu0
  %v159 = vadd.f32 %v59, %v158
  %v160 = vpop.f32.mrb[0].mxu0
  %161 = vmatprep.mubr.bf16.mxu0 0
  %162 = vmatmul.mubr.bf16.gmra.mrb[0].mxu0 %v86
  %v163 = vpop.f32.mrb[0].mxu0
  %v164 = vadd.f32 %v59, %v163
  %v165 = vpop.f32.mrb[0].mxu0
  %v166 = vpop.f32.mrb[0].mxu0
  %v167 = vadd.f32 %v59, %v166
  %v168 = vpop.f32.mrb[0].mxu0
  %169 = vmatprep.mubr.bf16.mxu0 0
  %170 = vmatmul.mubr.bf16.gmra.mrb[0].mxu0 %v89
  %v171 = vpop.f32.mrb[0].mxu0
  %v172 = vadd.f32 %v59, %v171
  %v173 = vpop.f32.mrb[0].mxu0
  %v174 = vpop.f32.mrb[0].mxu0
  %v175 = vadd.f32 %v59, %v174
  %v176 = vpop.f32.mrb[0].mxu0
  %177 = vmatprep.mubr.bf16.mxu0 0
  %178 = vmatmul.mubr.bf16.gmra.mrb[0].mxu0 %v92
  %v179 = vpop.f32.mrb[0].mxu0
  %v180 = vadd.f32 %v59, %v179
  %v181 = vpop.f32.mrb[0].mxu0
  %v182 = vpop.f32.mrb[0].mxu0
  %v183 = vadd.f32 %v59, %v182
  %v184 = vpop.f32.mrb[0].mxu0
  %185 = vmatprep.mubr.bf16.mxu0 0
  %186 = vmatmul.mubr.bf16.gmra.mrb[0].mxu0 %v95
  %v187 = vpop.f32.mrb[0].mxu0
  %v188 = vadd.f32 %v59, %v187
  %v189 = vpop.f32.mrb[0].mxu0
  %v190 = vpop.f32.mrb[0].mxu0
  %v191 = vadd.f32 %v59, %v190
  %v192 = vpop.f32.mrb[0].mxu0
  %193 = vdwg.mxu0
  %v194 = vmul.f32 %v132, %v132
  %v195 = vmul.f32 %v135, %v135
  %v196 = vmul.f32 %v140, %v140
  %v197 = vmul.f32 %v143, %v143
  %v198 = vmul.f32 %v148, %v148
  %v199 = vmul.f32 %v151, %v151
  %v200 = vmul.f32 %v156, %v156
  %v201 = vmul.f32 %v159, %v159
  %v202 = vmul.f32 %v164, %v164
  %v203 = vmul.f32 %v167, %v167
  %v204 = vmul.f32 %v172, %v172
  %v205 = vmul.f32 %v175, %v175
  %v206 = vmul.f32 %v180, %v180
  %v207 = vmul.f32 %v183, %v183
  %v208 = vmul.f32 %v188, %v188
  %v209 = vmul.f32 %v191, %v191
  %226 = vrot.lane.b32.xlu0 %v194, 16
  %v227 = vpop.permute.xlu0 %226
  %228 = vrot.lane.b32.xlu0 %v195, 16
  %v229 = vpop.permute.xlu0 %228
  %230 = vrot.lane.b32.xlu0 %v196, 16
  %v231 = vpop.permute.xlu0 %230
  %232 = vrot.lane.b32.xlu0 %v197, 16
  %v233 = vpop.permute.xlu0 %232
  %234 = vrot.lane.b32.xlu0 %v198, 16
  %v235 = vpop.permute.xlu0 %234
  %236 = vrot.lane.b32.xlu0 %v199, 16
  %v237 = vpop.permute.xlu0 %236
  %238 = vrot.lane.b32.xlu0 %v200, 16
  %v239 = vpop.permute.xlu0 %238
  %240 = vrot.lane.b32.xlu0 %v201, 16
  %v241 = vpop.permute.xlu0 %240
  %242 = vrot.lane.b32.xlu0 %v202, 16
  %v243 = vpop.permute.xlu0 %242
  %244 = vrot.lane.b32.xlu0 %v203, 16
  %v245 = vpop.permute.xlu0 %244
  %246 = vrot.lane.b32.xlu0 %v204, 16
  %v247 = vpop.permute.xlu0 %246
  %248 = vrot.lane.b32.xlu0 %v205, 16
  %v249 = vpop.permute.xlu0 %248
  %250 = vrot.lane.b32.xlu0 %v206, 16
  %v251 = vpop.permute.xlu0 %250
  %252 = vrot.lane.b32.xlu0 %v207, 16
  %v253 = vpop.permute.xlu0 %252
  %254 = vrot.lane.b32.xlu0 %v208, 16
  %v255 = vpop.permute.xlu0 %254
  %256 = vrot.lane.b32.xlu0 %v209, 16
  %v257 = vpop.permute.xlu0 %256
  %vm274 = vcmask 130048
  %v275 = vsel %vm274, %v132, %v227
  %v276 = vsel %vm274, %v135, %v229
  %v277 = vsel %vm274, %v140, %v231
  %v278 = vsel %vm274, %v143, %v233
  %v279 = vsel %vm274, %v148, %v235
  %v280 = vsel %vm274, %v151, %v237
  %v281 = vsel %vm274, %v156, %v239
  %v282 = vsel %vm274, %v159, %v241
  %v283 = vsel %vm274, %v164, %v243
  %v284 = vsel %vm274, %v167, %v245
  %v285 = vsel %vm274, %v172, %v247
  %v286 = vsel %vm274, %v175, %v249
  %v287 = vsel %vm274, %v180, %v251
  %v288 = vsel %vm274, %v183, %v253
  %v289 = vsel %vm274, %v188, %v255
  %v290 = vsel %vm274, %v191, %v257
  %v291 = vsel %vm72, %v275, 0.0
  %v292 = vsel %vm72, %v276, 0.0
  %v293 = vadd.f32 %v291, %v292
  %v294 = vsel %vm72, %v277, 0.0
  %v295 = vadd.f32 %v293, %v294
  %v296 = vsel %vm72, %v278, 0.0
  %v297 = vadd.f32 %v295, %v296
  %v298 = vsel %vm72, %v279, 0.0
  %v299 = vadd.f32 %v297, %v298
  %v300 = vsel %vm72, %v280, 0.0
  %v301 = vadd.f32 %v299, %v300
  %v302 = vsel %vm72, %v281, 0.0
  %v303 = vadd.f32 %v301, %v302
  %v304 = vsel %vm72, %v282, 0.0
  %v305 = vadd.f32 %v303, %v304
  %v306 = vsel %vm72, %v283, 0.0
  %v307 = vadd.f32 %v305, %v306
  %v308 = vsel %vm72, %v284, 0.0
  %v309 = vadd.f32 %v307, %v308
  %v310 = vsel %vm72, %v285, 0.0
  %v311 = vadd.f32 %v309, %v310
  %v312 = vsel %vm72, %v286, 0.0
  %v313 = vadd.f32 %v311, %v312
  %v314 = vsel %vm72, %v287, 0.0
  %v315 = vadd.f32 %v313, %v314
  %v316 = vsel %vm72, %v288, 0.0
  %v317 = vadd.f32 %v315, %v316
  %v318 = vsel %vm72, %v289, 0.0
  %v319 = vadd.f32 %v317, %v318
  %v320 = vsel %vm72, %v290, 0.0
  %v321 = vadd.f32 %v319, %v320
  %v322 = vrot.slane %v321, 4
  %v323 = vadd.f32 %v321, %v322
  %v324 = vrot.slane %v323, 2
  %v325 = vadd.f32 %v323, %v324
  %v326 = vrot.slane %v325, 1
  %v327 = vadd.f32 %v325, %v326
  %v328 = vrcp.pop 128.0
  %v329 = vmul.f32 %v327, %v328
  %v330 = vmul.f32 %v329, %v329
  %332 = vrot.lane.b32.xlu0 %v330, 16
  %v333 = vpop.permute.xlu0 %332
  %v335 = vsub.f32 %v329, %v333
  %v336 = vmax.f32 %v335, 0.0
  %v337 = vadd.f32 %v336, 1e-05
  %v338 = vrsqrt.pop %v337
  %v340 = vrot.slane %v338, 7
  %341 = vrot.lane.b32.xlu0 %v340, 112
  %v342 = vpop.permute.xlu0 %341
  %v344 = vmul.f32 %v24, %v342
  %v345 = vmul.f32 %v329, %v344
  %v347 = vrot.slane %v345, 7
  %v349 = vsub.f32 %v24, %v347
  %v350 = vlaneseq
  %v351 = vshrl.u32 %v350, 7
  %v352 = vsub.s32 1, %v351
  %v353 = vrot.slane %v344, %v352
  %v354 = vmul.f32 %v132, %v353
  %v355 = vmul.f32 %v135, %v353
  %v356 = vmul.f32 %v140, %v353
  %v357 = vmul.f32 %v143, %v353
  %v358 = vmul.f32 %v148, %v353
  %v359 = vmul.f32 %v151, %v353
  %v360 = vmul.f32 %v156, %v353
  %v361 = vmul.f32 %v159, %v353
  %v362 = vmul.f32 %v164, %v353
  %v363 = vmul.f32 %v167, %v353
  %v364 = vmul.f32 %v172, %v353
  %v365 = vmul.f32 %v175, %v353
  %v366 = vmul.f32 %v180, %v353
  %v367 = vmul.f32 %v183, %v353
  %v368 = vmul.f32 %v188, %v353
  %v369 = vmul.f32 %v191, %v353
  %v370 = vlaneseq
  %v371 = vshrl.u32 %v370, 7
  %v372 = vsub.s32 2, %v371
  %v373 = vrot.slane %v349, %v372
  %v374 = vadd.f32 %v354, %v373
  %v375 = vadd.f32 %v355, %v373
  %v376 = vadd.f32 %v356, %v373
  %v377 = vadd.f32 %v357, %v373
  %v378 = vadd.f32 %v358, %v373
  %v379 = vadd.f32 %v359, %v373
  %v380 = vadd.f32 %v360, %v373
  %v381 = vadd.f32 %v361, %v373
  %v382 = vadd.f32 %v362, %v373
  %v383 = vadd.f32 %v363, %v373
  %v384 = vadd.f32 %v364, %v373
  %v385 = vadd.f32 %v365, %v373
  %v386 = vadd.f32 %v366, %v373
  %v387 = vadd.f32 %v367, %v373
  %v388 = vadd.f32 %v368, %v373
  %v389 = vadd.f32 %v369, %v373
  %v390 = vmax.f32 %v374, 0.0
  %v391 = vmax.f32 %v375, 0.0
  %v392 = vmax.f32 %v376, 0.0
  %v393 = vmax.f32 %v377, 0.0
  %v394 = vmax.f32 %v378, 0.0
  %v395 = vmax.f32 %v379, 0.0
  %v396 = vmax.f32 %v380, 0.0
  %v397 = vmax.f32 %v381, 0.0
  %v398 = vmax.f32 %v382, 0.0
  %v399 = vmax.f32 %v383, 0.0
  %v400 = vmax.f32 %v384, 0.0
  %v401 = vmax.f32 %v385, 0.0
  %v402 = vmax.f32 %v386, 0.0
  %v403 = vmax.f32 %v387, 0.0
  %v404 = vmax.f32 %v388, 0.0
  %v405 = vmax.f32 %v389, 0.0
  %v406 = vld [vmem:[%s2] sm:$0xf]
  %v407 = vld [vmem:[%s2 + $0x4] sm:$0xf]
  %v408 = vpack.c.bf16 %v391, %v390
  %v409 = vpack.c.bf16 %v393, %v392
  %v410 = vpack.c.bf16 %v395, %v394
  %v411 = vpack.c.bf16 %v397, %v396
  %v412 = vpack.c.bf16 %v399, %v398
  %v413 = vpack.c.bf16 %v401, %v400
  %v414 = vpack.c.bf16 %v403, %v402
  %v415 = vpack.c.bf16 %v405, %v404
  %v416 = vlaneseq
  %v417 = vshrl.u32 %v416, 7
  %v418 = vsub.s32 3, %v417
  %v419 = vrot.slane %v24, %v418
  %v422 = vunpack.c.l.b16 %v406
  %v423 = vunpack.c.l.b16 %v407
  %v424 = vpack.c.b16 %v423, %v422
  %v427 = vsel %vm274, %v408, 0
  %v430 = vsel %vm274, %v409, 0
  %v433 = vsel %vm274, %v410, 0
  %v436 = vsel %vm274, %v411, 0
  %v439 = vsel %vm274, %v412, 0
  %v442 = vsel %vm274, %v413, 0
  %v445 = vsel %vm274, %v414, 0
  %v448 = vsel %vm274, %v415, 0
  %450 = vmatprep.subr.bf16.mxu0 0
  %451 = vmatpush1.bf16.msra.mxu0 %v424
  %452 = vmatprep.subr.bf16.mxu0 0
  %453 = vmatpush1.bf16.msra.mxu0 0
  %454 = vmatprep.subr.bf16.mxu0 0
  %455 = vmatpush1.bf16.msra.mxu0 0
  %456 = vmatprep.subr.bf16.mxu0 0
  %457 = vmatpush1.bf16.msra.mxu0 0
  %458 = vmatprep.subr.bf16.mxu0 0
  %459 = vmatpush1.bf16.msra.mxu0 0
  %460 = vmatprep.subr.bf16.mxu0 0
  %461 = vmatpush1.bf16.msra.mxu0 0
  %462 = vmatprep.subr.bf16.mxu0 0
  %463 = vmatpush1.bf16.msra.mxu0 0
  %464 = vmatprep.subr.bf16.mxu0 0
  %465 = vmatpush1.bf16.msra.mxu0 0
  %466 = vmatprep.subr.bf16.mxu0 0
  %467 = vmatpush1.bf16.msra.mxu0 0
  %468 = vmatprep.subr.bf16.mxu0 0
  %469 = vmatpush1.bf16.msra.mxu0 0
  %470 = vmatprep.subr.bf16.mxu0 0
  %471 = vmatpush1.bf16.msra.mxu0 0
  %472 = vmatprep.subr.bf16.mxu0 0
  %473 = vmatpush1.bf16.msra.mxu0 0
  %474 = vmatprep.subr.bf16.mxu0 0
  %475 = vmatpush1.bf16.msra.mxu0 0
  %476 = vmatprep.subr.bf16.mxu0 0
  %477 = vmatpush1.bf16.msra.mxu0 0
  %478 = vmatprep.subr.bf16.mxu0 0
  %479 = vmatpush1.bf16.msra.mxu0 0
  %480 = vmatprep.subr.bf16.mxu0 0
  %481 = vmatpush1.bf16.msra.mxu0 0
  %482 = vmatprep.mubr.bf16.mxu0 0
  %483 = vmatmul.mubr.bf16.gmra.mrb[0].mxu0 %v427
  %v484 = vpop.f32.mrb[0].mxu0
  %v485 = vadd.f32 %v419, %v484
  %v486 = vpop.f32.mrb[0].mxu0
  %v487 = vpop.f32.mrb[0].mxu0
  %v488 = vadd.f32 %v419, %v487
  %v489 = vpop.f32.mrb[0].mxu0
  %490 = vmatprep.mubr.bf16.mxu0 0
  %491 = vmatmul.mubr.bf16.gmra.mrb[0].mxu0 %v430
  %v492 = vpop.f32.mrb[0].mxu0
  %v493 = vadd.f32 %v419, %v492
  %v494 = vpop.f32.mrb[0].mxu0
  %v495 = vpop.f32.mrb[0].mxu0
  %v496 = vadd.f32 %v419, %v495
  %v497 = vpop.f32.mrb[0].mxu0
  %498 = vmatprep.mubr.bf16.mxu0 0
  %499 = vmatmul.mubr.bf16.gmra.mrb[0].mxu0 %v433
  %v500 = vpop.f32.mrb[0].mxu0
  %v501 = vadd.f32 %v419, %v500
  %v502 = vpop.f32.mrb[0].mxu0
  %v503 = vpop.f32.mrb[0].mxu0
  %v504 = vadd.f32 %v419, %v503
  %v505 = vpop.f32.mrb[0].mxu0
  %506 = vmatprep.mubr.bf16.mxu0 0
  %507 = vmatmul.mubr.bf16.gmra.mrb[0].mxu0 %v436
  %v508 = vpop.f32.mrb[0].mxu0
  %v509 = vadd.f32 %v419, %v508
  %v510 = vpop.f32.mrb[0].mxu0
  %v511 = vpop.f32.mrb[0].mxu0
  %v512 = vadd.f32 %v419, %v511
  %v513 = vpop.f32.mrb[0].mxu0
  %514 = vmatprep.mubr.bf16.mxu0 0
  %515 = vmatmul.mubr.bf16.gmra.mrb[0].mxu0 %v439
  %v516 = vpop.f32.mrb[0].mxu0
  %v517 = vadd.f32 %v419, %v516
  %v518 = vpop.f32.mrb[0].mxu0
  %v519 = vpop.f32.mrb[0].mxu0
  %v520 = vadd.f32 %v419, %v519
  %v521 = vpop.f32.mrb[0].mxu0
  %522 = vmatprep.mubr.bf16.mxu0 0
  %523 = vmatmul.mubr.bf16.gmra.mrb[0].mxu0 %v442
  %v524 = vpop.f32.mrb[0].mxu0
  %v525 = vadd.f32 %v419, %v524
  %v526 = vpop.f32.mrb[0].mxu0
  %v527 = vpop.f32.mrb[0].mxu0
  %v528 = vadd.f32 %v419, %v527
  %v529 = vpop.f32.mrb[0].mxu0
  %530 = vmatprep.mubr.bf16.mxu0 0
  %531 = vmatmul.mubr.bf16.gmra.mrb[0].mxu0 %v445
  %v532 = vpop.f32.mrb[0].mxu0
  %v533 = vadd.f32 %v419, %v532
  %v534 = vpop.f32.mrb[0].mxu0
  %v535 = vpop.f32.mrb[0].mxu0
  %v536 = vadd.f32 %v419, %v535
  %v537 = vpop.f32.mrb[0].mxu0
  %538 = vmatprep.mubr.bf16.mxu0 0
  %539 = vmatmul.mubr.bf16.gmra.mrb[0].mxu0 %v448
  %v540 = vpop.f32.mrb[0].mxu0
  %v541 = vadd.f32 %v419, %v540
  %v542 = vpop.f32.mrb[0].mxu0
  %v543 = vpop.f32.mrb[0].mxu0
  %v544 = vadd.f32 %v419, %v543
  %v545 = vpop.f32.mrb[0].mxu0
  %546 = vdwg.mxu0
  %v547 = vmul.f32 %v485, %v485
  %v548 = vmul.f32 %v488, %v488
  %v549 = vmul.f32 %v493, %v493
  %v550 = vmul.f32 %v496, %v496
  %v551 = vmul.f32 %v501, %v501
  %v552 = vmul.f32 %v504, %v504
  %v553 = vmul.f32 %v509, %v509
  %v554 = vmul.f32 %v512, %v512
  %v555 = vmul.f32 %v517, %v517
  %v556 = vmul.f32 %v520, %v520
  %v557 = vmul.f32 %v525, %v525
  %v558 = vmul.f32 %v528, %v528
  %v559 = vmul.f32 %v533, %v533
  %v560 = vmul.f32 %v536, %v536
  %v561 = vmul.f32 %v541, %v541
  %v562 = vmul.f32 %v544, %v544
  %579 = vrot.lane.b32.xlu0 %v547, 16
  %v580 = vpop.permute.xlu0 %579
  %581 = vrot.lane.b32.xlu0 %v548, 16
  %v582 = vpop.permute.xlu0 %581
  %583 = vrot.lane.b32.xlu0 %v549, 16
  %v584 = vpop.permute.xlu0 %583
  %585 = vrot.lane.b32.xlu0 %v550, 16
  %v586 = vpop.permute.xlu0 %585
  %587 = vrot.lane.b32.xlu0 %v551, 16
  %v588 = vpop.permute.xlu0 %587
  %589 = vrot.lane.b32.xlu0 %v552, 16
  %v590 = vpop.permute.xlu0 %589
  %591 = vrot.lane.b32.xlu0 %v553, 16
  %v592 = vpop.permute.xlu0 %591
  %593 = vrot.lane.b32.xlu0 %v554, 16
  %v594 = vpop.permute.xlu0 %593
  %595 = vrot.lane.b32.xlu0 %v555, 16
  %v596 = vpop.permute.xlu0 %595
  %597 = vrot.lane.b32.xlu0 %v556, 16
  %v598 = vpop.permute.xlu0 %597
  %599 = vrot.lane.b32.xlu0 %v557, 16
  %v600 = vpop.permute.xlu0 %599
  %601 = vrot.lane.b32.xlu0 %v558, 16
  %v602 = vpop.permute.xlu0 %601
  %603 = vrot.lane.b32.xlu0 %v559, 16
  %v604 = vpop.permute.xlu0 %603
  %605 = vrot.lane.b32.xlu0 %v560, 16
  %v606 = vpop.permute.xlu0 %605
  %607 = vrot.lane.b32.xlu0 %v561, 16
  %v608 = vpop.permute.xlu0 %607
  %609 = vrot.lane.b32.xlu0 %v562, 16
  %v610 = vpop.permute.xlu0 %609
  %v627 = vsel %vm274, %v485, %v580
  %v628 = vsel %vm274, %v488, %v582
  %v629 = vsel %vm274, %v493, %v584
  %v630 = vsel %vm274, %v496, %v586
  %v631 = vsel %vm274, %v501, %v588
  %v632 = vsel %vm274, %v504, %v590
  %v633 = vsel %vm274, %v509, %v592
  %v634 = vsel %vm274, %v512, %v594
  %v635 = vsel %vm274, %v517, %v596
  %v636 = vsel %vm274, %v520, %v598
  %v637 = vsel %vm274, %v525, %v600
  %v638 = vsel %vm274, %v528, %v602
  %v639 = vsel %vm274, %v533, %v604
  %v640 = vsel %vm274, %v536, %v606
  %v641 = vsel %vm274, %v541, %v608
  %v642 = vsel %vm274, %v544, %v610
  %v643 = vsel %vm72, %v627, 0.0
  %v644 = vsel %vm72, %v628, 0.0
  %v645 = vadd.f32 %v643, %v644
  %v646 = vsel %vm72, %v629, 0.0
  %v647 = vadd.f32 %v645, %v646
  %v648 = vsel %vm72, %v630, 0.0
  %v649 = vadd.f32 %v647, %v648
  %v650 = vsel %vm72, %v631, 0.0
  %v651 = vadd.f32 %v649, %v650
  %v652 = vsel %vm72, %v632, 0.0
  %v653 = vadd.f32 %v651, %v652
  %v654 = vsel %vm72, %v633, 0.0
  %v655 = vadd.f32 %v653, %v654
  %v656 = vsel %vm72, %v634, 0.0
  %v657 = vadd.f32 %v655, %v656
  %v658 = vsel %vm72, %v635, 0.0
  %v659 = vadd.f32 %v657, %v658
  %v660 = vsel %vm72, %v636, 0.0
  %v661 = vadd.f32 %v659, %v660
  %v662 = vsel %vm72, %v637, 0.0
  %v663 = vadd.f32 %v661, %v662
  %v664 = vsel %vm72, %v638, 0.0
  %v665 = vadd.f32 %v663, %v664
  %v666 = vsel %vm72, %v639, 0.0
  %v667 = vadd.f32 %v665, %v666
  %v668 = vsel %vm72, %v640, 0.0
  %v669 = vadd.f32 %v667, %v668
  %v670 = vsel %vm72, %v641, 0.0
  %v671 = vadd.f32 %v669, %v670
  %v672 = vsel %vm72, %v642, 0.0
  %v673 = vadd.f32 %v671, %v672
  %v674 = vrot.slane %v673, 4
  %v675 = vadd.f32 %v673, %v674
  %v676 = vrot.slane %v675, 2
  %v677 = vadd.f32 %v675, %v676
  %v678 = vrot.slane %v677, 1
  %v679 = vadd.f32 %v677, %v678
  %v680 = vmul.f32 %v679, %v328
  %v681 = vmul.f32 %v680, %v680
  %683 = vrot.lane.b32.xlu0 %v681, 16
  %v684 = vpop.permute.xlu0 %683
  %v686 = vsub.f32 %v680, %v684
  %v687 = vmax.f32 %v686, 0.0
  %v688 = vadd.f32 %v687, 1e-05
  %v689 = vrsqrt.pop %v688
  %v691 = vrot.slane %v689, 7
  %692 = vrot.lane.b32.xlu0 %v691, 112
  %v693 = vpop.permute.xlu0 %692
  %v695 = vmul.f32 %v25, %v693
  %v696 = vmul.f32 %v680, %v695
  %v698 = vrot.slane %v696, 2
  %v700 = vsub.f32 %v25, %v698
  %v701 = vlaneseq
  %v702 = vshrl.u32 %v701, 7
  %v703 = vsub.s32 1, %v702
  %v704 = vrot.slane %v695, %v703
  %v705 = vmul.f32 %v485, %v704
  %v706 = vmul.f32 %v488, %v704
  %v707 = vmul.f32 %v493, %v704
  %v708 = vmul.f32 %v496, %v704
  %v709 = vmul.f32 %v501, %v704
  %v710 = vmul.f32 %v504, %v704
  %v711 = vmul.f32 %v509, %v704
  %v712 = vmul.f32 %v512, %v704
  %v713 = vmul.f32 %v517, %v704
  %v714 = vmul.f32 %v520, %v704
  %v715 = vmul.f32 %v525, %v704
  %v716 = vmul.f32 %v528, %v704
  %v717 = vmul.f32 %v533, %v704
  %v718 = vmul.f32 %v536, %v704
  %v719 = vmul.f32 %v541, %v704
  %v720 = vmul.f32 %v544, %v704
  %v721 = vlaneseq
  %v722 = vshrl.u32 %v721, 7
  %v723 = vsub.s32 7, %v722
  %v724 = vrot.slane %v700, %v723
  %v725 = vadd.f32 %v705, %v724
  %v726 = vadd.f32 %v706, %v724
  %v727 = vadd.f32 %v707, %v724
  %v728 = vadd.f32 %v708, %v724
  %v729 = vadd.f32 %v709, %v724
  %v730 = vadd.f32 %v710, %v724
  %v731 = vadd.f32 %v711, %v724
  %v732 = vadd.f32 %v712, %v724
  %v733 = vadd.f32 %v713, %v724
  %v734 = vadd.f32 %v714, %v724
  %v735 = vadd.f32 %v715, %v724
  %v736 = vadd.f32 %v716, %v724
  %v737 = vadd.f32 %v717, %v724
  %v738 = vadd.f32 %v718, %v724
  %v739 = vadd.f32 %v719, %v724
  %v740 = vadd.f32 %v720, %v724
  %v741 = vmax.f32 %v725, 0.0
  %v742 = vmax.f32 %v726, 0.0
  %v743 = vmax.f32 %v727, 0.0
  %v744 = vmax.f32 %v728, 0.0
  %v745 = vmax.f32 %v729, 0.0
  %v746 = vmax.f32 %v730, 0.0
  %v747 = vmax.f32 %v731, 0.0
  %v748 = vmax.f32 %v732, 0.0
  %v749 = vmax.f32 %v733, 0.0
  %v750 = vmax.f32 %v734, 0.0
  %v751 = vmax.f32 %v735, 0.0
  %v752 = vmax.f32 %v736, 0.0
  %v753 = vmax.f32 %v737, 0.0
  %v754 = vmax.f32 %v738, 0.0
  %v755 = vmax.f32 %v739, 0.0
  %v756 = vmax.f32 %v740, 0.0
  %v757 = vpack.c.bf16 %v742, %v741
  %v758 = vpack.c.bf16 %v744, %v743
  %v759 = vpack.c.bf16 %v746, %v745
  %v760 = vpack.c.bf16 %v748, %v747
  %v761 = vpack.c.bf16 %v750, %v749
  %v762 = vpack.c.bf16 %v752, %v751
  %v763 = vpack.c.bf16 %v754, %v753
  %v764 = vpack.c.bf16 %v756, %v755
  %v766 = vsel %vm274, %v757, 0
  %v769 = vsel %vm274, %v758, 0
  %v772 = vsel %vm274, %v759, 0
  %v775 = vsel %vm274, %v760, 0
  %v778 = vsel %vm274, %v761, 0
  %v781 = vsel %vm274, %v762, 0
  %v784 = vsel %vm274, %v763, 0
  %v787 = vsel %vm274, %v764, 0
  %789 = vmatprep.subr.bf16.mxu0 0
  %790 = vmatpush1.bf16.msra.mxu0 %v424
  %791 = vmatprep.subr.bf16.mxu0 0
  %792 = vmatpush1.bf16.msra.mxu0 0
  %793 = vmatprep.subr.bf16.mxu0 0
  %794 = vmatpush1.bf16.msra.mxu0 0
  %795 = vmatprep.subr.bf16.mxu0 0
  %796 = vmatpush1.bf16.msra.mxu0 0
  %797 = vmatprep.subr.bf16.mxu0 0
  %798 = vmatpush1.bf16.msra.mxu0 0
  %799 = vmatprep.subr.bf16.mxu0 0
  %800 = vmatpush1.bf16.msra.mxu0 0
  %801 = vmatprep.subr.bf16.mxu0 0
  %802 = vmatpush1.bf16.msra.mxu0 0
  %803 = vmatprep.subr.bf16.mxu0 0
  %804 = vmatpush1.bf16.msra.mxu0 0
  %805 = vmatprep.subr.bf16.mxu0 0
  %806 = vmatpush1.bf16.msra.mxu0 0
  %807 = vmatprep.subr.bf16.mxu0 0
  %808 = vmatpush1.bf16.msra.mxu0 0
  %809 = vmatprep.subr.bf16.mxu0 0
  %810 = vmatpush1.bf16.msra.mxu0 0
  %811 = vmatprep.subr.bf16.mxu0 0
  %812 = vmatpush1.bf16.msra.mxu0 0
  %813 = vmatprep.subr.bf16.mxu0 0
  %814 = vmatpush1.bf16.msra.mxu0 0
  %815 = vmatprep.subr.bf16.mxu0 0
  %816 = vmatpush1.bf16.msra.mxu0 0
  %817 = vmatprep.subr.bf16.mxu0 0
  %818 = vmatpush1.bf16.msra.mxu0 0
  %819 = vmatprep.subr.bf16.mxu0 0
  %820 = vmatpush1.bf16.msra.mxu0 0
  %821 = vmatprep.mubr.bf16.mxu0 0
  %822 = vmatmul.mubr.bf16.gmra.mrb[0].mxu0 %v766
  %v823 = vpop.f32.mrb[0].mxu0
  %v824 = vadd.f32 %v419, %v823
  %v825 = vpop.f32.mrb[0].mxu0
  %v826 = vpop.f32.mrb[0].mxu0
  %v827 = vadd.f32 %v419, %v826
  %v828 = vpop.f32.mrb[0].mxu0
  %829 = vmatprep.mubr.bf16.mxu0 0
  %830 = vmatmul.mubr.bf16.gmra.mrb[0].mxu0 %v769
  %v831 = vpop.f32.mrb[0].mxu0
  %v832 = vadd.f32 %v419, %v831
  %v833 = vpop.f32.mrb[0].mxu0
  %v834 = vpop.f32.mrb[0].mxu0
  %v835 = vadd.f32 %v419, %v834
  %v836 = vpop.f32.mrb[0].mxu0
  %837 = vmatprep.mubr.bf16.mxu0 0
  %838 = vmatmul.mubr.bf16.gmra.mrb[0].mxu0 %v772
  %v839 = vpop.f32.mrb[0].mxu0
  %v840 = vadd.f32 %v419, %v839
  %v841 = vpop.f32.mrb[0].mxu0
  %v842 = vpop.f32.mrb[0].mxu0
  %v843 = vadd.f32 %v419, %v842
  %v844 = vpop.f32.mrb[0].mxu0
  %845 = vmatprep.mubr.bf16.mxu0 0
  %846 = vmatmul.mubr.bf16.gmra.mrb[0].mxu0 %v775
  %v847 = vpop.f32.mrb[0].mxu0
  %v848 = vadd.f32 %v419, %v847
  %v849 = vpop.f32.mrb[0].mxu0
  %v850 = vpop.f32.mrb[0].mxu0
  %v851 = vadd.f32 %v419, %v850
  %v852 = vpop.f32.mrb[0].mxu0
  %853 = vmatprep.mubr.bf16.mxu0 0
  %854 = vmatmul.mubr.bf16.gmra.mrb[0].mxu0 %v778
  %v855 = vpop.f32.mrb[0].mxu0
  %v856 = vadd.f32 %v419, %v855
  %v857 = vpop.f32.mrb[0].mxu0
  %v858 = vpop.f32.mrb[0].mxu0
  %v859 = vadd.f32 %v419, %v858
  %v860 = vpop.f32.mrb[0].mxu0
  %861 = vmatprep.mubr.bf16.mxu0 0
  %862 = vmatmul.mubr.bf16.gmra.mrb[0].mxu0 %v781
  %v863 = vpop.f32.mrb[0].mxu0
  %v864 = vadd.f32 %v419, %v863
  %v865 = vpop.f32.mrb[0].mxu0
  %v866 = vpop.f32.mrb[0].mxu0
  %v867 = vadd.f32 %v419, %v866
  %v868 = vpop.f32.mrb[0].mxu0
  %869 = vmatprep.mubr.bf16.mxu0 0
  %870 = vmatmul.mubr.bf16.gmra.mrb[0].mxu0 %v784
  %v871 = vpop.f32.mrb[0].mxu0
  %v872 = vadd.f32 %v419, %v871
  %v873 = vpop.f32.mrb[0].mxu0
  %v874 = vpop.f32.mrb[0].mxu0
  %v875 = vadd.f32 %v419, %v874
  %v876 = vpop.f32.mrb[0].mxu0
  %877 = vmatprep.mubr.bf16.mxu0 0
  %878 = vmatmul.mubr.bf16.gmra.mrb[0].mxu0 %v787
  %v879 = vpop.f32.mrb[0].mxu0
  %v880 = vadd.f32 %v419, %v879
  %v881 = vpop.f32.mrb[0].mxu0
  %v882 = vpop.f32.mrb[0].mxu0
  %v883 = vadd.f32 %v419, %v882
  %v884 = vpop.f32.mrb[0].mxu0
  %885 = vdwg.mxu0
  %v886 = vmax.f32 %v824, 0.0
  %v887 = vmax.f32 %v827, 0.0
  %v888 = vmax.f32 %v832, 0.0
  %v889 = vmax.f32 %v835, 0.0
  %v890 = vmax.f32 %v840, 0.0
  %v891 = vmax.f32 %v843, 0.0
  %v892 = vmax.f32 %v848, 0.0
  %v893 = vmax.f32 %v851, 0.0
  %v894 = vmax.f32 %v856, 0.0
  %v895 = vmax.f32 %v859, 0.0
  %v896 = vmax.f32 %v864, 0.0
  %v897 = vmax.f32 %v867, 0.0
  %v898 = vmax.f32 %v872, 0.0
  %v899 = vmax.f32 %v875, 0.0
  %v900 = vmax.f32 %v880, 0.0
  %v901 = vmax.f32 %v883, 0.0
  %v902 = vmul.f32 %v886, %v886
  %v903 = vmul.f32 %v887, %v887
  %v904 = vmul.f32 %v888, %v888
  %v905 = vmul.f32 %v889, %v889
  %v906 = vmul.f32 %v890, %v890
  %v907 = vmul.f32 %v891, %v891
  %v908 = vmul.f32 %v892, %v892
  %v909 = vmul.f32 %v893, %v893
  %v910 = vmul.f32 %v894, %v894
  %v911 = vmul.f32 %v895, %v895
  %v912 = vmul.f32 %v896, %v896
  %v913 = vmul.f32 %v897, %v897
  %v914 = vmul.f32 %v898, %v898
  %v915 = vmul.f32 %v899, %v899
  %v916 = vmul.f32 %v900, %v900
  %v917 = vmul.f32 %v901, %v901
  %934 = vrot.lane.b32.xlu0 %v902, 16
  %v935 = vpop.permute.xlu0 %934
  %936 = vrot.lane.b32.xlu0 %v903, 16
  %v937 = vpop.permute.xlu0 %936
  %938 = vrot.lane.b32.xlu0 %v904, 16
  %v939 = vpop.permute.xlu0 %938
  %940 = vrot.lane.b32.xlu0 %v905, 16
  %v941 = vpop.permute.xlu0 %940
  %942 = vrot.lane.b32.xlu0 %v906, 16
  %v943 = vpop.permute.xlu0 %942
  %944 = vrot.lane.b32.xlu0 %v907, 16
  %v945 = vpop.permute.xlu0 %944
  %946 = vrot.lane.b32.xlu0 %v908, 16
  %v947 = vpop.permute.xlu0 %946
  %948 = vrot.lane.b32.xlu0 %v909, 16
  %v949 = vpop.permute.xlu0 %948
  %950 = vrot.lane.b32.xlu0 %v910, 16
  %v951 = vpop.permute.xlu0 %950
  %952 = vrot.lane.b32.xlu0 %v911, 16
  %v953 = vpop.permute.xlu0 %952
  %954 = vrot.lane.b32.xlu0 %v912, 16
  %v955 = vpop.permute.xlu0 %954
  %956 = vrot.lane.b32.xlu0 %v913, 16
  %v957 = vpop.permute.xlu0 %956
  %958 = vrot.lane.b32.xlu0 %v914, 16
  %v959 = vpop.permute.xlu0 %958
  %960 = vrot.lane.b32.xlu0 %v915, 16
  %v961 = vpop.permute.xlu0 %960
  %962 = vrot.lane.b32.xlu0 %v916, 16
  %v963 = vpop.permute.xlu0 %962
  %964 = vrot.lane.b32.xlu0 %v917, 16
  %v965 = vpop.permute.xlu0 %964
  %v982 = vsel %vm274, %v886, %v935
  %v983 = vsel %vm274, %v887, %v937
  %v984 = vsel %vm274, %v888, %v939
  %v985 = vsel %vm274, %v889, %v941
  %v986 = vsel %vm274, %v890, %v943
  %v987 = vsel %vm274, %v891, %v945
  %v988 = vsel %vm274, %v892, %v947
  %v989 = vsel %vm274, %v893, %v949
  %v990 = vsel %vm274, %v894, %v951
  %v991 = vsel %vm274, %v895, %v953
  %v992 = vsel %vm274, %v896, %v955
  %v993 = vsel %vm274, %v897, %v957
  %v994 = vsel %vm274, %v898, %v959
  %v995 = vsel %vm274, %v899, %v961
  %v996 = vsel %vm274, %v900, %v963
  %v997 = vsel %vm274, %v901, %v965
  %v998 = vsel %vm72, %v982, 0.0
  %v999 = vsel %vm72, %v983, 0.0
  %v1000 = vadd.f32 %v998, %v999
  %v1001 = vsel %vm72, %v984, 0.0
  %v1002 = vadd.f32 %v1000, %v1001
  %v1003 = vsel %vm72, %v985, 0.0
  %v1004 = vadd.f32 %v1002, %v1003
  %v1005 = vsel %vm72, %v986, 0.0
  %v1006 = vadd.f32 %v1004, %v1005
  %v1007 = vsel %vm72, %v987, 0.0
  %v1008 = vadd.f32 %v1006, %v1007
  %v1009 = vsel %vm72, %v988, 0.0
  %v1010 = vadd.f32 %v1008, %v1009
  %v1011 = vsel %vm72, %v989, 0.0
  %v1012 = vadd.f32 %v1010, %v1011
  %v1013 = vsel %vm72, %v990, 0.0
  %v1014 = vadd.f32 %v1012, %v1013
  %v1015 = vsel %vm72, %v991, 0.0
  %v1016 = vadd.f32 %v1014, %v1015
  %v1017 = vsel %vm72, %v992, 0.0
  %v1018 = vadd.f32 %v1016, %v1017
  %v1019 = vsel %vm72, %v993, 0.0
  %v1020 = vadd.f32 %v1018, %v1019
  %v1021 = vsel %vm72, %v994, 0.0
  %v1022 = vadd.f32 %v1020, %v1021
  %v1023 = vsel %vm72, %v995, 0.0
  %v1024 = vadd.f32 %v1022, %v1023
  %v1025 = vsel %vm72, %v996, 0.0
  %v1026 = vadd.f32 %v1024, %v1025
  %v1027 = vsel %vm72, %v997, 0.0
  %v1028 = vadd.f32 %v1026, %v1027
  %v1029 = vrot.slane %v1028, 4
  %v1030 = vadd.f32 %v1028, %v1029
  %v1031 = vrot.slane %v1030, 2
  %v1032 = vadd.f32 %v1030, %v1031
  %v1033 = vrot.slane %v1032, 1
  %v1034 = vadd.f32 %v1032, %v1033
  %v1035 = vmul.f32 %v1034, %v328
  %v1036 = vmul.f32 %v1035, %v1035
  %1038 = vrot.lane.b32.xlu0 %v1036, 16
  %v1039 = vpop.permute.xlu0 %1038
  %v1041 = vsub.f32 %v1035, %v1039
  %v1042 = vmax.f32 %v1041, 0.0
  %v1043 = vadd.f32 %v1042, 1e-05
  %v1044 = vrsqrt.pop %v1043
  %v1046 = vrot.slane %v1044, 7
  %1047 = vrot.lane.b32.xlu0 %v1046, 112
  %v1048 = vpop.permute.xlu0 %1047
  %v1050 = vmul.f32 %v25, %v1048
  %v1051 = vmul.f32 %v1035, %v1050
  %v1053 = vrot.slane %v1051, 2
  %v1055 = vsub.f32 %v25, %v1053
  %v1056 = vlaneseq
  %v1057 = vshrl.u32 %v1056, 7
  %v1058 = vsub.s32 1, %v1057
  %v1059 = vrot.slane %v1050, %v1058
  %v1060 = vmul.f32 %v886, %v1059
  %v1061 = vmul.f32 %v887, %v1059
  %v1062 = vmul.f32 %v888, %v1059
  %v1063 = vmul.f32 %v889, %v1059
  %v1064 = vmul.f32 %v890, %v1059
  %v1065 = vmul.f32 %v891, %v1059
  %v1066 = vmul.f32 %v892, %v1059
  %v1067 = vmul.f32 %v893, %v1059
  %v1068 = vmul.f32 %v894, %v1059
  %v1069 = vmul.f32 %v895, %v1059
  %v1070 = vmul.f32 %v896, %v1059
  %v1071 = vmul.f32 %v897, %v1059
  %v1072 = vmul.f32 %v898, %v1059
  %v1073 = vmul.f32 %v899, %v1059
  %v1074 = vmul.f32 %v900, %v1059
  %v1075 = vmul.f32 %v901, %v1059
  %v1076 = vlaneseq
  %v1077 = vshrl.u32 %v1076, 7
  %v1078 = vsub.s32 7, %v1077
  %v1079 = vrot.slane %v1055, %v1078
  %v1080 = vadd.f32 %v1060, %v1079
  %v1081 = vadd.f32 %v1061, %v1079
  %v1082 = vadd.f32 %v1062, %v1079
  %v1083 = vadd.f32 %v1063, %v1079
  %v1084 = vadd.f32 %v1064, %v1079
  %v1085 = vadd.f32 %v1065, %v1079
  %v1086 = vadd.f32 %v1066, %v1079
  %v1087 = vadd.f32 %v1067, %v1079
  %v1088 = vadd.f32 %v1068, %v1079
  %v1089 = vadd.f32 %v1069, %v1079
  %v1090 = vadd.f32 %v1070, %v1079
  %v1091 = vadd.f32 %v1071, %v1079
  %v1092 = vadd.f32 %v1072, %v1079
  %v1093 = vadd.f32 %v1073, %v1079
  %v1094 = vadd.f32 %v1074, %v1079
  %v1095 = vadd.f32 %v1075, %v1079
  %v1096 = vadd.f32 %v1080, %v390
  %v1097 = vadd.f32 %v1081, %v391
  %v1098 = vadd.f32 %v1082, %v392
  %v1099 = vadd.f32 %v1083, %v393
  %v1100 = vadd.f32 %v1084, %v394
  %v1101 = vadd.f32 %v1085, %v395
  %v1102 = vadd.f32 %v1086, %v396
  %v1103 = vadd.f32 %v1087, %v397
  %v1104 = vadd.f32 %v1088, %v398
  %v1105 = vadd.f32 %v1089, %v399
  %v1106 = vadd.f32 %v1090, %v400
  %v1107 = vadd.f32 %v1091, %v401
  %v1108 = vadd.f32 %v1092, %v402
  %v1109 = vadd.f32 %v1093, %v403
  %v1110 = vadd.f32 %v1094, %v404
  %v1111 = vadd.f32 %v1095, %v405
  %v1112 = vmax.f32 %v1096, 0.0
  %v1113 = vmax.f32 %v1097, 0.0
  %v1114 = vmax.f32 %v1098, 0.0
  %v1115 = vmax.f32 %v1099, 0.0
  %v1116 = vmax.f32 %v1100, 0.0
  %v1117 = vmax.f32 %v1101, 0.0
  %v1118 = vmax.f32 %v1102, 0.0
  %v1119 = vmax.f32 %v1103, 0.0
  %v1120 = vmax.f32 %v1104, 0.0
  %v1121 = vmax.f32 %v1105, 0.0
  %v1122 = vmax.f32 %v1106, 0.0
  %v1123 = vmax.f32 %v1107, 0.0
  %v1124 = vmax.f32 %v1108, 0.0
  %v1125 = vmax.f32 %v1109, 0.0
  %v1126 = vmax.f32 %v1110, 0.0
  %v1127 = vmax.f32 %v1111, 0.0
  %s1128 = scalar_lea.vmem %s2, 8
  %v1129 = vld [vmem:[%s1128] sm:$0xf]
  %v1130 = vld [vmem:[%s1128 + $0x4] sm:$0xf]
  %v1131 = vpack.c.bf16 %v1113, %v1112
  %v1132 = vpack.c.bf16 %v1115, %v1114
  %v1133 = vpack.c.bf16 %v1117, %v1116
  %v1134 = vpack.c.bf16 %v1119, %v1118
  %v1135 = vpack.c.bf16 %v1121, %v1120
  %v1136 = vpack.c.bf16 %v1123, %v1122
  %v1137 = vpack.c.bf16 %v1125, %v1124
  %v1138 = vpack.c.bf16 %v1127, %v1126
  %v1139 = vlaneseq
  %v1140 = vshrl.u32 %v1139, 7
  %v1141 = vsub.s32 4, %v1140
  %v1142 = vrot.slane %v24, %v1141
  %v1145 = vunpack.c.l.b16 %v1129
  %v1146 = vunpack.c.l.b16 %v1130
  %v1147 = vpack.c.b16 %v1146, %v1145
  %v1150 = vsel %vm274, %v1131, 0
  %v1153 = vsel %vm274, %v1132, 0
  %v1156 = vsel %vm274, %v1133, 0
  %v1159 = vsel %vm274, %v1134, 0
  %v1162 = vsel %vm274, %v1135, 0
  %v1165 = vsel %vm274, %v1136, 0
  %v1168 = vsel %vm274, %v1137, 0
  %v1171 = vsel %vm274, %v1138, 0
  %1173 = vmatprep.subr.bf16.mxu0 0
  %1174 = vmatpush1.bf16.msra.mxu0 %v1147
  %1175 = vmatprep.subr.bf16.mxu0 0
  %1176 = vmatpush1.bf16.msra.mxu0 0
  %1177 = vmatprep.subr.bf16.mxu0 0
  %1178 = vmatpush1.bf16.msra.mxu0 0
  %1179 = vmatprep.subr.bf16.mxu0 0
  %1180 = vmatpush1.bf16.msra.mxu0 0
  %1181 = vmatprep.subr.bf16.mxu0 0
  %1182 = vmatpush1.bf16.msra.mxu0 0
  %1183 = vmatprep.subr.bf16.mxu0 0
  %1184 = vmatpush1.bf16.msra.mxu0 0
  %1185 = vmatprep.subr.bf16.mxu0 0
  %1186 = vmatpush1.bf16.msra.mxu0 0
  %1187 = vmatprep.subr.bf16.mxu0 0
  %1188 = vmatpush1.bf16.msra.mxu0 0
  %1189 = vmatprep.subr.bf16.mxu0 0
  %1190 = vmatpush1.bf16.msra.mxu0 0
  %1191 = vmatprep.subr.bf16.mxu0 0
  %1192 = vmatpush1.bf16.msra.mxu0 0
  %1193 = vmatprep.subr.bf16.mxu0 0
  %1194 = vmatpush1.bf16.msra.mxu0 0
  %1195 = vmatprep.subr.bf16.mxu0 0
  %1196 = vmatpush1.bf16.msra.mxu0 0
  %1197 = vmatprep.subr.bf16.mxu0 0
  %1198 = vmatpush1.bf16.msra.mxu0 0
  %1199 = vmatprep.subr.bf16.mxu0 0
  %1200 = vmatpush1.bf16.msra.mxu0 0
  %1201 = vmatprep.subr.bf16.mxu0 0
  %1202 = vmatpush1.bf16.msra.mxu0 0
  %1203 = vmatprep.subr.bf16.mxu0 0
  %1204 = vmatpush1.bf16.msra.mxu0 0
  %1205 = vmatprep.mubr.bf16.mxu0 0
  %1206 = vmatmul.mubr.bf16.gmra.mrb[0].mxu0 %v1150
  %v1207 = vpop.f32.mrb[0].mxu0
  %v1208 = vadd.f32 %v1142, %v1207
  %v1209 = vpop.f32.mrb[0].mxu0
  %v1210 = vpop.f32.mrb[0].mxu0
  %v1211 = vadd.f32 %v1142, %v1210
  %v1212 = vpop.f32.mrb[0].mxu0
  %1213 = vmatprep.mubr.bf16.mxu0 0
  %1214 = vmatmul.mubr.bf16.gmra.mrb[0].mxu0 %v1153
  %v1215 = vpop.f32.mrb[0].mxu0
  %v1216 = vadd.f32 %v1142, %v1215
  %v1217 = vpop.f32.mrb[0].mxu0
  %v1218 = vpop.f32.mrb[0].mxu0
  %v1219 = vadd.f32 %v1142, %v1218
  %v1220 = vpop.f32.mrb[0].mxu0
  %1221 = vmatprep.mubr.bf16.mxu0 0
  %1222 = vmatmul.mubr.bf16.gmra.mrb[0].mxu0 %v1156
  %v1223 = vpop.f32.mrb[0].mxu0
  %v1224 = vadd.f32 %v1142, %v1223
  %v1225 = vpop.f32.mrb[0].mxu0
  %v1226 = vpop.f32.mrb[0].mxu0
  %v1227 = vadd.f32 %v1142, %v1226
  %v1228 = vpop.f32.mrb[0].mxu0
  %1229 = vmatprep.mubr.bf16.mxu0 0
  %1230 = vmatmul.mubr.bf16.gmra.mrb[0].mxu0 %v1159
  %v1231 = vpop.f32.mrb[0].mxu0
  %v1232 = vadd.f32 %v1142, %v1231
  %v1233 = vpop.f32.mrb[0].mxu0
  %v1234 = vpop.f32.mrb[0].mxu0
  %v1235 = vadd.f32 %v1142, %v1234
  %v1236 = vpop.f32.mrb[0].mxu0
  %1237 = vmatprep.mubr.bf16.mxu0 0
  %1238 = vmatmul.mubr.bf16.gmra.mrb[0].mxu0 %v1162
  %v1239 = vpop.f32.mrb[0].mxu0
  %v1240 = vadd.f32 %v1142, %v1239
  %v1241 = vpop.f32.mrb[0].mxu0
  %v1242 = vpop.f32.mrb[0].mxu0
  %v1243 = vadd.f32 %v1142, %v1242
  %v1244 = vpop.f32.mrb[0].mxu0
  %1245 = vmatprep.mubr.bf16.mxu0 0
  %1246 = vmatmul.mubr.bf16.gmra.mrb[0].mxu0 %v1165
  %v1247 = vpop.f32.mrb[0].mxu0
  %v1248 = vadd.f32 %v1142, %v1247
  %v1249 = vpop.f32.mrb[0].mxu0
  %v1250 = vpop.f32.mrb[0].mxu0
  %v1251 = vadd.f32 %v1142, %v1250
  %v1252 = vpop.f32.mrb[0].mxu0
  %1253 = vmatprep.mubr.bf16.mxu0 0
  %1254 = vmatmul.mubr.bf16.gmra.mrb[0].mxu0 %v1168
  %v1255 = vpop.f32.mrb[0].mxu0
  %v1256 = vadd.f32 %v1142, %v1255
  %v1257 = vpop.f32.mrb[0].mxu0
  %v1258 = vpop.f32.mrb[0].mxu0
  %v1259 = vadd.f32 %v1142, %v1258
  %v1260 = vpop.f32.mrb[0].mxu0
  %1261 = vmatprep.mubr.bf16.mxu0 0
  %1262 = vmatmul.mubr.bf16.gmra.mrb[0].mxu0 %v1171
  %v1263 = vpop.f32.mrb[0].mxu0
  %v1264 = vadd.f32 %v1142, %v1263
  %v1265 = vpop.f32.mrb[0].mxu0
  %v1266 = vpop.f32.mrb[0].mxu0
  %v1267 = vadd.f32 %v1142, %v1266
  %v1268 = vpop.f32.mrb[0].mxu0
  %1269 = vdwg.mxu0
  %v1270 = vmul.f32 %v1208, %v1208
  %v1271 = vmul.f32 %v1211, %v1211
  %v1272 = vmul.f32 %v1216, %v1216
  %v1273 = vmul.f32 %v1219, %v1219
  %v1274 = vmul.f32 %v1224, %v1224
  %v1275 = vmul.f32 %v1227, %v1227
  %v1276 = vmul.f32 %v1232, %v1232
  %v1277 = vmul.f32 %v1235, %v1235
  %v1278 = vmul.f32 %v1240, %v1240
  %v1279 = vmul.f32 %v1243, %v1243
  %v1280 = vmul.f32 %v1248, %v1248
  %v1281 = vmul.f32 %v1251, %v1251
  %v1282 = vmul.f32 %v1256, %v1256
  %v1283 = vmul.f32 %v1259, %v1259
  %v1284 = vmul.f32 %v1264, %v1264
  %v1285 = vmul.f32 %v1267, %v1267
  %1302 = vrot.lane.b32.xlu0 %v1270, 16
  %v1303 = vpop.permute.xlu0 %1302
  %1304 = vrot.lane.b32.xlu0 %v1271, 16
  %v1305 = vpop.permute.xlu0 %1304
  %1306 = vrot.lane.b32.xlu0 %v1272, 16
  %v1307 = vpop.permute.xlu0 %1306
  %1308 = vrot.lane.b32.xlu0 %v1273, 16
  %v1309 = vpop.permute.xlu0 %1308
  %1310 = vrot.lane.b32.xlu0 %v1274, 16
  %v1311 = vpop.permute.xlu0 %1310
  %1312 = vrot.lane.b32.xlu0 %v1275, 16
  %v1313 = vpop.permute.xlu0 %1312
  %1314 = vrot.lane.b32.xlu0 %v1276, 16
  %v1315 = vpop.permute.xlu0 %1314
  %1316 = vrot.lane.b32.xlu0 %v1277, 16
  %v1317 = vpop.permute.xlu0 %1316
  %1318 = vrot.lane.b32.xlu0 %v1278, 16
  %v1319 = vpop.permute.xlu0 %1318
  %1320 = vrot.lane.b32.xlu0 %v1279, 16
  %v1321 = vpop.permute.xlu0 %1320
  %1322 = vrot.lane.b32.xlu0 %v1280, 16
  %v1323 = vpop.permute.xlu0 %1322
  %1324 = vrot.lane.b32.xlu0 %v1281, 16
  %v1325 = vpop.permute.xlu0 %1324
  %1326 = vrot.lane.b32.xlu0 %v1282, 16
  %v1327 = vpop.permute.xlu0 %1326
  %1328 = vrot.lane.b32.xlu0 %v1283, 16
  %v1329 = vpop.permute.xlu0 %1328
  %1330 = vrot.lane.b32.xlu0 %v1284, 16
  %v1331 = vpop.permute.xlu0 %1330
  %1332 = vrot.lane.b32.xlu0 %v1285, 16
  %v1333 = vpop.permute.xlu0 %1332
  %v1350 = vsel %vm274, %v1208, %v1303
  %v1351 = vsel %vm274, %v1211, %v1305
  %v1352 = vsel %vm274, %v1216, %v1307
  %v1353 = vsel %vm274, %v1219, %v1309
  %v1354 = vsel %vm274, %v1224, %v1311
  %v1355 = vsel %vm274, %v1227, %v1313
  %v1356 = vsel %vm274, %v1232, %v1315
  %v1357 = vsel %vm274, %v1235, %v1317
  %v1358 = vsel %vm274, %v1240, %v1319
  %v1359 = vsel %vm274, %v1243, %v1321
  %v1360 = vsel %vm274, %v1248, %v1323
  %v1361 = vsel %vm274, %v1251, %v1325
  %v1362 = vsel %vm274, %v1256, %v1327
  %v1363 = vsel %vm274, %v1259, %v1329
  %v1364 = vsel %vm274, %v1264, %v1331
  %v1365 = vsel %vm274, %v1267, %v1333
  %v1366 = vsel %vm72, %v1350, 0.0
  %v1367 = vsel %vm72, %v1351, 0.0
  %v1368 = vadd.f32 %v1366, %v1367
  %v1369 = vsel %vm72, %v1352, 0.0
  %v1370 = vadd.f32 %v1368, %v1369
  %v1371 = vsel %vm72, %v1353, 0.0
  %v1372 = vadd.f32 %v1370, %v1371
  %v1373 = vsel %vm72, %v1354, 0.0
  %v1374 = vadd.f32 %v1372, %v1373
  %v1375 = vsel %vm72, %v1355, 0.0
  %v1376 = vadd.f32 %v1374, %v1375
  %v1377 = vsel %vm72, %v1356, 0.0
  %v1378 = vadd.f32 %v1376, %v1377
  %v1379 = vsel %vm72, %v1357, 0.0
  %v1380 = vadd.f32 %v1378, %v1379
  %v1381 = vsel %vm72, %v1358, 0.0
  %v1382 = vadd.f32 %v1380, %v1381
  %v1383 = vsel %vm72, %v1359, 0.0
  %v1384 = vadd.f32 %v1382, %v1383
  %v1385 = vsel %vm72, %v1360, 0.0
  %v1386 = vadd.f32 %v1384, %v1385
  %v1387 = vsel %vm72, %v1361, 0.0
  %v1388 = vadd.f32 %v1386, %v1387
  %v1389 = vsel %vm72, %v1362, 0.0
  %v1390 = vadd.f32 %v1388, %v1389
  %v1391 = vsel %vm72, %v1363, 0.0
  %v1392 = vadd.f32 %v1390, %v1391
  %v1393 = vsel %vm72, %v1364, 0.0
  %v1394 = vadd.f32 %v1392, %v1393
  %v1395 = vsel %vm72, %v1365, 0.0
  %v1396 = vadd.f32 %v1394, %v1395
  %v1397 = vrot.slane %v1396, 4
  %v1398 = vadd.f32 %v1396, %v1397
  %v1399 = vrot.slane %v1398, 2
  %v1400 = vadd.f32 %v1398, %v1399
  %v1401 = vrot.slane %v1400, 1
  %v1402 = vadd.f32 %v1400, %v1401
  %v1403 = vmul.f32 %v1402, %v328
  %v1404 = vmul.f32 %v1403, %v1403
  %1406 = vrot.lane.b32.xlu0 %v1404, 16
  %v1407 = vpop.permute.xlu0 %1406
  %v1409 = vsub.f32 %v1403, %v1407
  %v1410 = vmax.f32 %v1409, 0.0
  %v1411 = vadd.f32 %v1410, 1e-05
  %v1412 = vrsqrt.pop %v1411
  %v1414 = vrot.slane %v1412, 6
  %1415 = vrot.lane.b32.xlu0 %v1414, 112
  %v1416 = vpop.permute.xlu0 %1415
  %v1418 = vmul.f32 %v25, %v1416
  %v1419 = vmul.f32 %v1403, %v1418
  %v1421 = vrot.slane %v1419, 2
  %v1423 = vsub.f32 %v26, %v1421
  %v1424 = vlaneseq
  %v1425 = vshrl.u32 %v1424, 7
  %v1426 = vsub.s32 2, %v1425
  %v1427 = vrot.slane %v1418, %v1426
  %v1428 = vmul.f32 %v1208, %v1427
  %v1429 = vmul.f32 %v1211, %v1427
  %v1430 = vmul.f32 %v1216, %v1427
  %v1431 = vmul.f32 %v1219, %v1427
  %v1432 = vmul.f32 %v1224, %v1427
  %v1433 = vmul.f32 %v1227, %v1427
  %v1434 = vmul.f32 %v1232, %v1427
  %v1435 = vmul.f32 %v1235, %v1427
  %v1436 = vmul.f32 %v1240, %v1427
  %v1437 = vmul.f32 %v1243, %v1427
  %v1438 = vmul.f32 %v1248, %v1427
  %v1439 = vmul.f32 %v1251, %v1427
  %v1440 = vmul.f32 %v1256, %v1427
  %v1441 = vmul.f32 %v1259, %v1427
  %v1442 = vmul.f32 %v1264, %v1427
  %v1443 = vmul.f32 %v1267, %v1427
  %v1444 = vlaneseq
  %v1445 = vshrl.u32 %v1444, 7
  %v1446 = vsub.s32 0, %v1445
  %v1447 = vrot.slane %v1423, %v1446
  %v1448 = vadd.f32 %v1428, %v1447
  %v1449 = vadd.f32 %v1429, %v1447
  %v1450 = vadd.f32 %v1430, %v1447
  %v1451 = vadd.f32 %v1431, %v1447
  %v1452 = vadd.f32 %v1432, %v1447
  %v1453 = vadd.f32 %v1433, %v1447
  %v1454 = vadd.f32 %v1434, %v1447
  %v1455 = vadd.f32 %v1435, %v1447
  %v1456 = vadd.f32 %v1436, %v1447
  %v1457 = vadd.f32 %v1437, %v1447
  %v1458 = vadd.f32 %v1438, %v1447
  %v1459 = vadd.f32 %v1439, %v1447
  %v1460 = vadd.f32 %v1440, %v1447
  %v1461 = vadd.f32 %v1441, %v1447
  %v1462 = vadd.f32 %v1442, %v1447
  %v1463 = vadd.f32 %v1443, %v1447
  %v1464 = vmax.f32 %v1448, 0.0
  %v1465 = vmax.f32 %v1449, 0.0
  %v1466 = vmax.f32 %v1450, 0.0
  %v1467 = vmax.f32 %v1451, 0.0
  %v1468 = vmax.f32 %v1452, 0.0
  %v1469 = vmax.f32 %v1453, 0.0
  %v1470 = vmax.f32 %v1454, 0.0
  %v1471 = vmax.f32 %v1455, 0.0
  %v1472 = vmax.f32 %v1456, 0.0
  %v1473 = vmax.f32 %v1457, 0.0
  %v1474 = vmax.f32 %v1458, 0.0
  %v1475 = vmax.f32 %v1459, 0.0
  %v1476 = vmax.f32 %v1460, 0.0
  %v1477 = vmax.f32 %v1461, 0.0
  %v1478 = vmax.f32 %v1462, 0.0
  %v1479 = vmax.f32 %v1463, 0.0
  %v1480 = vpack.c.bf16 %v1465, %v1464
  %v1481 = vpack.c.bf16 %v1467, %v1466
  %v1482 = vpack.c.bf16 %v1469, %v1468
  %v1483 = vpack.c.bf16 %v1471, %v1470
  %v1484 = vpack.c.bf16 %v1473, %v1472
  %v1485 = vpack.c.bf16 %v1475, %v1474
  %v1486 = vpack.c.bf16 %v1477, %v1476
  %v1487 = vpack.c.bf16 %v1479, %v1478
  %v1489 = vsel %vm274, %v1480, 0
  %v1492 = vsel %vm274, %v1481, 0
  %v1495 = vsel %vm274, %v1482, 0
  %v1498 = vsel %vm274, %v1483, 0
  %v1501 = vsel %vm274, %v1484, 0
  %v1504 = vsel %vm274, %v1485, 0
  %v1507 = vsel %vm274, %v1486, 0
  %v1510 = vsel %vm274, %v1487, 0
  %1512 = vmatprep.subr.bf16.mxu0 0
  %1513 = vmatpush1.bf16.msra.mxu0 %v1147
  %1514 = vmatprep.subr.bf16.mxu0 0
  %1515 = vmatpush1.bf16.msra.mxu0 0
  %1516 = vmatprep.subr.bf16.mxu0 0
  %1517 = vmatpush1.bf16.msra.mxu0 0
  %1518 = vmatprep.subr.bf16.mxu0 0
  %1519 = vmatpush1.bf16.msra.mxu0 0
  %1520 = vmatprep.subr.bf16.mxu0 0
  %1521 = vmatpush1.bf16.msra.mxu0 0
  %1522 = vmatprep.subr.bf16.mxu0 0
  %1523 = vmatpush1.bf16.msra.mxu0 0
  %1524 = vmatprep.subr.bf16.mxu0 0
  %1525 = vmatpush1.bf16.msra.mxu0 0
  %1526 = vmatprep.subr.bf16.mxu0 0
  %1527 = vmatpush1.bf16.msra.mxu0 0
  %1528 = vmatprep.subr.bf16.mxu0 0
  %1529 = vmatpush1.bf16.msra.mxu0 0
  %1530 = vmatprep.subr.bf16.mxu0 0
  %1531 = vmatpush1.bf16.msra.mxu0 0
  %1532 = vmatprep.subr.bf16.mxu0 0
  %1533 = vmatpush1.bf16.msra.mxu0 0
  %1534 = vmatprep.subr.bf16.mxu0 0
  %1535 = vmatpush1.bf16.msra.mxu0 0
  %1536 = vmatprep.subr.bf16.mxu0 0
  %1537 = vmatpush1.bf16.msra.mxu0 0
  %1538 = vmatprep.subr.bf16.mxu0 0
  %1539 = vmatpush1.bf16.msra.mxu0 0
  %1540 = vmatprep.subr.bf16.mxu0 0
  %1541 = vmatpush1.bf16.msra.mxu0 0
  %1542 = vmatprep.subr.bf16.mxu0 0
  %1543 = vmatpush1.bf16.msra.mxu0 0
  %1544 = vmatprep.mubr.bf16.mxu0 0
  %1545 = vmatmul.mubr.bf16.gmra.mrb[0].mxu0 %v1489
  %v1546 = vpop.f32.mrb[0].mxu0
  %v1547 = vadd.f32 %v1142, %v1546
  %v1548 = vpop.f32.mrb[0].mxu0
  %v1549 = vpop.f32.mrb[0].mxu0
  %v1550 = vadd.f32 %v1142, %v1549
  %v1551 = vpop.f32.mrb[0].mxu0
  %1552 = vmatprep.mubr.bf16.mxu0 0
  %1553 = vmatmul.mubr.bf16.gmra.mrb[0].mxu0 %v1492
  %v1554 = vpop.f32.mrb[0].mxu0
  %v1555 = vadd.f32 %v1142, %v1554
  %v1556 = vpop.f32.mrb[0].mxu0
  %v1557 = vpop.f32.mrb[0].mxu0
  %v1558 = vadd.f32 %v1142, %v1557
  %v1559 = vpop.f32.mrb[0].mxu0
  %1560 = vmatprep.mubr.bf16.mxu0 0
  %1561 = vmatmul.mubr.bf16.gmra.mrb[0].mxu0 %v1495
  %v1562 = vpop.f32.mrb[0].mxu0
  %v1563 = vadd.f32 %v1142, %v1562
  %v1564 = vpop.f32.mrb[0].mxu0
  %v1565 = vpop.f32.mrb[0].mxu0
  %v1566 = vadd.f32 %v1142, %v1565
  %v1567 = vpop.f32.mrb[0].mxu0
  %1568 = vmatprep.mubr.bf16.mxu0 0
  %1569 = vmatmul.mubr.bf16.gmra.mrb[0].mxu0 %v1498
  %v1570 = vpop.f32.mrb[0].mxu0
  %v1571 = vadd.f32 %v1142, %v1570
  %v1572 = vpop.f32.mrb[0].mxu0
  %v1573 = vpop.f32.mrb[0].mxu0
  %v1574 = vadd.f32 %v1142, %v1573
  %v1575 = vpop.f32.mrb[0].mxu0
  %1576 = vmatprep.mubr.bf16.mxu0 0
  %1577 = vmatmul.mubr.bf16.gmra.mrb[0].mxu0 %v1501
  %v1578 = vpop.f32.mrb[0].mxu0
  %v1579 = vadd.f32 %v1142, %v1578
  %v1580 = vpop.f32.mrb[0].mxu0
  %v1581 = vpop.f32.mrb[0].mxu0
  %v1582 = vadd.f32 %v1142, %v1581
  %v1583 = vpop.f32.mrb[0].mxu0
  %1584 = vmatprep.mubr.bf16.mxu0 0
  %1585 = vmatmul.mubr.bf16.gmra.mrb[0].mxu0 %v1504
  %v1586 = vpop.f32.mrb[0].mxu0
  %v1587 = vadd.f32 %v1142, %v1586
  %v1588 = vpop.f32.mrb[0].mxu0
  %v1589 = vpop.f32.mrb[0].mxu0
  %v1590 = vadd.f32 %v1142, %v1589
  %v1591 = vpop.f32.mrb[0].mxu0
  %1592 = vmatprep.mubr.bf16.mxu0 0
  %1593 = vmatmul.mubr.bf16.gmra.mrb[0].mxu0 %v1507
  %v1594 = vpop.f32.mrb[0].mxu0
  %v1595 = vadd.f32 %v1142, %v1594
  %v1596 = vpop.f32.mrb[0].mxu0
  %v1597 = vpop.f32.mrb[0].mxu0
  %v1598 = vadd.f32 %v1142, %v1597
  %v1599 = vpop.f32.mrb[0].mxu0
  %1600 = vmatprep.mubr.bf16.mxu0 0
  %1601 = vmatmul.mubr.bf16.gmra.mrb[0].mxu0 %v1510
  %v1602 = vpop.f32.mrb[0].mxu0
  %v1603 = vadd.f32 %v1142, %v1602
  %v1604 = vpop.f32.mrb[0].mxu0
  %v1605 = vpop.f32.mrb[0].mxu0
  %v1606 = vadd.f32 %v1142, %v1605
  %v1607 = vpop.f32.mrb[0].mxu0
  %1608 = vdwg.mxu0
  %v1609 = vmax.f32 %v1547, 0.0
  %v1610 = vmax.f32 %v1550, 0.0
  %v1611 = vmax.f32 %v1555, 0.0
  %v1612 = vmax.f32 %v1558, 0.0
  %v1613 = vmax.f32 %v1563, 0.0
  %v1614 = vmax.f32 %v1566, 0.0
  %v1615 = vmax.f32 %v1571, 0.0
  %v1616 = vmax.f32 %v1574, 0.0
  %v1617 = vmax.f32 %v1579, 0.0
  %v1618 = vmax.f32 %v1582, 0.0
  %v1619 = vmax.f32 %v1587, 0.0
  %v1620 = vmax.f32 %v1590, 0.0
  %v1621 = vmax.f32 %v1595, 0.0
  %v1622 = vmax.f32 %v1598, 0.0
  %v1623 = vmax.f32 %v1603, 0.0
  %v1624 = vmax.f32 %v1606, 0.0
  %v1625 = vmul.f32 %v1609, %v1609
  %v1626 = vmul.f32 %v1610, %v1610
  %v1627 = vmul.f32 %v1611, %v1611
  %v1628 = vmul.f32 %v1612, %v1612
  %v1629 = vmul.f32 %v1613, %v1613
  %v1630 = vmul.f32 %v1614, %v1614
  %v1631 = vmul.f32 %v1615, %v1615
  %v1632 = vmul.f32 %v1616, %v1616
  %v1633 = vmul.f32 %v1617, %v1617
  %v1634 = vmul.f32 %v1618, %v1618
  %v1635 = vmul.f32 %v1619, %v1619
  %v1636 = vmul.f32 %v1620, %v1620
  %v1637 = vmul.f32 %v1621, %v1621
  %v1638 = vmul.f32 %v1622, %v1622
  %v1639 = vmul.f32 %v1623, %v1623
  %v1640 = vmul.f32 %v1624, %v1624
  %1657 = vrot.lane.b32.xlu0 %v1625, 16
  %v1658 = vpop.permute.xlu0 %1657
  %1659 = vrot.lane.b32.xlu0 %v1626, 16
  %v1660 = vpop.permute.xlu0 %1659
  %1661 = vrot.lane.b32.xlu0 %v1627, 16
  %v1662 = vpop.permute.xlu0 %1661
  %1663 = vrot.lane.b32.xlu0 %v1628, 16
  %v1664 = vpop.permute.xlu0 %1663
  %1665 = vrot.lane.b32.xlu0 %v1629, 16
  %v1666 = vpop.permute.xlu0 %1665
  %1667 = vrot.lane.b32.xlu0 %v1630, 16
  %v1668 = vpop.permute.xlu0 %1667
  %1669 = vrot.lane.b32.xlu0 %v1631, 16
  %v1670 = vpop.permute.xlu0 %1669
  %1671 = vrot.lane.b32.xlu0 %v1632, 16
  %v1672 = vpop.permute.xlu0 %1671
  %1673 = vrot.lane.b32.xlu0 %v1633, 16
  %v1674 = vpop.permute.xlu0 %1673
  %1675 = vrot.lane.b32.xlu0 %v1634, 16
  %v1676 = vpop.permute.xlu0 %1675
  %1677 = vrot.lane.b32.xlu0 %v1635, 16
  %v1678 = vpop.permute.xlu0 %1677
  %1679 = vrot.lane.b32.xlu0 %v1636, 16
  %v1680 = vpop.permute.xlu0 %1679
  %1681 = vrot.lane.b32.xlu0 %v1637, 16
  %v1682 = vpop.permute.xlu0 %1681
  %1683 = vrot.lane.b32.xlu0 %v1638, 16
  %v1684 = vpop.permute.xlu0 %1683
  %1685 = vrot.lane.b32.xlu0 %v1639, 16
  %v1686 = vpop.permute.xlu0 %1685
  %1687 = vrot.lane.b32.xlu0 %v1640, 16
  %v1688 = vpop.permute.xlu0 %1687
  %v1705 = vsel %vm274, %v1609, %v1658
  %v1706 = vsel %vm274, %v1610, %v1660
  %v1707 = vsel %vm274, %v1611, %v1662
  %v1708 = vsel %vm274, %v1612, %v1664
  %v1709 = vsel %vm274, %v1613, %v1666
  %v1710 = vsel %vm274, %v1614, %v1668
  %v1711 = vsel %vm274, %v1615, %v1670
  %v1712 = vsel %vm274, %v1616, %v1672
  %v1713 = vsel %vm274, %v1617, %v1674
  %v1714 = vsel %vm274, %v1618, %v1676
  %v1715 = vsel %vm274, %v1619, %v1678
  %v1716 = vsel %vm274, %v1620, %v1680
  %v1717 = vsel %vm274, %v1621, %v1682
  %v1718 = vsel %vm274, %v1622, %v1684
  %v1719 = vsel %vm274, %v1623, %v1686
  %v1720 = vsel %vm274, %v1624, %v1688
  %v1721 = vsel %vm72, %v1705, 0.0
  %v1722 = vsel %vm72, %v1706, 0.0
  %v1723 = vadd.f32 %v1721, %v1722
  %v1724 = vsel %vm72, %v1707, 0.0
  %v1725 = vadd.f32 %v1723, %v1724
  %v1726 = vsel %vm72, %v1708, 0.0
  %v1727 = vadd.f32 %v1725, %v1726
  %v1728 = vsel %vm72, %v1709, 0.0
  %v1729 = vadd.f32 %v1727, %v1728
  %v1730 = vsel %vm72, %v1710, 0.0
  %v1731 = vadd.f32 %v1729, %v1730
  %v1732 = vsel %vm72, %v1711, 0.0
  %v1733 = vadd.f32 %v1731, %v1732
  %v1734 = vsel %vm72, %v1712, 0.0
  %v1735 = vadd.f32 %v1733, %v1734
  %v1736 = vsel %vm72, %v1713, 0.0
  %v1737 = vadd.f32 %v1735, %v1736
  %v1738 = vsel %vm72, %v1714, 0.0
  %v1739 = vadd.f32 %v1737, %v1738
  %v1740 = vsel %vm72, %v1715, 0.0
  %v1741 = vadd.f32 %v1739, %v1740
  %v1742 = vsel %vm72, %v1716, 0.0
  %v1743 = vadd.f32 %v1741, %v1742
  %v1744 = vsel %vm72, %v1717, 0.0
  %v1745 = vadd.f32 %v1743, %v1744
  %v1746 = vsel %vm72, %v1718, 0.0
  %v1747 = vadd.f32 %v1745, %v1746
  %v1748 = vsel %vm72, %v1719, 0.0
  %v1749 = vadd.f32 %v1747, %v1748
  %v1750 = vsel %vm72, %v1720, 0.0
  %v1751 = vadd.f32 %v1749, %v1750
  %v1752 = vrot.slane %v1751, 4
  %v1753 = vadd.f32 %v1751, %v1752
  %v1754 = vrot.slane %v1753, 2
  %v1755 = vadd.f32 %v1753, %v1754
  %v1756 = vrot.slane %v1755, 1
  %v1757 = vadd.f32 %v1755, %v1756
  %v1758 = vmul.f32 %v1757, %v328
  %v1759 = vmul.f32 %v1758, %v1758
  %1761 = vrot.lane.b32.xlu0 %v1759, 16
  %v1762 = vpop.permute.xlu0 %1761
  %v1764 = vsub.f32 %v1758, %v1762
  %v1765 = vmax.f32 %v1764, 0.0
  %v1766 = vadd.f32 %v1765, 1e-05
  %v1767 = vrsqrt.pop %v1766
  %v1769 = vrot.slane %v1767, 6
  %1770 = vrot.lane.b32.xlu0 %v1769, 112
  %v1771 = vpop.permute.xlu0 %1770
  %v1773 = vmul.f32 %v25, %v1771
  %v1774 = vmul.f32 %v1758, %v1773
  %v1776 = vrot.slane %v1774, 2
  %v1778 = vsub.f32 %v26, %v1776
  %v1779 = vlaneseq
  %v1780 = vshrl.u32 %v1779, 7
  %v1781 = vsub.s32 2, %v1780
  %v1782 = vrot.slane %v1773, %v1781
  %v1783 = vmul.f32 %v1609, %v1782
  %v1784 = vmul.f32 %v1610, %v1782
  %v1785 = vmul.f32 %v1611, %v1782
  %v1786 = vmul.f32 %v1612, %v1782
  %v1787 = vmul.f32 %v1613, %v1782
  %v1788 = vmul.f32 %v1614, %v1782
  %v1789 = vmul.f32 %v1615, %v1782
  %v1790 = vmul.f32 %v1616, %v1782
  %v1791 = vmul.f32 %v1617, %v1782
  %v1792 = vmul.f32 %v1618, %v1782
  %v1793 = vmul.f32 %v1619, %v1782
  %v1794 = vmul.f32 %v1620, %v1782
  %v1795 = vmul.f32 %v1621, %v1782
  %v1796 = vmul.f32 %v1622, %v1782
  %v1797 = vmul.f32 %v1623, %v1782
  %v1798 = vmul.f32 %v1624, %v1782
  %v1799 = vlaneseq
  %v1800 = vshrl.u32 %v1799, 7
  %v1801 = vsub.s32 0, %v1800
  %v1802 = vrot.slane %v1778, %v1801
  %v1803 = vadd.f32 %v1783, %v1802
  %v1804 = vadd.f32 %v1784, %v1802
  %v1805 = vadd.f32 %v1785, %v1802
  %v1806 = vadd.f32 %v1786, %v1802
  %v1807 = vadd.f32 %v1787, %v1802
  %v1808 = vadd.f32 %v1788, %v1802
  %v1809 = vadd.f32 %v1789, %v1802
  %v1810 = vadd.f32 %v1790, %v1802
  %v1811 = vadd.f32 %v1791, %v1802
  %v1812 = vadd.f32 %v1792, %v1802
  %v1813 = vadd.f32 %v1793, %v1802
  %v1814 = vadd.f32 %v1794, %v1802
  %v1815 = vadd.f32 %v1795, %v1802
  %v1816 = vadd.f32 %v1796, %v1802
  %v1817 = vadd.f32 %v1797, %v1802
  %v1818 = vadd.f32 %v1798, %v1802
  %v1819 = vadd.f32 %v1803, %v1112
  %v1820 = vadd.f32 %v1804, %v1113
  %v1821 = vadd.f32 %v1805, %v1114
  %v1822 = vadd.f32 %v1806, %v1115
  %v1823 = vadd.f32 %v1807, %v1116
  %v1824 = vadd.f32 %v1808, %v1117
  %v1825 = vadd.f32 %v1809, %v1118
  %v1826 = vadd.f32 %v1810, %v1119
  %v1827 = vadd.f32 %v1811, %v1120
  %v1828 = vadd.f32 %v1812, %v1121
  %v1829 = vadd.f32 %v1813, %v1122
  %v1830 = vadd.f32 %v1814, %v1123
  %v1831 = vadd.f32 %v1815, %v1124
  %v1832 = vadd.f32 %v1816, %v1125
  %v1833 = vadd.f32 %v1817, %v1126
  %v1834 = vadd.f32 %v1818, %v1127
  %v1835 = vmax.f32 %v1819, 0.0
  %v1836 = vmax.f32 %v1820, 0.0
  %v1837 = vmax.f32 %v1821, 0.0
  %v1838 = vmax.f32 %v1822, 0.0
  %v1839 = vmax.f32 %v1823, 0.0
  %v1840 = vmax.f32 %v1824, 0.0
  %v1841 = vmax.f32 %v1825, 0.0
  %v1842 = vmax.f32 %v1826, 0.0
  %v1843 = vmax.f32 %v1827, 0.0
  %v1844 = vmax.f32 %v1828, 0.0
  %v1845 = vmax.f32 %v1829, 0.0
  %v1846 = vmax.f32 %v1830, 0.0
  %v1847 = vmax.f32 %v1831, 0.0
  %v1848 = vmax.f32 %v1832, 0.0
  %v1849 = vmax.f32 %v1833, 0.0
  %v1850 = vmax.f32 %v1834, 0.0
  %s1851 = scalar_lea.vmem %s2, 16
  %v1852 = vld [vmem:[%s1851] sm:$0xf]
  %v1853 = vld [vmem:[%s1851 + $0x4] sm:$0xf]
  %v1854 = vpack.c.bf16 %v1836, %v1835
  %v1855 = vpack.c.bf16 %v1838, %v1837
  %v1856 = vpack.c.bf16 %v1840, %v1839
  %v1857 = vpack.c.bf16 %v1842, %v1841
  %v1858 = vpack.c.bf16 %v1844, %v1843
  %v1859 = vpack.c.bf16 %v1846, %v1845
  %v1860 = vpack.c.bf16 %v1848, %v1847
  %v1861 = vpack.c.bf16 %v1850, %v1849
  %v1862 = vlaneseq
  %v1863 = vshrl.u32 %v1862, 7
  %v1864 = vsub.s32 5, %v1863
  %v1865 = vrot.slane %v24, %v1864
  %v1868 = vunpack.c.l.b16 %v1852
  %v1869 = vunpack.c.l.b16 %v1853
  %v1870 = vpack.c.b16 %v1869, %v1868
  %v1873 = vsel %vm274, %v1854, 0
  %v1876 = vsel %vm274, %v1855, 0
  %v1879 = vsel %vm274, %v1856, 0
  %v1882 = vsel %vm274, %v1857, 0
  %v1885 = vsel %vm274, %v1858, 0
  %v1888 = vsel %vm274, %v1859, 0
  %v1891 = vsel %vm274, %v1860, 0
  %v1894 = vsel %vm274, %v1861, 0
  %1896 = vmatprep.subr.bf16.mxu0 0
  %1897 = vmatpush1.bf16.msra.mxu0 %v1870
  %1898 = vmatprep.subr.bf16.mxu0 0
  %1899 = vmatpush1.bf16.msra.mxu0 0
  %1900 = vmatprep.subr.bf16.mxu0 0
  %1901 = vmatpush1.bf16.msra.mxu0 0
  %1902 = vmatprep.subr.bf16.mxu0 0
  %1903 = vmatpush1.bf16.msra.mxu0 0
  %1904 = vmatprep.subr.bf16.mxu0 0
  %1905 = vmatpush1.bf16.msra.mxu0 0
  %1906 = vmatprep.subr.bf16.mxu0 0
  %1907 = vmatpush1.bf16.msra.mxu0 0
  %1908 = vmatprep.subr.bf16.mxu0 0
  %1909 = vmatpush1.bf16.msra.mxu0 0
  %1910 = vmatprep.subr.bf16.mxu0 0
  %1911 = vmatpush1.bf16.msra.mxu0 0
  %1912 = vmatprep.subr.bf16.mxu0 0
  %1913 = vmatpush1.bf16.msra.mxu0 0
  %1914 = vmatprep.subr.bf16.mxu0 0
  %1915 = vmatpush1.bf16.msra.mxu0 0
  %1916 = vmatprep.subr.bf16.mxu0 0
  %1917 = vmatpush1.bf16.msra.mxu0 0
  %1918 = vmatprep.subr.bf16.mxu0 0
  %1919 = vmatpush1.bf16.msra.mxu0 0
  %1920 = vmatprep.subr.bf16.mxu0 0
  %1921 = vmatpush1.bf16.msra.mxu0 0
  %1922 = vmatprep.subr.bf16.mxu0 0
  %1923 = vmatpush1.bf16.msra.mxu0 0
  %1924 = vmatprep.subr.bf16.mxu0 0
  %1925 = vmatpush1.bf16.msra.mxu0 0
  %1926 = vmatprep.subr.bf16.mxu0 0
  %1927 = vmatpush1.bf16.msra.mxu0 0
  %1928 = vmatprep.mubr.bf16.mxu0 0
  %1929 = vmatmul.mubr.bf16.gmra.mrb[0].mxu0 %v1873
  %v1930 = vpop.f32.mrb[0].mxu0
  %v1931 = vadd.f32 %v1865, %v1930
  %v1932 = vpop.f32.mrb[0].mxu0
  %v1933 = vpop.f32.mrb[0].mxu0
  %v1934 = vadd.f32 %v1865, %v1933
  %v1935 = vpop.f32.mrb[0].mxu0
  %1936 = vmatprep.mubr.bf16.mxu0 0
  %1937 = vmatmul.mubr.bf16.gmra.mrb[0].mxu0 %v1876
  %v1938 = vpop.f32.mrb[0].mxu0
  %v1939 = vadd.f32 %v1865, %v1938
  %v1940 = vpop.f32.mrb[0].mxu0
  %v1941 = vpop.f32.mrb[0].mxu0
  %v1942 = vadd.f32 %v1865, %v1941
  %v1943 = vpop.f32.mrb[0].mxu0
  %1944 = vmatprep.mubr.bf16.mxu0 0
  %1945 = vmatmul.mubr.bf16.gmra.mrb[0].mxu0 %v1879
  %v1946 = vpop.f32.mrb[0].mxu0
  %v1947 = vadd.f32 %v1865, %v1946
  %v1948 = vpop.f32.mrb[0].mxu0
  %v1949 = vpop.f32.mrb[0].mxu0
  %v1950 = vadd.f32 %v1865, %v1949
  %v1951 = vpop.f32.mrb[0].mxu0
  %1952 = vmatprep.mubr.bf16.mxu0 0
  %1953 = vmatmul.mubr.bf16.gmra.mrb[0].mxu0 %v1882
  %v1954 = vpop.f32.mrb[0].mxu0
  %v1955 = vadd.f32 %v1865, %v1954
  %v1956 = vpop.f32.mrb[0].mxu0
  %v1957 = vpop.f32.mrb[0].mxu0
  %v1958 = vadd.f32 %v1865, %v1957
  %v1959 = vpop.f32.mrb[0].mxu0
  %1960 = vmatprep.mubr.bf16.mxu0 0
  %1961 = vmatmul.mubr.bf16.gmra.mrb[0].mxu0 %v1885
  %v1962 = vpop.f32.mrb[0].mxu0
  %v1963 = vadd.f32 %v1865, %v1962
  %v1964 = vpop.f32.mrb[0].mxu0
  %v1965 = vpop.f32.mrb[0].mxu0
  %v1966 = vadd.f32 %v1865, %v1965
  %v1967 = vpop.f32.mrb[0].mxu0
  %1968 = vmatprep.mubr.bf16.mxu0 0
  %1969 = vmatmul.mubr.bf16.gmra.mrb[0].mxu0 %v1888
  %v1970 = vpop.f32.mrb[0].mxu0
  %v1971 = vadd.f32 %v1865, %v1970
  %v1972 = vpop.f32.mrb[0].mxu0
  %v1973 = vpop.f32.mrb[0].mxu0
  %v1974 = vadd.f32 %v1865, %v1973
  %v1975 = vpop.f32.mrb[0].mxu0
  %1976 = vmatprep.mubr.bf16.mxu0 0
  %1977 = vmatmul.mubr.bf16.gmra.mrb[0].mxu0 %v1891
  %v1978 = vpop.f32.mrb[0].mxu0
  %v1979 = vadd.f32 %v1865, %v1978
  %v1980 = vpop.f32.mrb[0].mxu0
  %v1981 = vpop.f32.mrb[0].mxu0
  %v1982 = vadd.f32 %v1865, %v1981
  %v1983 = vpop.f32.mrb[0].mxu0
  %1984 = vmatprep.mubr.bf16.mxu0 0
  %1985 = vmatmul.mubr.bf16.gmra.mrb[0].mxu0 %v1894
  %v1986 = vpop.f32.mrb[0].mxu0
  %v1987 = vadd.f32 %v1865, %v1986
  %v1988 = vpop.f32.mrb[0].mxu0
  %v1989 = vpop.f32.mrb[0].mxu0
  %v1990 = vadd.f32 %v1865, %v1989
  %v1991 = vpop.f32.mrb[0].mxu0
  %1992 = vdwg.mxu0
  %v1993 = vmul.f32 %v1931, %v1931
  %v1994 = vmul.f32 %v1934, %v1934
  %v1995 = vmul.f32 %v1939, %v1939
  %v1996 = vmul.f32 %v1942, %v1942
  %v1997 = vmul.f32 %v1947, %v1947
  %v1998 = vmul.f32 %v1950, %v1950
  %v1999 = vmul.f32 %v1955, %v1955
  %v2000 = vmul.f32 %v1958, %v1958
  %v2001 = vmul.f32 %v1963, %v1963
  %v2002 = vmul.f32 %v1966, %v1966
  %v2003 = vmul.f32 %v1971, %v1971
  %v2004 = vmul.f32 %v1974, %v1974
  %v2005 = vmul.f32 %v1979, %v1979
  %v2006 = vmul.f32 %v1982, %v1982
  %v2007 = vmul.f32 %v1987, %v1987
  %v2008 = vmul.f32 %v1990, %v1990
  %2025 = vrot.lane.b32.xlu0 %v1993, 16
  %v2026 = vpop.permute.xlu0 %2025
  %2027 = vrot.lane.b32.xlu0 %v1994, 16
  %v2028 = vpop.permute.xlu0 %2027
  %2029 = vrot.lane.b32.xlu0 %v1995, 16
  %v2030 = vpop.permute.xlu0 %2029
  %2031 = vrot.lane.b32.xlu0 %v1996, 16
  %v2032 = vpop.permute.xlu0 %2031
  %2033 = vrot.lane.b32.xlu0 %v1997, 16
  %v2034 = vpop.permute.xlu0 %2033
  %2035 = vrot.lane.b32.xlu0 %v1998, 16
  %v2036 = vpop.permute.xlu0 %2035
  %2037 = vrot.lane.b32.xlu0 %v1999, 16
  %v2038 = vpop.permute.xlu0 %2037
  %2039 = vrot.lane.b32.xlu0 %v2000, 16
  %v2040 = vpop.permute.xlu0 %2039
  %2041 = vrot.lane.b32.xlu0 %v2001, 16
  %v2042 = vpop.permute.xlu0 %2041
  %2043 = vrot.lane.b32.xlu0 %v2002, 16
  %v2044 = vpop.permute.xlu0 %2043
  %2045 = vrot.lane.b32.xlu0 %v2003, 16
  %v2046 = vpop.permute.xlu0 %2045
  %2047 = vrot.lane.b32.xlu0 %v2004, 16
  %v2048 = vpop.permute.xlu0 %2047
  %2049 = vrot.lane.b32.xlu0 %v2005, 16
  %v2050 = vpop.permute.xlu0 %2049
  %2051 = vrot.lane.b32.xlu0 %v2006, 16
  %v2052 = vpop.permute.xlu0 %2051
  %2053 = vrot.lane.b32.xlu0 %v2007, 16
  %v2054 = vpop.permute.xlu0 %2053
  %2055 = vrot.lane.b32.xlu0 %v2008, 16
  %v2056 = vpop.permute.xlu0 %2055
  %v2073 = vsel %vm274, %v1931, %v2026
  %v2074 = vsel %vm274, %v1934, %v2028
  %v2075 = vsel %vm274, %v1939, %v2030
  %v2076 = vsel %vm274, %v1942, %v2032
  %v2077 = vsel %vm274, %v1947, %v2034
  %v2078 = vsel %vm274, %v1950, %v2036
  %v2079 = vsel %vm274, %v1955, %v2038
  %v2080 = vsel %vm274, %v1958, %v2040
  %v2081 = vsel %vm274, %v1963, %v2042
  %v2082 = vsel %vm274, %v1966, %v2044
  %v2083 = vsel %vm274, %v1971, %v2046
  %v2084 = vsel %vm274, %v1974, %v2048
  %v2085 = vsel %vm274, %v1979, %v2050
  %v2086 = vsel %vm274, %v1982, %v2052
  %v2087 = vsel %vm274, %v1987, %v2054
  %v2088 = vsel %vm274, %v1990, %v2056
  %v2089 = vsel %vm72, %v2073, 0.0
  %v2090 = vsel %vm72, %v2074, 0.0
  %v2091 = vadd.f32 %v2089, %v2090
  %v2092 = vsel %vm72, %v2075, 0.0
  %v2093 = vadd.f32 %v2091, %v2092
  %v2094 = vsel %vm72, %v2076, 0.0
  %v2095 = vadd.f32 %v2093, %v2094
  %v2096 = vsel %vm72, %v2077, 0.0
  %v2097 = vadd.f32 %v2095, %v2096
  %v2098 = vsel %vm72, %v2078, 0.0
  %v2099 = vadd.f32 %v2097, %v2098
  %v2100 = vsel %vm72, %v2079, 0.0
  %v2101 = vadd.f32 %v2099, %v2100
  %v2102 = vsel %vm72, %v2080, 0.0
  %v2103 = vadd.f32 %v2101, %v2102
  %v2104 = vsel %vm72, %v2081, 0.0
  %v2105 = vadd.f32 %v2103, %v2104
  %v2106 = vsel %vm72, %v2082, 0.0
  %v2107 = vadd.f32 %v2105, %v2106
  %v2108 = vsel %vm72, %v2083, 0.0
  %v2109 = vadd.f32 %v2107, %v2108
  %v2110 = vsel %vm72, %v2084, 0.0
  %v2111 = vadd.f32 %v2109, %v2110
  %v2112 = vsel %vm72, %v2085, 0.0
  %v2113 = vadd.f32 %v2111, %v2112
  %v2114 = vsel %vm72, %v2086, 0.0
  %v2115 = vadd.f32 %v2113, %v2114
  %v2116 = vsel %vm72, %v2087, 0.0
  %v2117 = vadd.f32 %v2115, %v2116
  %v2118 = vsel %vm72, %v2088, 0.0
  %v2119 = vadd.f32 %v2117, %v2118
  %v2120 = vrot.slane %v2119, 4
  %v2121 = vadd.f32 %v2119, %v2120
  %v2122 = vrot.slane %v2121, 2
  %v2123 = vadd.f32 %v2121, %v2122
  %v2124 = vrot.slane %v2123, 1
  %v2125 = vadd.f32 %v2123, %v2124
  %v2126 = vmul.f32 %v2125, %v328
  %v2127 = vmul.f32 %v2126, %v2126
  %2129 = vrot.lane.b32.xlu0 %v2127, 16
  %v2130 = vpop.permute.xlu0 %2129
  %v2132 = vsub.f32 %v2126, %v2130
  %v2133 = vmax.f32 %v2132, 0.0
  %v2134 = vadd.f32 %v2133, 1e-05
  %v2135 = vrsqrt.pop %v2134
  %v2137 = vrot.slane %v2135, 5
  %2138 = vrot.lane.b32.xlu0 %v2137, 112
  %v2139 = vpop.permute.xlu0 %2138
  %v2141 = vmul.f32 %v25, %v2139
  %v2142 = vmul.f32 %v2126, %v2141
  %v2144 = vrot.slane %v2142, 2
  %v2146 = vsub.f32 %v26, %v2144
  %v2147 = vlaneseq
  %v2148 = vshrl.u32 %v2147, 7
  %v2149 = vsub.s32 3, %v2148
  %v2150 = vrot.slane %v2141, %v2149
  %v2151 = vmul.f32 %v1931, %v2150
  %v2152 = vmul.f32 %v1934, %v2150
  %v2153 = vmul.f32 %v1939, %v2150
  %v2154 = vmul.f32 %v1942, %v2150
  %v2155 = vmul.f32 %v1947, %v2150
  %v2156 = vmul.f32 %v1950, %v2150
  %v2157 = vmul.f32 %v1955, %v2150
  %v2158 = vmul.f32 %v1958, %v2150
  %v2159 = vmul.f32 %v1963, %v2150
  %v2160 = vmul.f32 %v1966, %v2150
  %v2161 = vmul.f32 %v1971, %v2150
  %v2162 = vmul.f32 %v1974, %v2150
  %v2163 = vmul.f32 %v1979, %v2150
  %v2164 = vmul.f32 %v1982, %v2150
  %v2165 = vmul.f32 %v1987, %v2150
  %v2166 = vmul.f32 %v1990, %v2150
  %v2167 = vlaneseq
  %v2168 = vshrl.u32 %v2167, 7
  %v2169 = vsub.s32 1, %v2168
  %v2170 = vrot.slane %v2146, %v2169
  %v2171 = vadd.f32 %v2151, %v2170
  %v2172 = vadd.f32 %v2152, %v2170
  %v2173 = vadd.f32 %v2153, %v2170
  %v2174 = vadd.f32 %v2154, %v2170
  %v2175 = vadd.f32 %v2155, %v2170
  %v2176 = vadd.f32 %v2156, %v2170
  %v2177 = vadd.f32 %v2157, %v2170
  %v2178 = vadd.f32 %v2158, %v2170
  %v2179 = vadd.f32 %v2159, %v2170
  %v2180 = vadd.f32 %v2160, %v2170
  %v2181 = vadd.f32 %v2161, %v2170
  %v2182 = vadd.f32 %v2162, %v2170
  %v2183 = vadd.f32 %v2163, %v2170
  %v2184 = vadd.f32 %v2164, %v2170
  %v2185 = vadd.f32 %v2165, %v2170
  %v2186 = vadd.f32 %v2166, %v2170
  %v2187 = vmax.f32 %v2171, 0.0
  %v2188 = vmax.f32 %v2172, 0.0
  %v2189 = vmax.f32 %v2173, 0.0
  %v2190 = vmax.f32 %v2174, 0.0
  %v2191 = vmax.f32 %v2175, 0.0
  %v2192 = vmax.f32 %v2176, 0.0
  %v2193 = vmax.f32 %v2177, 0.0
  %v2194 = vmax.f32 %v2178, 0.0
  %v2195 = vmax.f32 %v2179, 0.0
  %v2196 = vmax.f32 %v2180, 0.0
  %v2197 = vmax.f32 %v2181, 0.0
  %v2198 = vmax.f32 %v2182, 0.0
  %v2199 = vmax.f32 %v2183, 0.0
  %v2200 = vmax.f32 %v2184, 0.0
  %v2201 = vmax.f32 %v2185, 0.0
  %v2202 = vmax.f32 %v2186, 0.0
  %v2203 = vpack.c.bf16 %v2188, %v2187
  %v2204 = vpack.c.bf16 %v2190, %v2189
  %v2205 = vpack.c.bf16 %v2192, %v2191
  %v2206 = vpack.c.bf16 %v2194, %v2193
  %v2207 = vpack.c.bf16 %v2196, %v2195
  %v2208 = vpack.c.bf16 %v2198, %v2197
  %v2209 = vpack.c.bf16 %v2200, %v2199
  %v2210 = vpack.c.bf16 %v2202, %v2201
  %v2212 = vsel %vm274, %v2203, 0
  %v2215 = vsel %vm274, %v2204, 0
  %v2218 = vsel %vm274, %v2205, 0
  %v2221 = vsel %vm274, %v2206, 0
  %v2224 = vsel %vm274, %v2207, 0
  %v2227 = vsel %vm274, %v2208, 0
  %v2230 = vsel %vm274, %v2209, 0
  %v2233 = vsel %vm274, %v2210, 0
  %2235 = vmatprep.subr.bf16.mxu0 0
  %2236 = vmatpush1.bf16.msra.mxu0 %v1870
  %2237 = vmatprep.subr.bf16.mxu0 0
  %2238 = vmatpush1.bf16.msra.mxu0 0
  %2239 = vmatprep.subr.bf16.mxu0 0
  %2240 = vmatpush1.bf16.msra.mxu0 0
  %2241 = vmatprep.subr.bf16.mxu0 0
  %2242 = vmatpush1.bf16.msra.mxu0 0
  %2243 = vmatprep.subr.bf16.mxu0 0
  %2244 = vmatpush1.bf16.msra.mxu0 0
  %2245 = vmatprep.subr.bf16.mxu0 0
  %2246 = vmatpush1.bf16.msra.mxu0 0
  %2247 = vmatprep.subr.bf16.mxu0 0
  %2248 = vmatpush1.bf16.msra.mxu0 0
  %2249 = vmatprep.subr.bf16.mxu0 0
  %2250 = vmatpush1.bf16.msra.mxu0 0
  %2251 = vmatprep.subr.bf16.mxu0 0
  %2252 = vmatpush1.bf16.msra.mxu0 0
  %2253 = vmatprep.subr.bf16.mxu0 0
  %2254 = vmatpush1.bf16.msra.mxu0 0
  %2255 = vmatprep.subr.bf16.mxu0 0
  %2256 = vmatpush1.bf16.msra.mxu0 0
  %2257 = vmatprep.subr.bf16.mxu0 0
  %2258 = vmatpush1.bf16.msra.mxu0 0
  %2259 = vmatprep.subr.bf16.mxu0 0
  %2260 = vmatpush1.bf16.msra.mxu0 0
  %2261 = vmatprep.subr.bf16.mxu0 0
  %2262 = vmatpush1.bf16.msra.mxu0 0
  %2263 = vmatprep.subr.bf16.mxu0 0
  %2264 = vmatpush1.bf16.msra.mxu0 0
  %2265 = vmatprep.subr.bf16.mxu0 0
  %2266 = vmatpush1.bf16.msra.mxu0 0
  %2267 = vmatprep.mubr.bf16.mxu0 0
  %2268 = vmatmul.mubr.bf16.gmra.mrb[0].mxu0 %v2212
  %v2269 = vpop.f32.mrb[0].mxu0
  %v2270 = vadd.f32 %v1865, %v2269
  %v2271 = vpop.f32.mrb[0].mxu0
  %v2272 = vpop.f32.mrb[0].mxu0
  %v2273 = vadd.f32 %v1865, %v2272
  %v2274 = vpop.f32.mrb[0].mxu0
  %2275 = vmatprep.mubr.bf16.mxu0 0
  %2276 = vmatmul.mubr.bf16.gmra.mrb[0].mxu0 %v2215
  %v2277 = vpop.f32.mrb[0].mxu0
  %v2278 = vadd.f32 %v1865, %v2277
  %v2279 = vpop.f32.mrb[0].mxu0
  %v2280 = vpop.f32.mrb[0].mxu0
  %v2281 = vadd.f32 %v1865, %v2280
  %v2282 = vpop.f32.mrb[0].mxu0
  %2283 = vmatprep.mubr.bf16.mxu0 0
  %2284 = vmatmul.mubr.bf16.gmra.mrb[0].mxu0 %v2218
  %v2285 = vpop.f32.mrb[0].mxu0
  %v2286 = vadd.f32 %v1865, %v2285
  %v2287 = vpop.f32.mrb[0].mxu0
  %v2288 = vpop.f32.mrb[0].mxu0
  %v2289 = vadd.f32 %v1865, %v2288
  %v2290 = vpop.f32.mrb[0].mxu0
  %2291 = vmatprep.mubr.bf16.mxu0 0
  %2292 = vmatmul.mubr.bf16.gmra.mrb[0].mxu0 %v2221
  %v2293 = vpop.f32.mrb[0].mxu0
  %v2294 = vadd.f32 %v1865, %v2293
  %v2295 = vpop.f32.mrb[0].mxu0
  %v2296 = vpop.f32.mrb[0].mxu0
  %v2297 = vadd.f32 %v1865, %v2296
  %v2298 = vpop.f32.mrb[0].mxu0
  %2299 = vmatprep.mubr.bf16.mxu0 0
  %2300 = vmatmul.mubr.bf16.gmra.mrb[0].mxu0 %v2224
  %v2301 = vpop.f32.mrb[0].mxu0
  %v2302 = vadd.f32 %v1865, %v2301
  %v2303 = vpop.f32.mrb[0].mxu0
  %v2304 = vpop.f32.mrb[0].mxu0
  %v2305 = vadd.f32 %v1865, %v2304
  %v2306 = vpop.f32.mrb[0].mxu0
  %2307 = vmatprep.mubr.bf16.mxu0 0
  %2308 = vmatmul.mubr.bf16.gmra.mrb[0].mxu0 %v2227
  %v2309 = vpop.f32.mrb[0].mxu0
  %v2310 = vadd.f32 %v1865, %v2309
  %v2311 = vpop.f32.mrb[0].mxu0
  %v2312 = vpop.f32.mrb[0].mxu0
  %v2313 = vadd.f32 %v1865, %v2312
  %v2314 = vpop.f32.mrb[0].mxu0
  %2315 = vmatprep.mubr.bf16.mxu0 0
  %2316 = vmatmul.mubr.bf16.gmra.mrb[0].mxu0 %v2230
  %v2317 = vpop.f32.mrb[0].mxu0
  %v2318 = vadd.f32 %v1865, %v2317
  %v2319 = vpop.f32.mrb[0].mxu0
  %v2320 = vpop.f32.mrb[0].mxu0
  %v2321 = vadd.f32 %v1865, %v2320
  %v2322 = vpop.f32.mrb[0].mxu0
  %2323 = vmatprep.mubr.bf16.mxu0 0
  %2324 = vmatmul.mubr.bf16.gmra.mrb[0].mxu0 %v2233
  %v2325 = vpop.f32.mrb[0].mxu0
  %v2326 = vadd.f32 %v1865, %v2325
  %v2327 = vpop.f32.mrb[0].mxu0
  %v2328 = vpop.f32.mrb[0].mxu0
  %v2329 = vadd.f32 %v1865, %v2328
  %v2330 = vpop.f32.mrb[0].mxu0
  %2331 = vdwg.mxu0
  %v2332 = vmax.f32 %v2270, 0.0
  %v2333 = vmax.f32 %v2273, 0.0
  %v2334 = vmax.f32 %v2278, 0.0
  %v2335 = vmax.f32 %v2281, 0.0
  %v2336 = vmax.f32 %v2286, 0.0
  %v2337 = vmax.f32 %v2289, 0.0
  %v2338 = vmax.f32 %v2294, 0.0
  %v2339 = vmax.f32 %v2297, 0.0
  %v2340 = vmax.f32 %v2302, 0.0
  %v2341 = vmax.f32 %v2305, 0.0
  %v2342 = vmax.f32 %v2310, 0.0
  %v2343 = vmax.f32 %v2313, 0.0
  %v2344 = vmax.f32 %v2318, 0.0
  %v2345 = vmax.f32 %v2321, 0.0
  %v2346 = vmax.f32 %v2326, 0.0
  %v2347 = vmax.f32 %v2329, 0.0
  %v2348 = vmul.f32 %v2332, %v2332
  %v2349 = vmul.f32 %v2333, %v2333
  %v2350 = vmul.f32 %v2334, %v2334
  %v2351 = vmul.f32 %v2335, %v2335
  %v2352 = vmul.f32 %v2336, %v2336
  %v2353 = vmul.f32 %v2337, %v2337
  %v2354 = vmul.f32 %v2338, %v2338
  %v2355 = vmul.f32 %v2339, %v2339
  %v2356 = vmul.f32 %v2340, %v2340
  %v2357 = vmul.f32 %v2341, %v2341
  %v2358 = vmul.f32 %v2342, %v2342
  %v2359 = vmul.f32 %v2343, %v2343
  %v2360 = vmul.f32 %v2344, %v2344
  %v2361 = vmul.f32 %v2345, %v2345
  %v2362 = vmul.f32 %v2346, %v2346
  %v2363 = vmul.f32 %v2347, %v2347
  %2380 = vrot.lane.b32.xlu0 %v2348, 16
  %v2381 = vpop.permute.xlu0 %2380
  %2382 = vrot.lane.b32.xlu0 %v2349, 16
  %v2383 = vpop.permute.xlu0 %2382
  %2384 = vrot.lane.b32.xlu0 %v2350, 16
  %v2385 = vpop.permute.xlu0 %2384
  %2386 = vrot.lane.b32.xlu0 %v2351, 16
  %v2387 = vpop.permute.xlu0 %2386
  %2388 = vrot.lane.b32.xlu0 %v2352, 16
  %v2389 = vpop.permute.xlu0 %2388
  %2390 = vrot.lane.b32.xlu0 %v2353, 16
  %v2391 = vpop.permute.xlu0 %2390
  %2392 = vrot.lane.b32.xlu0 %v2354, 16
  %v2393 = vpop.permute.xlu0 %2392
  %2394 = vrot.lane.b32.xlu0 %v2355, 16
  %v2395 = vpop.permute.xlu0 %2394
  %2396 = vrot.lane.b32.xlu0 %v2356, 16
  %v2397 = vpop.permute.xlu0 %2396
  %2398 = vrot.lane.b32.xlu0 %v2357, 16
  %v2399 = vpop.permute.xlu0 %2398
  %2400 = vrot.lane.b32.xlu0 %v2358, 16
  %v2401 = vpop.permute.xlu0 %2400
  %2402 = vrot.lane.b32.xlu0 %v2359, 16
  %v2403 = vpop.permute.xlu0 %2402
  %2404 = vrot.lane.b32.xlu0 %v2360, 16
  %v2405 = vpop.permute.xlu0 %2404
  %2406 = vrot.lane.b32.xlu0 %v2361, 16
  %v2407 = vpop.permute.xlu0 %2406
  %2408 = vrot.lane.b32.xlu0 %v2362, 16
  %v2409 = vpop.permute.xlu0 %2408
  %2410 = vrot.lane.b32.xlu0 %v2363, 16
  %v2411 = vpop.permute.xlu0 %2410
  %v2428 = vsel %vm274, %v2332, %v2381
  %v2429 = vsel %vm274, %v2333, %v2383
  %v2430 = vsel %vm274, %v2334, %v2385
  %v2431 = vsel %vm274, %v2335, %v2387
  %v2432 = vsel %vm274, %v2336, %v2389
  %v2433 = vsel %vm274, %v2337, %v2391
  %v2434 = vsel %vm274, %v2338, %v2393
  %v2435 = vsel %vm274, %v2339, %v2395
  %v2436 = vsel %vm274, %v2340, %v2397
  %v2437 = vsel %vm274, %v2341, %v2399
  %v2438 = vsel %vm274, %v2342, %v2401
  %v2439 = vsel %vm274, %v2343, %v2403
  %v2440 = vsel %vm274, %v2344, %v2405
  %v2441 = vsel %vm274, %v2345, %v2407
  %v2442 = vsel %vm274, %v2346, %v2409
  %v2443 = vsel %vm274, %v2347, %v2411
  %v2444 = vsel %vm72, %v2428, 0.0
  %v2445 = vsel %vm72, %v2429, 0.0
  %v2446 = vadd.f32 %v2444, %v2445
  %v2447 = vsel %vm72, %v2430, 0.0
  %v2448 = vadd.f32 %v2446, %v2447
  %v2449 = vsel %vm72, %v2431, 0.0
  %v2450 = vadd.f32 %v2448, %v2449
  %v2451 = vsel %vm72, %v2432, 0.0
  %v2452 = vadd.f32 %v2450, %v2451
  %v2453 = vsel %vm72, %v2433, 0.0
  %v2454 = vadd.f32 %v2452, %v2453
  %v2455 = vsel %vm72, %v2434, 0.0
  %v2456 = vadd.f32 %v2454, %v2455
  %v2457 = vsel %vm72, %v2435, 0.0
  %v2458 = vadd.f32 %v2456, %v2457
  %v2459 = vsel %vm72, %v2436, 0.0
  %v2460 = vadd.f32 %v2458, %v2459
  %v2461 = vsel %vm72, %v2437, 0.0
  %v2462 = vadd.f32 %v2460, %v2461
  %v2463 = vsel %vm72, %v2438, 0.0
  %v2464 = vadd.f32 %v2462, %v2463
  %v2465 = vsel %vm72, %v2439, 0.0
  %v2466 = vadd.f32 %v2464, %v2465
  %v2467 = vsel %vm72, %v2440, 0.0
  %v2468 = vadd.f32 %v2466, %v2467
  %v2469 = vsel %vm72, %v2441, 0.0
  %v2470 = vadd.f32 %v2468, %v2469
  %v2471 = vsel %vm72, %v2442, 0.0
  %v2472 = vadd.f32 %v2470, %v2471
  %v2473 = vsel %vm72, %v2443, 0.0
  %v2474 = vadd.f32 %v2472, %v2473
  %v2475 = vrot.slane %v2474, 4
  %v2476 = vadd.f32 %v2474, %v2475
  %v2477 = vrot.slane %v2476, 2
  %v2478 = vadd.f32 %v2476, %v2477
  %v2479 = vrot.slane %v2478, 1
  %v2480 = vadd.f32 %v2478, %v2479
  %v2481 = vmul.f32 %v2480, %v328
  %v2482 = vmul.f32 %v2481, %v2481
  %2484 = vrot.lane.b32.xlu0 %v2482, 16
  %v2485 = vpop.permute.xlu0 %2484
  %v2487 = vsub.f32 %v2481, %v2485
  %v2488 = vmax.f32 %v2487, 0.0
  %v2489 = vadd.f32 %v2488, 1e-05
  %v2490 = vrsqrt.pop %v2489
  %v2492 = vrot.slane %v2490, 5
  %2493 = vrot.lane.b32.xlu0 %v2492, 112
  %v2494 = vpop.permute.xlu0 %2493
  %v2496 = vmul.f32 %v25, %v2494
  %v2497 = vmul.f32 %v2481, %v2496
  %v2499 = vrot.slane %v2497, 2
  %v2501 = vsub.f32 %v26, %v2499
  %v2502 = vlaneseq
  %v2503 = vshrl.u32 %v2502, 7
  %v2504 = vsub.s32 3, %v2503
  %v2505 = vrot.slane %v2496, %v2504
  %v2506 = vmul.f32 %v2332, %v2505
  %v2507 = vmul.f32 %v2333, %v2505
  %v2508 = vmul.f32 %v2334, %v2505
  %v2509 = vmul.f32 %v2335, %v2505
  %v2510 = vmul.f32 %v2336, %v2505
  %v2511 = vmul.f32 %v2337, %v2505
  %v2512 = vmul.f32 %v2338, %v2505
  %v2513 = vmul.f32 %v2339, %v2505
  %v2514 = vmul.f32 %v2340, %v2505
  %v2515 = vmul.f32 %v2341, %v2505
  %v2516 = vmul.f32 %v2342, %v2505
  %v2517 = vmul.f32 %v2343, %v2505
  %v2518 = vmul.f32 %v2344, %v2505
  %v2519 = vmul.f32 %v2345, %v2505
  %v2520 = vmul.f32 %v2346, %v2505
  %v2521 = vmul.f32 %v2347, %v2505
  %v2522 = vlaneseq
  %v2523 = vshrl.u32 %v2522, 7
  %v2524 = vsub.s32 1, %v2523
  %v2525 = vrot.slane %v2501, %v2524
  %v2526 = vadd.f32 %v2506, %v2525
  %v2527 = vadd.f32 %v2507, %v2525
  %v2528 = vadd.f32 %v2508, %v2525
  %v2529 = vadd.f32 %v2509, %v2525
  %v2530 = vadd.f32 %v2510, %v2525
  %v2531 = vadd.f32 %v2511, %v2525
  %v2532 = vadd.f32 %v2512, %v2525
  %v2533 = vadd.f32 %v2513, %v2525
  %v2534 = vadd.f32 %v2514, %v2525
  %v2535 = vadd.f32 %v2515, %v2525
  %v2536 = vadd.f32 %v2516, %v2525
  %v2537 = vadd.f32 %v2517, %v2525
  %v2538 = vadd.f32 %v2518, %v2525
  %v2539 = vadd.f32 %v2519, %v2525
  %v2540 = vadd.f32 %v2520, %v2525
  %v2541 = vadd.f32 %v2521, %v2525
  %s2542 = scalar_lea.vmem %s2, 48
  %v2543 = vld [vmem:[%s2542] sm:$0xf]
  %v2544 = vld [vmem:[%s2542 + $0x4] sm:$0xf]
  %v2545 = vlaneseq
  %v2546 = vshrl.u32 %v2545, 7
  %v2547 = vsub.s32 5, %v2546
  %v2548 = vrot.slane %v26, %v2547
  %v2551 = vunpack.c.l.b16 %v2543
  %v2552 = vunpack.c.l.b16 %v2544
  %v2553 = vpack.c.b16 %v2552, %v2551
  %2555 = vmatprep.subr.bf16.mxu0 0
  %2556 = vmatpush1.bf16.msra.mxu0 %v2553
  %2557 = vmatprep.subr.bf16.mxu0 0
  %2558 = vmatpush1.bf16.msra.mxu0 0
  %2559 = vmatprep.subr.bf16.mxu0 0
  %2560 = vmatpush1.bf16.msra.mxu0 0
  %2561 = vmatprep.subr.bf16.mxu0 0
  %2562 = vmatpush1.bf16.msra.mxu0 0
  %2563 = vmatprep.subr.bf16.mxu0 0
  %2564 = vmatpush1.bf16.msra.mxu0 0
  %2565 = vmatprep.subr.bf16.mxu0 0
  %2566 = vmatpush1.bf16.msra.mxu0 0
  %2567 = vmatprep.subr.bf16.mxu0 0
  %2568 = vmatpush1.bf16.msra.mxu0 0
  %2569 = vmatprep.subr.bf16.mxu0 0
  %2570 = vmatpush1.bf16.msra.mxu0 0
  %2571 = vmatprep.subr.bf16.mxu0 0
  %2572 = vmatpush1.bf16.msra.mxu0 0
  %2573 = vmatprep.subr.bf16.mxu0 0
  %2574 = vmatpush1.bf16.msra.mxu0 0
  %2575 = vmatprep.subr.bf16.mxu0 0
  %2576 = vmatpush1.bf16.msra.mxu0 0
  %2577 = vmatprep.subr.bf16.mxu0 0
  %2578 = vmatpush1.bf16.msra.mxu0 0
  %2579 = vmatprep.subr.bf16.mxu0 0
  %2580 = vmatpush1.bf16.msra.mxu0 0
  %2581 = vmatprep.subr.bf16.mxu0 0
  %2582 = vmatpush1.bf16.msra.mxu0 0
  %2583 = vmatprep.subr.bf16.mxu0 0
  %2584 = vmatpush1.bf16.msra.mxu0 0
  %2585 = vmatprep.subr.bf16.mxu0 0
  %2586 = vmatpush1.bf16.msra.mxu0 0
  %2587 = vmatprep.mubr.bf16.mxu0 0
  %2588 = vmatmul.mubr.bf16.gmra.mrb[0].mxu0 %v1873
  %v2589 = vpop.f32.mrb[0].mxu0
  %v2590 = vadd.f32 %v2548, %v2589
  %v2591 = vpop.f32.mrb[0].mxu0
  %v2592 = vpop.f32.mrb[0].mxu0
  %v2593 = vadd.f32 %v2548, %v2592
  %v2594 = vpop.f32.mrb[0].mxu0
  %2595 = vmatprep.mubr.bf16.mxu0 0
  %2596 = vmatmul.mubr.bf16.gmra.mrb[0].mxu0 %v1876
  %v2597 = vpop.f32.mrb[0].mxu0
  %v2598 = vadd.f32 %v2548, %v2597
  %v2599 = vpop.f32.mrb[0].mxu0
  %v2600 = vpop.f32.mrb[0].mxu0
  %v2601 = vadd.f32 %v2548, %v2600
  %v2602 = vpop.f32.mrb[0].mxu0
  %2603 = vmatprep.mubr.bf16.mxu0 0
  %2604 = vmatmul.mubr.bf16.gmra.mrb[0].mxu0 %v1879
  %v2605 = vpop.f32.mrb[0].mxu0
  %v2606 = vadd.f32 %v2548, %v2605
  %v2607 = vpop.f32.mrb[0].mxu0
  %v2608 = vpop.f32.mrb[0].mxu0
  %v2609 = vadd.f32 %v2548, %v2608
  %v2610 = vpop.f32.mrb[0].mxu0
  %2611 = vmatprep.mubr.bf16.mxu0 0
  %2612 = vmatmul.mubr.bf16.gmra.mrb[0].mxu0 %v1882
  %v2613 = vpop.f32.mrb[0].mxu0
  %v2614 = vadd.f32 %v2548, %v2613
  %v2615 = vpop.f32.mrb[0].mxu0
  %v2616 = vpop.f32.mrb[0].mxu0
  %v2617 = vadd.f32 %v2548, %v2616
  %v2618 = vpop.f32.mrb[0].mxu0
  %2619 = vmatprep.mubr.bf16.mxu0 0
  %2620 = vmatmul.mubr.bf16.gmra.mrb[0].mxu0 %v1885
  %v2621 = vpop.f32.mrb[0].mxu0
  %v2622 = vadd.f32 %v2548, %v2621
  %v2623 = vpop.f32.mrb[0].mxu0
  %v2624 = vpop.f32.mrb[0].mxu0
  %v2625 = vadd.f32 %v2548, %v2624
  %v2626 = vpop.f32.mrb[0].mxu0
  %2627 = vmatprep.mubr.bf16.mxu0 0
  %2628 = vmatmul.mubr.bf16.gmra.mrb[0].mxu0 %v1888
  %v2629 = vpop.f32.mrb[0].mxu0
  %v2630 = vadd.f32 %v2548, %v2629
  %v2631 = vpop.f32.mrb[0].mxu0
  %v2632 = vpop.f32.mrb[0].mxu0
  %v2633 = vadd.f32 %v2548, %v2632
  %v2634 = vpop.f32.mrb[0].mxu0
  %2635 = vmatprep.mubr.bf16.mxu0 0
  %2636 = vmatmul.mubr.bf16.gmra.mrb[0].mxu0 %v1891
  %v2637 = vpop.f32.mrb[0].mxu0
  %v2638 = vadd.f32 %v2548, %v2637
  %v2639 = vpop.f32.mrb[0].mxu0
  %v2640 = vpop.f32.mrb[0].mxu0
  %v2641 = vadd.f32 %v2548, %v2640
  %v2642 = vpop.f32.mrb[0].mxu0
  %2643 = vmatprep.mubr.bf16.mxu0 0
  %2644 = vmatmul.mubr.bf16.gmra.mrb[0].mxu0 %v1894
  %v2645 = vpop.f32.mrb[0].mxu0
  %v2646 = vadd.f32 %v2548, %v2645
  %v2647 = vpop.f32.mrb[0].mxu0
  %v2648 = vpop.f32.mrb[0].mxu0
  %v2649 = vadd.f32 %v2548, %v2648
  %v2650 = vpop.f32.mrb[0].mxu0
  %2651 = vdwg.mxu0
  %v2652 = vmul.f32 %v2590, %v2590
  %v2653 = vmul.f32 %v2593, %v2593
  %v2654 = vmul.f32 %v2598, %v2598
  %v2655 = vmul.f32 %v2601, %v2601
  %v2656 = vmul.f32 %v2606, %v2606
  %v2657 = vmul.f32 %v2609, %v2609
  %v2658 = vmul.f32 %v2614, %v2614
  %v2659 = vmul.f32 %v2617, %v2617
  %v2660 = vmul.f32 %v2622, %v2622
  %v2661 = vmul.f32 %v2625, %v2625
  %v2662 = vmul.f32 %v2630, %v2630
  %v2663 = vmul.f32 %v2633, %v2633
  %v2664 = vmul.f32 %v2638, %v2638
  %v2665 = vmul.f32 %v2641, %v2641
  %v2666 = vmul.f32 %v2646, %v2646
  %v2667 = vmul.f32 %v2649, %v2649
  %2684 = vrot.lane.b32.xlu0 %v2652, 16
  %v2685 = vpop.permute.xlu0 %2684
  %2686 = vrot.lane.b32.xlu0 %v2653, 16
  %v2687 = vpop.permute.xlu0 %2686
  %2688 = vrot.lane.b32.xlu0 %v2654, 16
  %v2689 = vpop.permute.xlu0 %2688
  %2690 = vrot.lane.b32.xlu0 %v2655, 16
  %v2691 = vpop.permute.xlu0 %2690
  %2692 = vrot.lane.b32.xlu0 %v2656, 16
  %v2693 = vpop.permute.xlu0 %2692
  %2694 = vrot.lane.b32.xlu0 %v2657, 16
  %v2695 = vpop.permute.xlu0 %2694
  %2696 = vrot.lane.b32.xlu0 %v2658, 16
  %v2697 = vpop.permute.xlu0 %2696
  %2698 = vrot.lane.b32.xlu0 %v2659, 16
  %v2699 = vpop.permute.xlu0 %2698
  %2700 = vrot.lane.b32.xlu0 %v2660, 16
  %v2701 = vpop.permute.xlu0 %2700
  %2702 = vrot.lane.b32.xlu0 %v2661, 16
  %v2703 = vpop.permute.xlu0 %2702
  %2704 = vrot.lane.b32.xlu0 %v2662, 16
  %v2705 = vpop.permute.xlu0 %2704
  %2706 = vrot.lane.b32.xlu0 %v2663, 16
  %v2707 = vpop.permute.xlu0 %2706
  %2708 = vrot.lane.b32.xlu0 %v2664, 16
  %v2709 = vpop.permute.xlu0 %2708
  %2710 = vrot.lane.b32.xlu0 %v2665, 16
  %v2711 = vpop.permute.xlu0 %2710
  %2712 = vrot.lane.b32.xlu0 %v2666, 16
  %v2713 = vpop.permute.xlu0 %2712
  %2714 = vrot.lane.b32.xlu0 %v2667, 16
  %v2715 = vpop.permute.xlu0 %2714
  %v2732 = vsel %vm274, %v2590, %v2685
  %v2733 = vsel %vm274, %v2593, %v2687
  %v2734 = vsel %vm274, %v2598, %v2689
  %v2735 = vsel %vm274, %v2601, %v2691
  %v2736 = vsel %vm274, %v2606, %v2693
  %v2737 = vsel %vm274, %v2609, %v2695
  %v2738 = vsel %vm274, %v2614, %v2697
  %v2739 = vsel %vm274, %v2617, %v2699
  %v2740 = vsel %vm274, %v2622, %v2701
  %v2741 = vsel %vm274, %v2625, %v2703
  %v2742 = vsel %vm274, %v2630, %v2705
  %v2743 = vsel %vm274, %v2633, %v2707
  %v2744 = vsel %vm274, %v2638, %v2709
  %v2745 = vsel %vm274, %v2641, %v2711
  %v2746 = vsel %vm274, %v2646, %v2713
  %v2747 = vsel %vm274, %v2649, %v2715
  %v2748 = vsel %vm72, %v2732, 0.0
  %v2749 = vsel %vm72, %v2733, 0.0
  %v2750 = vadd.f32 %v2748, %v2749
  %v2751 = vsel %vm72, %v2734, 0.0
  %v2752 = vadd.f32 %v2750, %v2751
  %v2753 = vsel %vm72, %v2735, 0.0
  %v2754 = vadd.f32 %v2752, %v2753
  %v2755 = vsel %vm72, %v2736, 0.0
  %v2756 = vadd.f32 %v2754, %v2755
  %v2757 = vsel %vm72, %v2737, 0.0
  %v2758 = vadd.f32 %v2756, %v2757
  %v2759 = vsel %vm72, %v2738, 0.0
  %v2760 = vadd.f32 %v2758, %v2759
  %v2761 = vsel %vm72, %v2739, 0.0
  %v2762 = vadd.f32 %v2760, %v2761
  %v2763 = vsel %vm72, %v2740, 0.0
  %v2764 = vadd.f32 %v2762, %v2763
  %v2765 = vsel %vm72, %v2741, 0.0
  %v2766 = vadd.f32 %v2764, %v2765
  %v2767 = vsel %vm72, %v2742, 0.0
  %v2768 = vadd.f32 %v2766, %v2767
  %v2769 = vsel %vm72, %v2743, 0.0
  %v2770 = vadd.f32 %v2768, %v2769
  %v2771 = vsel %vm72, %v2744, 0.0
  %v2772 = vadd.f32 %v2770, %v2771
  %v2773 = vsel %vm72, %v2745, 0.0
  %v2774 = vadd.f32 %v2772, %v2773
  %v2775 = vsel %vm72, %v2746, 0.0
  %v2776 = vadd.f32 %v2774, %v2775
  %v2777 = vsel %vm72, %v2747, 0.0
  %v2778 = vadd.f32 %v2776, %v2777
  %v2779 = vrot.slane %v2778, 4
  %v2780 = vadd.f32 %v2778, %v2779
  %v2781 = vrot.slane %v2780, 2
  %v2782 = vadd.f32 %v2780, %v2781
  %v2783 = vrot.slane %v2782, 1
  %v2784 = vadd.f32 %v2782, %v2783
  %v2785 = vmul.f32 %v2784, %v328
  %v2786 = vmul.f32 %v2785, %v2785
  %2788 = vrot.lane.b32.xlu0 %v2786, 16
  %v2789 = vpop.permute.xlu0 %2788
  %v2791 = vsub.f32 %v2785, %v2789
  %v2792 = vmax.f32 %v2791, 0.0
  %v2793 = vadd.f32 %v2792, 1e-05
  %v2794 = vrsqrt.pop %v2793
  %v2796 = vrot.slane %v2794, 1
  %2797 = vrot.lane.b32.xlu0 %v2796, 112
  %v2798 = vpop.permute.xlu0 %2797
  %v2800 = vmul.f32 %v26, %v2798
  %v2801 = vmul.f32 %v2785, %v2800
  %v2803 = vrot.slane %v2801, 6
  %v2805 = vsub.f32 %v27, %v2803
  %v2806 = vlaneseq
  %v2807 = vshrl.u32 %v2806, 7
  %v2808 = vsub.s32 7, %v2807
  %v2809 = vrot.slane %v2800, %v2808
  %v2810 = vmul.f32 %v2590, %v2809
  %v2811 = vmul.f32 %v2593, %v2809
  %v2812 = vmul.f32 %v2598, %v2809
  %v2813 = vmul.f32 %v2601, %v2809
  %v2814 = vmul.f32 %v2606, %v2809
  %v2815 = vmul.f32 %v2609, %v2809
  %v2816 = vmul.f32 %v2614, %v2809
  %v2817 = vmul.f32 %v2617, %v2809
  %v2818 = vmul.f32 %v2622, %v2809
  %v2819 = vmul.f32 %v2625, %v2809
  %v2820 = vmul.f32 %v2630, %v2809
  %v2821 = vmul.f32 %v2633, %v2809
  %v2822 = vmul.f32 %v2638, %v2809
  %v2823 = vmul.f32 %v2641, %v2809
  %v2824 = vmul.f32 %v2646, %v2809
  %v2825 = vmul.f32 %v2649, %v2809
  %v2826 = vlaneseq
  %v2827 = vshrl.u32 %v2826, 7
  %v2828 = vsub.s32 1, %v2827
  %v2829 = vrot.slane %v2805, %v2828
  %v2830 = vadd.f32 %v2810, %v2829
  %v2831 = vadd.f32 %v2811, %v2829
  %v2832 = vadd.f32 %v2812, %v2829
  %v2833 = vadd.f32 %v2813, %v2829
  %v2834 = vadd.f32 %v2814, %v2829
  %v2835 = vadd.f32 %v2815, %v2829
  %v2836 = vadd.f32 %v2816, %v2829
  %v2837 = vadd.f32 %v2817, %v2829
  %v2838 = vadd.f32 %v2818, %v2829
  %v2839 = vadd.f32 %v2819, %v2829
  %v2840 = vadd.f32 %v2820, %v2829
  %v2841 = vadd.f32 %v2821, %v2829
  %v2842 = vadd.f32 %v2822, %v2829
  %v2843 = vadd.f32 %v2823, %v2829
  %v2844 = vadd.f32 %v2824, %v2829
  %v2845 = vadd.f32 %v2825, %v2829
  %v2846 = vadd.f32 %v2526, %v2830
  %v2847 = vadd.f32 %v2527, %v2831
  %v2848 = vadd.f32 %v2528, %v2832
  %v2849 = vadd.f32 %v2529, %v2833
  %v2850 = vadd.f32 %v2530, %v2834
  %v2851 = vadd.f32 %v2531, %v2835
  %v2852 = vadd.f32 %v2532, %v2836
  %v2853 = vadd.f32 %v2533, %v2837
  %v2854 = vadd.f32 %v2534, %v2838
  %v2855 = vadd.f32 %v2535, %v2839
  %v2856 = vadd.f32 %v2536, %v2840
  %v2857 = vadd.f32 %v2537, %v2841
  %v2858 = vadd.f32 %v2538, %v2842
  %v2859 = vadd.f32 %v2539, %v2843
  %v2860 = vadd.f32 %v2540, %v2844
  %v2861 = vadd.f32 %v2541, %v2845
  %v2862 = vmax.f32 %v2846, 0.0
  %v2863 = vmax.f32 %v2847, 0.0
  %v2864 = vmax.f32 %v2848, 0.0
  %v2865 = vmax.f32 %v2849, 0.0
  %v2866 = vmax.f32 %v2850, 0.0
  %v2867 = vmax.f32 %v2851, 0.0
  %v2868 = vmax.f32 %v2852, 0.0
  %v2869 = vmax.f32 %v2853, 0.0
  %v2870 = vmax.f32 %v2854, 0.0
  %v2871 = vmax.f32 %v2855, 0.0
  %v2872 = vmax.f32 %v2856, 0.0
  %v2873 = vmax.f32 %v2857, 0.0
  %v2874 = vmax.f32 %v2858, 0.0
  %v2875 = vmax.f32 %v2859, 0.0
  %v2876 = vmax.f32 %v2860, 0.0
  %v2877 = vmax.f32 %v2861, 0.0
  %s2878 = scalar_lea.vmem %s2, 24
  %v2879 = vld [vmem:[%s2878] sm:$0xf]
  %v2880 = vld [vmem:[%s2878 + $0x4] sm:$0xf]
  %v2881 = vpack.c.bf16 %v2863, %v2862
  %v2882 = vpack.c.bf16 %v2865, %v2864
  %v2883 = vpack.c.bf16 %v2867, %v2866
  %v2884 = vpack.c.bf16 %v2869, %v2868
  %v2885 = vpack.c.bf16 %v2871, %v2870
  %v2886 = vpack.c.bf16 %v2873, %v2872
  %v2887 = vpack.c.bf16 %v2875, %v2874
  %v2888 = vpack.c.bf16 %v2877, %v2876
  %v2889 = vlaneseq
  %v2890 = vshrl.u32 %v2889, 7
  %v2891 = vsub.s32 6, %v2890
  %v2892 = vrot.slane %v24, %v2891
  %v2895 = vunpack.c.l.b16 %v2879
  %v2896 = vunpack.c.l.b16 %v2880
  %v2897 = vpack.c.b16 %v2896, %v2895
  %v2900 = vsel %vm274, %v2881, 0
  %v2903 = vsel %vm274, %v2882, 0
  %v2906 = vsel %vm274, %v2883, 0
  %v2909 = vsel %vm274, %v2884, 0
  %v2912 = vsel %vm274, %v2885, 0
  %v2915 = vsel %vm274, %v2886, 0
  %v2918 = vsel %vm274, %v2887, 0
  %v2921 = vsel %vm274, %v2888, 0
  %2923 = vmatprep.subr.bf16.mxu0 0
  %2924 = vmatpush1.bf16.msra.mxu0 %v2897
  %2925 = vmatprep.subr.bf16.mxu0 0
  %2926 = vmatpush1.bf16.msra.mxu0 0
  %2927 = vmatprep.subr.bf16.mxu0 0
  %2928 = vmatpush1.bf16.msra.mxu0 0
  %2929 = vmatprep.subr.bf16.mxu0 0
  %2930 = vmatpush1.bf16.msra.mxu0 0
  %2931 = vmatprep.subr.bf16.mxu0 0
  %2932 = vmatpush1.bf16.msra.mxu0 0
  %2933 = vmatprep.subr.bf16.mxu0 0
  %2934 = vmatpush1.bf16.msra.mxu0 0
  %2935 = vmatprep.subr.bf16.mxu0 0
  %2936 = vmatpush1.bf16.msra.mxu0 0
  %2937 = vmatprep.subr.bf16.mxu0 0
  %2938 = vmatpush1.bf16.msra.mxu0 0
  %2939 = vmatprep.subr.bf16.mxu0 0
  %2940 = vmatpush1.bf16.msra.mxu0 0
  %2941 = vmatprep.subr.bf16.mxu0 0
  %2942 = vmatpush1.bf16.msra.mxu0 0
  %2943 = vmatprep.subr.bf16.mxu0 0
  %2944 = vmatpush1.bf16.msra.mxu0 0
  %2945 = vmatprep.subr.bf16.mxu0 0
  %2946 = vmatpush1.bf16.msra.mxu0 0
  %2947 = vmatprep.subr.bf16.mxu0 0
  %2948 = vmatpush1.bf16.msra.mxu0 0
  %2949 = vmatprep.subr.bf16.mxu0 0
  %2950 = vmatpush1.bf16.msra.mxu0 0
  %2951 = vmatprep.subr.bf16.mxu0 0
  %2952 = vmatpush1.bf16.msra.mxu0 0
  %2953 = vmatprep.subr.bf16.mxu0 0
  %2954 = vmatpush1.bf16.msra.mxu0 0
  %2955 = vmatprep.mubr.bf16.mxu0 0
  %2956 = vmatmul.mubr.bf16.gmra.mrb[0].mxu0 %v2900
  %v2957 = vpop.f32.mrb[0].mxu0
  %v2958 = vadd.f32 %v2892, %v2957
  %v2959 = vpop.f32.mrb[0].mxu0
  %v2960 = vpop.f32.mrb[0].mxu0
  %v2961 = vadd.f32 %v2892, %v2960
  %v2962 = vpop.f32.mrb[0].mxu0
  %2963 = vmatprep.mubr.bf16.mxu0 0
  %2964 = vmatmul.mubr.bf16.gmra.mrb[0].mxu0 %v2903
  %v2965 = vpop.f32.mrb[0].mxu0
  %v2966 = vadd.f32 %v2892, %v2965
  %v2967 = vpop.f32.mrb[0].mxu0
  %v2968 = vpop.f32.mrb[0].mxu0
  %v2969 = vadd.f32 %v2892, %v2968
  %v2970 = vpop.f32.mrb[0].mxu0
  %2971 = vmatprep.mubr.bf16.mxu0 0
  %2972 = vmatmul.mubr.bf16.gmra.mrb[0].mxu0 %v2906
  %v2973 = vpop.f32.mrb[0].mxu0
  %v2974 = vadd.f32 %v2892, %v2973
  %v2975 = vpop.f32.mrb[0].mxu0
  %v2976 = vpop.f32.mrb[0].mxu0
  %v2977 = vadd.f32 %v2892, %v2976
  %v2978 = vpop.f32.mrb[0].mxu0
  %2979 = vmatprep.mubr.bf16.mxu0 0
  %2980 = vmatmul.mubr.bf16.gmra.mrb[0].mxu0 %v2909
  %v2981 = vpop.f32.mrb[0].mxu0
  %v2982 = vadd.f32 %v2892, %v2981
  %v2983 = vpop.f32.mrb[0].mxu0
  %v2984 = vpop.f32.mrb[0].mxu0
  %v2985 = vadd.f32 %v2892, %v2984
  %v2986 = vpop.f32.mrb[0].mxu0
  %2987 = vmatprep.mubr.bf16.mxu0 0
  %2988 = vmatmul.mubr.bf16.gmra.mrb[0].mxu0 %v2912
  %v2989 = vpop.f32.mrb[0].mxu0
  %v2990 = vadd.f32 %v2892, %v2989
  %v2991 = vpop.f32.mrb[0].mxu0
  %v2992 = vpop.f32.mrb[0].mxu0
  %v2993 = vadd.f32 %v2892, %v2992
  %v2994 = vpop.f32.mrb[0].mxu0
  %2995 = vmatprep.mubr.bf16.mxu0 0
  %2996 = vmatmul.mubr.bf16.gmra.mrb[0].mxu0 %v2915
  %v2997 = vpop.f32.mrb[0].mxu0
  %v2998 = vadd.f32 %v2892, %v2997
  %v2999 = vpop.f32.mrb[0].mxu0
  %v3000 = vpop.f32.mrb[0].mxu0
  %v3001 = vadd.f32 %v2892, %v3000
  %v3002 = vpop.f32.mrb[0].mxu0
  %3003 = vmatprep.mubr.bf16.mxu0 0
  %3004 = vmatmul.mubr.bf16.gmra.mrb[0].mxu0 %v2918
  %v3005 = vpop.f32.mrb[0].mxu0
  %v3006 = vadd.f32 %v2892, %v3005
  %v3007 = vpop.f32.mrb[0].mxu0
  %v3008 = vpop.f32.mrb[0].mxu0
  %v3009 = vadd.f32 %v2892, %v3008
  %v3010 = vpop.f32.mrb[0].mxu0
  %3011 = vmatprep.mubr.bf16.mxu0 0
  %3012 = vmatmul.mubr.bf16.gmra.mrb[0].mxu0 %v2921
  %v3013 = vpop.f32.mrb[0].mxu0
  %v3014 = vadd.f32 %v2892, %v3013
  %v3015 = vpop.f32.mrb[0].mxu0
  %v3016 = vpop.f32.mrb[0].mxu0
  %v3017 = vadd.f32 %v2892, %v3016
  %v3018 = vpop.f32.mrb[0].mxu0
  %3019 = vdwg.mxu0
  %v3020 = vmul.f32 %v2958, %v2958
  %v3021 = vmul.f32 %v2961, %v2961
  %v3022 = vmul.f32 %v2966, %v2966
  %v3023 = vmul.f32 %v2969, %v2969
  %v3024 = vmul.f32 %v2974, %v2974
  %v3025 = vmul.f32 %v2977, %v2977
  %v3026 = vmul.f32 %v2982, %v2982
  %v3027 = vmul.f32 %v2985, %v2985
  %v3028 = vmul.f32 %v2990, %v2990
  %v3029 = vmul.f32 %v2993, %v2993
  %v3030 = vmul.f32 %v2998, %v2998
  %v3031 = vmul.f32 %v3001, %v3001
  %v3032 = vmul.f32 %v3006, %v3006
  %v3033 = vmul.f32 %v3009, %v3009
  %v3034 = vmul.f32 %v3014, %v3014
  %v3035 = vmul.f32 %v3017, %v3017
  %3052 = vrot.lane.b32.xlu0 %v3020, 16
  %v3053 = vpop.permute.xlu0 %3052
  %3054 = vrot.lane.b32.xlu0 %v3021, 16
  %v3055 = vpop.permute.xlu0 %3054
  %3056 = vrot.lane.b32.xlu0 %v3022, 16
  %v3057 = vpop.permute.xlu0 %3056
  %3058 = vrot.lane.b32.xlu0 %v3023, 16
  %v3059 = vpop.permute.xlu0 %3058
  %3060 = vrot.lane.b32.xlu0 %v3024, 16
  %v3061 = vpop.permute.xlu0 %3060
  %3062 = vrot.lane.b32.xlu0 %v3025, 16
  %v3063 = vpop.permute.xlu0 %3062
  %3064 = vrot.lane.b32.xlu0 %v3026, 16
  %v3065 = vpop.permute.xlu0 %3064
  %3066 = vrot.lane.b32.xlu0 %v3027, 16
  %v3067 = vpop.permute.xlu0 %3066
  %3068 = vrot.lane.b32.xlu0 %v3028, 16
  %v3069 = vpop.permute.xlu0 %3068
  %3070 = vrot.lane.b32.xlu0 %v3029, 16
  %v3071 = vpop.permute.xlu0 %3070
  %3072 = vrot.lane.b32.xlu0 %v3030, 16
  %v3073 = vpop.permute.xlu0 %3072
  %3074 = vrot.lane.b32.xlu0 %v3031, 16
  %v3075 = vpop.permute.xlu0 %3074
  %3076 = vrot.lane.b32.xlu0 %v3032, 16
  %v3077 = vpop.permute.xlu0 %3076
  %3078 = vrot.lane.b32.xlu0 %v3033, 16
  %v3079 = vpop.permute.xlu0 %3078
  %3080 = vrot.lane.b32.xlu0 %v3034, 16
  %v3081 = vpop.permute.xlu0 %3080
  %3082 = vrot.lane.b32.xlu0 %v3035, 16
  %v3083 = vpop.permute.xlu0 %3082
  %v3100 = vsel %vm274, %v2958, %v3053
  %v3101 = vsel %vm274, %v2961, %v3055
  %v3102 = vsel %vm274, %v2966, %v3057
  %v3103 = vsel %vm274, %v2969, %v3059
  %v3104 = vsel %vm274, %v2974, %v3061
  %v3105 = vsel %vm274, %v2977, %v3063
  %v3106 = vsel %vm274, %v2982, %v3065
  %v3107 = vsel %vm274, %v2985, %v3067
  %v3108 = vsel %vm274, %v2990, %v3069
  %v3109 = vsel %vm274, %v2993, %v3071
  %v3110 = vsel %vm274, %v2998, %v3073
  %v3111 = vsel %vm274, %v3001, %v3075
  %v3112 = vsel %vm274, %v3006, %v3077
  %v3113 = vsel %vm274, %v3009, %v3079
  %v3114 = vsel %vm274, %v3014, %v3081
  %v3115 = vsel %vm274, %v3017, %v3083
  %v3116 = vsel %vm72, %v3100, 0.0
  %v3117 = vsel %vm72, %v3101, 0.0
  %v3118 = vadd.f32 %v3116, %v3117
  %v3119 = vsel %vm72, %v3102, 0.0
  %v3120 = vadd.f32 %v3118, %v3119
  %v3121 = vsel %vm72, %v3103, 0.0
  %v3122 = vadd.f32 %v3120, %v3121
  %v3123 = vsel %vm72, %v3104, 0.0
  %v3124 = vadd.f32 %v3122, %v3123
  %v3125 = vsel %vm72, %v3105, 0.0
  %v3126 = vadd.f32 %v3124, %v3125
  %v3127 = vsel %vm72, %v3106, 0.0
  %v3128 = vadd.f32 %v3126, %v3127
  %v3129 = vsel %vm72, %v3107, 0.0
  %v3130 = vadd.f32 %v3128, %v3129
  %v3131 = vsel %vm72, %v3108, 0.0
  %v3132 = vadd.f32 %v3130, %v3131
  %v3133 = vsel %vm72, %v3109, 0.0
  %v3134 = vadd.f32 %v3132, %v3133
  %v3135 = vsel %vm72, %v3110, 0.0
  %v3136 = vadd.f32 %v3134, %v3135
  %v3137 = vsel %vm72, %v3111, 0.0
  %v3138 = vadd.f32 %v3136, %v3137
  %v3139 = vsel %vm72, %v3112, 0.0
  %v3140 = vadd.f32 %v3138, %v3139
  %v3141 = vsel %vm72, %v3113, 0.0
  %v3142 = vadd.f32 %v3140, %v3141
  %v3143 = vsel %vm72, %v3114, 0.0
  %v3144 = vadd.f32 %v3142, %v3143
  %v3145 = vsel %vm72, %v3115, 0.0
  %v3146 = vadd.f32 %v3144, %v3145
  %v3147 = vrot.slane %v3146, 4
  %v3148 = vadd.f32 %v3146, %v3147
  %v3149 = vrot.slane %v3148, 2
  %v3150 = vadd.f32 %v3148, %v3149
  %v3151 = vrot.slane %v3150, 1
  %v3152 = vadd.f32 %v3150, %v3151
  %v3153 = vmul.f32 %v3152, %v328
  %v3154 = vmul.f32 %v3153, %v3153
  %3156 = vrot.lane.b32.xlu0 %v3154, 16
  %v3157 = vpop.permute.xlu0 %3156
  %v3159 = vsub.f32 %v3153, %v3157
  %v3160 = vmax.f32 %v3159, 0.0
  %v3161 = vadd.f32 %v3160, 1e-05
  %v3162 = vrsqrt.pop %v3161
  %v3164 = vrot.slane %v3162, 4
  %3165 = vrot.lane.b32.xlu0 %v3164, 112
  %v3166 = vpop.permute.xlu0 %3165
  %v3168 = vmul.f32 %v25, %v3166
  %v3169 = vmul.f32 %v3153, %v3168
  %v3171 = vrot.slane %v3169, 2
  %v3173 = vsub.f32 %v26, %v3171
  %v3174 = vlaneseq
  %v3175 = vshrl.u32 %v3174, 7
  %v3176 = vsub.s32 4, %v3175
  %v3177 = vrot.slane %v3168, %v3176
  %v3178 = vmul.f32 %v2958, %v3177
  %v3179 = vmul.f32 %v2961, %v3177
  %v3180 = vmul.f32 %v2966, %v3177
  %v3181 = vmul.f32 %v2969, %v3177
  %v3182 = vmul.f32 %v2974, %v3177
  %v3183 = vmul.f32 %v2977, %v3177
  %v3184 = vmul.f32 %v2982, %v3177
  %v3185 = vmul.f32 %v2985, %v3177
  %v3186 = vmul.f32 %v2990, %v3177
  %v3187 = vmul.f32 %v2993, %v3177
  %v3188 = vmul.f32 %v2998, %v3177
  %v3189 = vmul.f32 %v3001, %v3177
  %v3190 = vmul.f32 %v3006, %v3177
  %v3191 = vmul.f32 %v3009, %v3177
  %v3192 = vmul.f32 %v3014, %v3177
  %v3193 = vmul.f32 %v3017, %v3177
  %v3194 = vlaneseq
  %v3195 = vshrl.u32 %v3194, 7
  %v3196 = vsub.s32 2, %v3195
  %v3197 = vrot.slane %v3173, %v3196
  %v3198 = vadd.f32 %v3178, %v3197
  %v3199 = vadd.f32 %v3179, %v3197
  %v3200 = vadd.f32 %v3180, %v3197
  %v3201 = vadd.f32 %v3181, %v3197
  %v3202 = vadd.f32 %v3182, %v3197
  %v3203 = vadd.f32 %v3183, %v3197
  %v3204 = vadd.f32 %v3184, %v3197
  %v3205 = vadd.f32 %v3185, %v3197
  %v3206 = vadd.f32 %v3186, %v3197
  %v3207 = vadd.f32 %v3187, %v3197
  %v3208 = vadd.f32 %v3188, %v3197
  %v3209 = vadd.f32 %v3189, %v3197
  %v3210 = vadd.f32 %v3190, %v3197
  %v3211 = vadd.f32 %v3191, %v3197
  %v3212 = vadd.f32 %v3192, %v3197
  %v3213 = vadd.f32 %v3193, %v3197
  %v3214 = vmax.f32 %v3198, 0.0
  %v3215 = vmax.f32 %v3199, 0.0
  %v3216 = vmax.f32 %v3200, 0.0
  %v3217 = vmax.f32 %v3201, 0.0
  %v3218 = vmax.f32 %v3202, 0.0
  %v3219 = vmax.f32 %v3203, 0.0
  %v3220 = vmax.f32 %v3204, 0.0
  %v3221 = vmax.f32 %v3205, 0.0
  %v3222 = vmax.f32 %v3206, 0.0
  %v3223 = vmax.f32 %v3207, 0.0
  %v3224 = vmax.f32 %v3208, 0.0
  %v3225 = vmax.f32 %v3209, 0.0
  %v3226 = vmax.f32 %v3210, 0.0
  %v3227 = vmax.f32 %v3211, 0.0
  %v3228 = vmax.f32 %v3212, 0.0
  %v3229 = vmax.f32 %v3213, 0.0
  %v3230 = vpack.c.bf16 %v3215, %v3214
  %v3231 = vpack.c.bf16 %v3217, %v3216
  %v3232 = vpack.c.bf16 %v3219, %v3218
  %v3233 = vpack.c.bf16 %v3221, %v3220
  %v3234 = vpack.c.bf16 %v3223, %v3222
  %v3235 = vpack.c.bf16 %v3225, %v3224
  %v3236 = vpack.c.bf16 %v3227, %v3226
  %v3237 = vpack.c.bf16 %v3229, %v3228
  %v3239 = vsel %vm274, %v3230, 0
  %v3242 = vsel %vm274, %v3231, 0
  %v3245 = vsel %vm274, %v3232, 0
  %v3248 = vsel %vm274, %v3233, 0
  %v3251 = vsel %vm274, %v3234, 0
  %v3254 = vsel %vm274, %v3235, 0
  %v3257 = vsel %vm274, %v3236, 0
  %v3260 = vsel %vm274, %v3237, 0
  %3262 = vmatprep.subr.bf16.mxu0 0
  %3263 = vmatpush1.bf16.msra.mxu0 %v2897
  %3264 = vmatprep.subr.bf16.mxu0 0
  %3265 = vmatpush1.bf16.msra.mxu0 0
  %3266 = vmatprep.subr.bf16.mxu0 0
  %3267 = vmatpush1.bf16.msra.mxu0 0
  %3268 = vmatprep.subr.bf16.mxu0 0
  %3269 = vmatpush1.bf16.msra.mxu0 0
  %3270 = vmatprep.subr.bf16.mxu0 0
  %3271 = vmatpush1.bf16.msra.mxu0 0
  %3272 = vmatprep.subr.bf16.mxu0 0
  %3273 = vmatpush1.bf16.msra.mxu0 0
  %3274 = vmatprep.subr.bf16.mxu0 0
  %3275 = vmatpush1.bf16.msra.mxu0 0
  %3276 = vmatprep.subr.bf16.mxu0 0
  %3277 = vmatpush1.bf16.msra.mxu0 0
  %3278 = vmatprep.subr.bf16.mxu0 0
  %3279 = vmatpush1.bf16.msra.mxu0 0
  %3280 = vmatprep.subr.bf16.mxu0 0
  %3281 = vmatpush1.bf16.msra.mxu0 0
  %3282 = vmatprep.subr.bf16.mxu0 0
  %3283 = vmatpush1.bf16.msra.mxu0 0
  %3284 = vmatprep.subr.bf16.mxu0 0
  %3285 = vmatpush1.bf16.msra.mxu0 0
  %3286 = vmatprep.subr.bf16.mxu0 0
  %3287 = vmatpush1.bf16.msra.mxu0 0
  %3288 = vmatprep.subr.bf16.mxu0 0
  %3289 = vmatpush1.bf16.msra.mxu0 0
  %3290 = vmatprep.subr.bf16.mxu0 0
  %3291 = vmatpush1.bf16.msra.mxu0 0
  %3292 = vmatprep.subr.bf16.mxu0 0
  %3293 = vmatpush1.bf16.msra.mxu0 0
  %3294 = vmatprep.mubr.bf16.mxu0 0
  %3295 = vmatmul.mubr.bf16.gmra.mrb[0].mxu0 %v3239
  %v3296 = vpop.f32.mrb[0].mxu0
  %v3297 = vadd.f32 %v2892, %v3296
  %v3298 = vpop.f32.mrb[0].mxu0
  %v3299 = vpop.f32.mrb[0].mxu0
  %v3300 = vadd.f32 %v2892, %v3299
  %v3301 = vpop.f32.mrb[0].mxu0
  %3302 = vmatprep.mubr.bf16.mxu0 0
  %3303 = vmatmul.mubr.bf16.gmra.mrb[0].mxu0 %v3242
  %v3304 = vpop.f32.mrb[0].mxu0
  %v3305 = vadd.f32 %v2892, %v3304
  %v3306 = vpop.f32.mrb[0].mxu0
  %v3307 = vpop.f32.mrb[0].mxu0
  %v3308 = vadd.f32 %v2892, %v3307
  %v3309 = vpop.f32.mrb[0].mxu0
  %3310 = vmatprep.mubr.bf16.mxu0 0
  %3311 = vmatmul.mubr.bf16.gmra.mrb[0].mxu0 %v3245
  %v3312 = vpop.f32.mrb[0].mxu0
  %v3313 = vadd.f32 %v2892, %v3312
  %v3314 = vpop.f32.mrb[0].mxu0
  %v3315 = vpop.f32.mrb[0].mxu0
  %v3316 = vadd.f32 %v2892, %v3315
  %v3317 = vpop.f32.mrb[0].mxu0
  %3318 = vmatprep.mubr.bf16.mxu0 0
  %3319 = vmatmul.mubr.bf16.gmra.mrb[0].mxu0 %v3248
  %v3320 = vpop.f32.mrb[0].mxu0
  %v3321 = vadd.f32 %v2892, %v3320
  %v3322 = vpop.f32.mrb[0].mxu0
  %v3323 = vpop.f32.mrb[0].mxu0
  %v3324 = vadd.f32 %v2892, %v3323
  %v3325 = vpop.f32.mrb[0].mxu0
  %3326 = vmatprep.mubr.bf16.mxu0 0
  %3327 = vmatmul.mubr.bf16.gmra.mrb[0].mxu0 %v3251
  %v3328 = vpop.f32.mrb[0].mxu0
  %v3329 = vadd.f32 %v2892, %v3328
  %v3330 = vpop.f32.mrb[0].mxu0
  %v3331 = vpop.f32.mrb[0].mxu0
  %v3332 = vadd.f32 %v2892, %v3331
  %v3333 = vpop.f32.mrb[0].mxu0
  %3334 = vmatprep.mubr.bf16.mxu0 0
  %3335 = vmatmul.mubr.bf16.gmra.mrb[0].mxu0 %v3254
  %v3336 = vpop.f32.mrb[0].mxu0
  %v3337 = vadd.f32 %v2892, %v3336
  %v3338 = vpop.f32.mrb[0].mxu0
  %v3339 = vpop.f32.mrb[0].mxu0
  %v3340 = vadd.f32 %v2892, %v3339
  %v3341 = vpop.f32.mrb[0].mxu0
  %3342 = vmatprep.mubr.bf16.mxu0 0
  %3343 = vmatmul.mubr.bf16.gmra.mrb[0].mxu0 %v3257
  %v3344 = vpop.f32.mrb[0].mxu0
  %v3345 = vadd.f32 %v2892, %v3344
  %v3346 = vpop.f32.mrb[0].mxu0
  %v3347 = vpop.f32.mrb[0].mxu0
  %v3348 = vadd.f32 %v2892, %v3347
  %v3349 = vpop.f32.mrb[0].mxu0
  %3350 = vmatprep.mubr.bf16.mxu0 0
  %3351 = vmatmul.mubr.bf16.gmra.mrb[0].mxu0 %v3260
  %v3352 = vpop.f32.mrb[0].mxu0
  %v3353 = vadd.f32 %v2892, %v3352
  %v3354 = vpop.f32.mrb[0].mxu0
  %v3355 = vpop.f32.mrb[0].mxu0
  %v3356 = vadd.f32 %v2892, %v3355
  %v3357 = vpop.f32.mrb[0].mxu0
  %3358 = vdwg.mxu0
  %v3359 = vmax.f32 %v3297, 0.0
  %v3360 = vmax.f32 %v3300, 0.0
  %v3361 = vmax.f32 %v3305, 0.0
  %v3362 = vmax.f32 %v3308, 0.0
  %v3363 = vmax.f32 %v3313, 0.0
  %v3364 = vmax.f32 %v3316, 0.0
  %v3365 = vmax.f32 %v3321, 0.0
  %v3366 = vmax.f32 %v3324, 0.0
  %v3367 = vmax.f32 %v3329, 0.0
  %v3368 = vmax.f32 %v3332, 0.0
  %v3369 = vmax.f32 %v3337, 0.0
  %v3370 = vmax.f32 %v3340, 0.0
  %v3371 = vmax.f32 %v3345, 0.0
  %v3372 = vmax.f32 %v3348, 0.0
  %v3373 = vmax.f32 %v3353, 0.0
  %v3374 = vmax.f32 %v3356, 0.0
  %v3375 = vmul.f32 %v3359, %v3359
  %v3376 = vmul.f32 %v3360, %v3360
  %v3377 = vmul.f32 %v3361, %v3361
  %v3378 = vmul.f32 %v3362, %v3362
  %v3379 = vmul.f32 %v3363, %v3363
  %v3380 = vmul.f32 %v3364, %v3364
  %v3381 = vmul.f32 %v3365, %v3365
  %v3382 = vmul.f32 %v3366, %v3366
  %v3383 = vmul.f32 %v3367, %v3367
  %v3384 = vmul.f32 %v3368, %v3368
  %v3385 = vmul.f32 %v3369, %v3369
  %v3386 = vmul.f32 %v3370, %v3370
  %v3387 = vmul.f32 %v3371, %v3371
  %v3388 = vmul.f32 %v3372, %v3372
  %v3389 = vmul.f32 %v3373, %v3373
  %v3390 = vmul.f32 %v3374, %v3374
  %3407 = vrot.lane.b32.xlu0 %v3375, 16
  %v3408 = vpop.permute.xlu0 %3407
  %3409 = vrot.lane.b32.xlu0 %v3376, 16
  %v3410 = vpop.permute.xlu0 %3409
  %3411 = vrot.lane.b32.xlu0 %v3377, 16
  %v3412 = vpop.permute.xlu0 %3411
  %3413 = vrot.lane.b32.xlu0 %v3378, 16
  %v3414 = vpop.permute.xlu0 %3413
  %3415 = vrot.lane.b32.xlu0 %v3379, 16
  %v3416 = vpop.permute.xlu0 %3415
  %3417 = vrot.lane.b32.xlu0 %v3380, 16
  %v3418 = vpop.permute.xlu0 %3417
  %3419 = vrot.lane.b32.xlu0 %v3381, 16
  %v3420 = vpop.permute.xlu0 %3419
  %3421 = vrot.lane.b32.xlu0 %v3382, 16
  %v3422 = vpop.permute.xlu0 %3421
  %3423 = vrot.lane.b32.xlu0 %v3383, 16
  %v3424 = vpop.permute.xlu0 %3423
  %3425 = vrot.lane.b32.xlu0 %v3384, 16
  %v3426 = vpop.permute.xlu0 %3425
  %3427 = vrot.lane.b32.xlu0 %v3385, 16
  %v3428 = vpop.permute.xlu0 %3427
  %3429 = vrot.lane.b32.xlu0 %v3386, 16
  %v3430 = vpop.permute.xlu0 %3429
  %3431 = vrot.lane.b32.xlu0 %v3387, 16
  %v3432 = vpop.permute.xlu0 %3431
  %3433 = vrot.lane.b32.xlu0 %v3388, 16
  %v3434 = vpop.permute.xlu0 %3433
  %3435 = vrot.lane.b32.xlu0 %v3389, 16
  %v3436 = vpop.permute.xlu0 %3435
  %3437 = vrot.lane.b32.xlu0 %v3390, 16
  %v3438 = vpop.permute.xlu0 %3437
  %v3455 = vsel %vm274, %v3359, %v3408
  %v3456 = vsel %vm274, %v3360, %v3410
  %v3457 = vsel %vm274, %v3361, %v3412
  %v3458 = vsel %vm274, %v3362, %v3414
  %v3459 = vsel %vm274, %v3363, %v3416
  %v3460 = vsel %vm274, %v3364, %v3418
  %v3461 = vsel %vm274, %v3365, %v3420
  %v3462 = vsel %vm274, %v3366, %v3422
  %v3463 = vsel %vm274, %v3367, %v3424
  %v3464 = vsel %vm274, %v3368, %v3426
  %v3465 = vsel %vm274, %v3369, %v3428
  %v3466 = vsel %vm274, %v3370, %v3430
  %v3467 = vsel %vm274, %v3371, %v3432
  %v3468 = vsel %vm274, %v3372, %v3434
  %v3469 = vsel %vm274, %v3373, %v3436
  %v3470 = vsel %vm274, %v3374, %v3438
  %v3471 = vsel %vm72, %v3455, 0.0
  %v3472 = vsel %vm72, %v3456, 0.0
  %v3473 = vadd.f32 %v3471, %v3472
  %v3474 = vsel %vm72, %v3457, 0.0
  %v3475 = vadd.f32 %v3473, %v3474
  %v3476 = vsel %vm72, %v3458, 0.0
  %v3477 = vadd.f32 %v3475, %v3476
  %v3478 = vsel %vm72, %v3459, 0.0
  %v3479 = vadd.f32 %v3477, %v3478
  %v3480 = vsel %vm72, %v3460, 0.0
  %v3481 = vadd.f32 %v3479, %v3480
  %v3482 = vsel %vm72, %v3461, 0.0
  %v3483 = vadd.f32 %v3481, %v3482
  %v3484 = vsel %vm72, %v3462, 0.0
  %v3485 = vadd.f32 %v3483, %v3484
  %v3486 = vsel %vm72, %v3463, 0.0
  %v3487 = vadd.f32 %v3485, %v3486
  %v3488 = vsel %vm72, %v3464, 0.0
  %v3489 = vadd.f32 %v3487, %v3488
  %v3490 = vsel %vm72, %v3465, 0.0
  %v3491 = vadd.f32 %v3489, %v3490
  %v3492 = vsel %vm72, %v3466, 0.0
  %v3493 = vadd.f32 %v3491, %v3492
  %v3494 = vsel %vm72, %v3467, 0.0
  %v3495 = vadd.f32 %v3493, %v3494
  %v3496 = vsel %vm72, %v3468, 0.0
  %v3497 = vadd.f32 %v3495, %v3496
  %v3498 = vsel %vm72, %v3469, 0.0
  %v3499 = vadd.f32 %v3497, %v3498
  %v3500 = vsel %vm72, %v3470, 0.0
  %v3501 = vadd.f32 %v3499, %v3500
  %v3502 = vrot.slane %v3501, 4
  %v3503 = vadd.f32 %v3501, %v3502
  %v3504 = vrot.slane %v3503, 2
  %v3505 = vadd.f32 %v3503, %v3504
  %v3506 = vrot.slane %v3505, 1
  %v3507 = vadd.f32 %v3505, %v3506
  %v3508 = vmul.f32 %v3507, %v328
  %v3509 = vmul.f32 %v3508, %v3508
  %3511 = vrot.lane.b32.xlu0 %v3509, 16
  %v3512 = vpop.permute.xlu0 %3511
  %v3514 = vsub.f32 %v3508, %v3512
  %v3515 = vmax.f32 %v3514, 0.0
  %v3516 = vadd.f32 %v3515, 1e-05
  %v3517 = vrsqrt.pop %v3516
  %v3519 = vrot.slane %v3517, 4
  %3520 = vrot.lane.b32.xlu0 %v3519, 112
  %v3521 = vpop.permute.xlu0 %3520
  %v3523 = vmul.f32 %v25, %v3521
  %v3524 = vmul.f32 %v3508, %v3523
  %v3526 = vrot.slane %v3524, 2
  %v3528 = vsub.f32 %v26, %v3526
  %v3529 = vlaneseq
  %v3530 = vshrl.u32 %v3529, 7
  %v3531 = vsub.s32 4, %v3530
  %v3532 = vrot.slane %v3523, %v3531
  %v3533 = vmul.f32 %v3359, %v3532
  %v3534 = vmul.f32 %v3360, %v3532
  %v3535 = vmul.f32 %v3361, %v3532
  %v3536 = vmul.f32 %v3362, %v3532
  %v3537 = vmul.f32 %v3363, %v3532
  %v3538 = vmul.f32 %v3364, %v3532
  %v3539 = vmul.f32 %v3365, %v3532
  %v3540 = vmul.f32 %v3366, %v3532
  %v3541 = vmul.f32 %v3367, %v3532
  %v3542 = vmul.f32 %v3368, %v3532
  %v3543 = vmul.f32 %v3369, %v3532
  %v3544 = vmul.f32 %v3370, %v3532
  %v3545 = vmul.f32 %v3371, %v3532
  %v3546 = vmul.f32 %v3372, %v3532
  %v3547 = vmul.f32 %v3373, %v3532
  %v3548 = vmul.f32 %v3374, %v3532
  %v3549 = vlaneseq
  %v3550 = vshrl.u32 %v3549, 7
  %v3551 = vsub.s32 2, %v3550
  %v3552 = vrot.slane %v3528, %v3551
  %v3553 = vadd.f32 %v3533, %v3552
  %v3554 = vadd.f32 %v3534, %v3552
  %v3555 = vadd.f32 %v3535, %v3552
  %v3556 = vadd.f32 %v3536, %v3552
  %v3557 = vadd.f32 %v3537, %v3552
  %v3558 = vadd.f32 %v3538, %v3552
  %v3559 = vadd.f32 %v3539, %v3552
  %v3560 = vadd.f32 %v3540, %v3552
  %v3561 = vadd.f32 %v3541, %v3552
  %v3562 = vadd.f32 %v3542, %v3552
  %v3563 = vadd.f32 %v3543, %v3552
  %v3564 = vadd.f32 %v3544, %v3552
  %v3565 = vadd.f32 %v3545, %v3552
  %v3566 = vadd.f32 %v3546, %v3552
  %v3567 = vadd.f32 %v3547, %v3552
  %v3568 = vadd.f32 %v3548, %v3552
  %v3569 = vadd.f32 %v3553, %v2862
  %v3570 = vadd.f32 %v3554, %v2863
  %v3571 = vadd.f32 %v3555, %v2864
  %v3572 = vadd.f32 %v3556, %v2865
  %v3573 = vadd.f32 %v3557, %v2866
  %v3574 = vadd.f32 %v3558, %v2867
  %v3575 = vadd.f32 %v3559, %v2868
  %v3576 = vadd.f32 %v3560, %v2869
  %v3577 = vadd.f32 %v3561, %v2870
  %v3578 = vadd.f32 %v3562, %v2871
  %v3579 = vadd.f32 %v3563, %v2872
  %v3580 = vadd.f32 %v3564, %v2873
  %v3581 = vadd.f32 %v3565, %v2874
  %v3582 = vadd.f32 %v3566, %v2875
  %v3583 = vadd.f32 %v3567, %v2876
  %v3584 = vadd.f32 %v3568, %v2877
  %v3585 = vmax.f32 %v3569, 0.0
  %v3586 = vmax.f32 %v3570, 0.0
  %v3587 = vmax.f32 %v3571, 0.0
  %v3588 = vmax.f32 %v3572, 0.0
  %v3589 = vmax.f32 %v3573, 0.0
  %v3590 = vmax.f32 %v3574, 0.0
  %v3591 = vmax.f32 %v3575, 0.0
  %v3592 = vmax.f32 %v3576, 0.0
  %v3593 = vmax.f32 %v3577, 0.0
  %v3594 = vmax.f32 %v3578, 0.0
  %v3595 = vmax.f32 %v3579, 0.0
  %v3596 = vmax.f32 %v3580, 0.0
  %v3597 = vmax.f32 %v3581, 0.0
  %v3598 = vmax.f32 %v3582, 0.0
  %v3599 = vmax.f32 %v3583, 0.0
  %v3600 = vmax.f32 %v3584, 0.0
  %s3601 = scalar_lea.vmem %s2, 32
  %v3602 = vld [vmem:[%s3601] sm:$0xf]
  %v3603 = vld [vmem:[%s3601 + $0x4] sm:$0xf]
  %v3604 = vpack.c.bf16 %v3586, %v3585
  %v3605 = vpack.c.bf16 %v3588, %v3587
  %v3606 = vpack.c.bf16 %v3590, %v3589
  %v3607 = vpack.c.bf16 %v3592, %v3591
  %v3608 = vpack.c.bf16 %v3594, %v3593
  %v3609 = vpack.c.bf16 %v3596, %v3595
  %v3610 = vpack.c.bf16 %v3598, %v3597
  %v3611 = vpack.c.bf16 %v3600, %v3599
  %v3612 = vlaneseq
  %v3613 = vshrl.u32 %v3612, 7
  %v3614 = vsub.s32 7, %v3613
  %v3615 = vrot.slane %v24, %v3614
  %v3618 = vunpack.c.l.b16 %v3602
  %v3619 = vunpack.c.l.b16 %v3603
  %v3620 = vpack.c.b16 %v3619, %v3618
  %v3623 = vsel %vm274, %v3604, 0
  %v3626 = vsel %vm274, %v3605, 0
  %v3629 = vsel %vm274, %v3606, 0
  %v3632 = vsel %vm274, %v3607, 0
  %v3635 = vsel %vm274, %v3608, 0
  %v3638 = vsel %vm274, %v3609, 0
  %v3641 = vsel %vm274, %v3610, 0
  %v3644 = vsel %vm274, %v3611, 0
  %3646 = vmatprep.subr.bf16.mxu0 0
  %3647 = vmatpush1.bf16.msra.mxu0 %v3620
  %3648 = vmatprep.subr.bf16.mxu0 0
  %3649 = vmatpush1.bf16.msra.mxu0 0
  %3650 = vmatprep.subr.bf16.mxu0 0
  %3651 = vmatpush1.bf16.msra.mxu0 0
  %3652 = vmatprep.subr.bf16.mxu0 0
  %3653 = vmatpush1.bf16.msra.mxu0 0
  %3654 = vmatprep.subr.bf16.mxu0 0
  %3655 = vmatpush1.bf16.msra.mxu0 0
  %3656 = vmatprep.subr.bf16.mxu0 0
  %3657 = vmatpush1.bf16.msra.mxu0 0
  %3658 = vmatprep.subr.bf16.mxu0 0
  %3659 = vmatpush1.bf16.msra.mxu0 0
  %3660 = vmatprep.subr.bf16.mxu0 0
  %3661 = vmatpush1.bf16.msra.mxu0 0
  %3662 = vmatprep.subr.bf16.mxu0 0
  %3663 = vmatpush1.bf16.msra.mxu0 0
  %3664 = vmatprep.subr.bf16.mxu0 0
  %3665 = vmatpush1.bf16.msra.mxu0 0
  %3666 = vmatprep.subr.bf16.mxu0 0
  %3667 = vmatpush1.bf16.msra.mxu0 0
  %3668 = vmatprep.subr.bf16.mxu0 0
  %3669 = vmatpush1.bf16.msra.mxu0 0
  %3670 = vmatprep.subr.bf16.mxu0 0
  %3671 = vmatpush1.bf16.msra.mxu0 0
  %3672 = vmatprep.subr.bf16.mxu0 0
  %3673 = vmatpush1.bf16.msra.mxu0 0
  %3674 = vmatprep.subr.bf16.mxu0 0
  %3675 = vmatpush1.bf16.msra.mxu0 0
  %3676 = vmatprep.subr.bf16.mxu0 0
  %3677 = vmatpush1.bf16.msra.mxu0 0
  %3678 = vmatprep.mubr.bf16.mxu0 0
  %3679 = vmatmul.mubr.bf16.gmra.mrb[0].mxu0 %v3623
  %v3680 = vpop.f32.mrb[0].mxu0
  %v3681 = vadd.f32 %v3615, %v3680
  %v3682 = vpop.f32.mrb[0].mxu0
  %v3683 = vpop.f32.mrb[0].mxu0
  %v3684 = vadd.f32 %v3615, %v3683
  %v3685 = vpop.f32.mrb[0].mxu0
  %3686 = vmatprep.mubr.bf16.mxu0 0
  %3687 = vmatmul.mubr.bf16.gmra.mrb[0].mxu0 %v3626
  %v3688 = vpop.f32.mrb[0].mxu0
  %v3689 = vadd.f32 %v3615, %v3688
  %v3690 = vpop.f32.mrb[0].mxu0
  %v3691 = vpop.f32.mrb[0].mxu0
  %v3692 = vadd.f32 %v3615, %v3691
  %v3693 = vpop.f32.mrb[0].mxu0
  %3694 = vmatprep.mubr.bf16.mxu0 0
  %3695 = vmatmul.mubr.bf16.gmra.mrb[0].mxu0 %v3629
  %v3696 = vpop.f32.mrb[0].mxu0
  %v3697 = vadd.f32 %v3615, %v3696
  %v3698 = vpop.f32.mrb[0].mxu0
  %v3699 = vpop.f32.mrb[0].mxu0
  %v3700 = vadd.f32 %v3615, %v3699
  %v3701 = vpop.f32.mrb[0].mxu0
  %3702 = vmatprep.mubr.bf16.mxu0 0
  %3703 = vmatmul.mubr.bf16.gmra.mrb[0].mxu0 %v3632
  %v3704 = vpop.f32.mrb[0].mxu0
  %v3705 = vadd.f32 %v3615, %v3704
  %v3706 = vpop.f32.mrb[0].mxu0
  %v3707 = vpop.f32.mrb[0].mxu0
  %v3708 = vadd.f32 %v3615, %v3707
  %v3709 = vpop.f32.mrb[0].mxu0
  %3710 = vmatprep.mubr.bf16.mxu0 0
  %3711 = vmatmul.mubr.bf16.gmra.mrb[0].mxu0 %v3635
  %v3712 = vpop.f32.mrb[0].mxu0
  %v3713 = vadd.f32 %v3615, %v3712
  %v3714 = vpop.f32.mrb[0].mxu0
  %v3715 = vpop.f32.mrb[0].mxu0
  %v3716 = vadd.f32 %v3615, %v3715
  %v3717 = vpop.f32.mrb[0].mxu0
  %3718 = vmatprep.mubr.bf16.mxu0 0
  %3719 = vmatmul.mubr.bf16.gmra.mrb[0].mxu0 %v3638
  %v3720 = vpop.f32.mrb[0].mxu0
  %v3721 = vadd.f32 %v3615, %v3720
  %v3722 = vpop.f32.mrb[0].mxu0
  %v3723 = vpop.f32.mrb[0].mxu0
  %v3724 = vadd.f32 %v3615, %v3723
  %v3725 = vpop.f32.mrb[0].mxu0
  %3726 = vmatprep.mubr.bf16.mxu0 0
  %3727 = vmatmul.mubr.bf16.gmra.mrb[0].mxu0 %v3641
  %v3728 = vpop.f32.mrb[0].mxu0
  %v3729 = vadd.f32 %v3615, %v3728
  %v3730 = vpop.f32.mrb[0].mxu0
  %v3731 = vpop.f32.mrb[0].mxu0
  %v3732 = vadd.f32 %v3615, %v3731
  %v3733 = vpop.f32.mrb[0].mxu0
  %3734 = vmatprep.mubr.bf16.mxu0 0
  %3735 = vmatmul.mubr.bf16.gmra.mrb[0].mxu0 %v3644
  %v3736 = vpop.f32.mrb[0].mxu0
  %v3737 = vadd.f32 %v3615, %v3736
  %v3738 = vpop.f32.mrb[0].mxu0
  %v3739 = vpop.f32.mrb[0].mxu0
  %v3740 = vadd.f32 %v3615, %v3739
  %v3741 = vpop.f32.mrb[0].mxu0
  %3742 = vdwg.mxu0
  %v3743 = vmul.f32 %v3681, %v3681
  %v3744 = vmul.f32 %v3684, %v3684
  %v3745 = vmul.f32 %v3689, %v3689
  %v3746 = vmul.f32 %v3692, %v3692
  %v3747 = vmul.f32 %v3697, %v3697
  %v3748 = vmul.f32 %v3700, %v3700
  %v3749 = vmul.f32 %v3705, %v3705
  %v3750 = vmul.f32 %v3708, %v3708
  %v3751 = vmul.f32 %v3713, %v3713
  %v3752 = vmul.f32 %v3716, %v3716
  %v3753 = vmul.f32 %v3721, %v3721
  %v3754 = vmul.f32 %v3724, %v3724
  %v3755 = vmul.f32 %v3729, %v3729
  %v3756 = vmul.f32 %v3732, %v3732
  %v3757 = vmul.f32 %v3737, %v3737
  %v3758 = vmul.f32 %v3740, %v3740
  %3775 = vrot.lane.b32.xlu0 %v3743, 16
  %v3776 = vpop.permute.xlu0 %3775
  %3777 = vrot.lane.b32.xlu0 %v3744, 16
  %v3778 = vpop.permute.xlu0 %3777
  %3779 = vrot.lane.b32.xlu0 %v3745, 16
  %v3780 = vpop.permute.xlu0 %3779
  %3781 = vrot.lane.b32.xlu0 %v3746, 16
  %v3782 = vpop.permute.xlu0 %3781
  %3783 = vrot.lane.b32.xlu0 %v3747, 16
  %v3784 = vpop.permute.xlu0 %3783
  %3785 = vrot.lane.b32.xlu0 %v3748, 16
  %v3786 = vpop.permute.xlu0 %3785
  %3787 = vrot.lane.b32.xlu0 %v3749, 16
  %v3788 = vpop.permute.xlu0 %3787
  %3789 = vrot.lane.b32.xlu0 %v3750, 16
  %v3790 = vpop.permute.xlu0 %3789
  %3791 = vrot.lane.b32.xlu0 %v3751, 16
  %v3792 = vpop.permute.xlu0 %3791
  %3793 = vrot.lane.b32.xlu0 %v3752, 16
  %v3794 = vpop.permute.xlu0 %3793
  %3795 = vrot.lane.b32.xlu0 %v3753, 16
  %v3796 = vpop.permute.xlu0 %3795
  %3797 = vrot.lane.b32.xlu0 %v3754, 16
  %v3798 = vpop.permute.xlu0 %3797
  %3799 = vrot.lane.b32.xlu0 %v3755, 16
  %v3800 = vpop.permute.xlu0 %3799
  %3801 = vrot.lane.b32.xlu0 %v3756, 16
  %v3802 = vpop.permute.xlu0 %3801
  %3803 = vrot.lane.b32.xlu0 %v3757, 16
  %v3804 = vpop.permute.xlu0 %3803
  %3805 = vrot.lane.b32.xlu0 %v3758, 16
  %v3806 = vpop.permute.xlu0 %3805
  %v3823 = vsel %vm274, %v3681, %v3776
  %v3824 = vsel %vm274, %v3684, %v3778
  %v3825 = vsel %vm274, %v3689, %v3780
  %v3826 = vsel %vm274, %v3692, %v3782
  %v3827 = vsel %vm274, %v3697, %v3784
  %v3828 = vsel %vm274, %v3700, %v3786
  %v3829 = vsel %vm274, %v3705, %v3788
  %v3830 = vsel %vm274, %v3708, %v3790
  %v3831 = vsel %vm274, %v3713, %v3792
  %v3832 = vsel %vm274, %v3716, %v3794
  %v3833 = vsel %vm274, %v3721, %v3796
  %v3834 = vsel %vm274, %v3724, %v3798
  %v3835 = vsel %vm274, %v3729, %v3800
  %v3836 = vsel %vm274, %v3732, %v3802
  %v3837 = vsel %vm274, %v3737, %v3804
  %v3838 = vsel %vm274, %v3740, %v3806
  %v3839 = vsel %vm72, %v3823, 0.0
  %v3840 = vsel %vm72, %v3824, 0.0
  %v3841 = vadd.f32 %v3839, %v3840
  %v3842 = vsel %vm72, %v3825, 0.0
  %v3843 = vadd.f32 %v3841, %v3842
  %v3844 = vsel %vm72, %v3826, 0.0
  %v3845 = vadd.f32 %v3843, %v3844
  %v3846 = vsel %vm72, %v3827, 0.0
  %v3847 = vadd.f32 %v3845, %v3846
  %v3848 = vsel %vm72, %v3828, 0.0
  %v3849 = vadd.f32 %v3847, %v3848
  %v3850 = vsel %vm72, %v3829, 0.0
  %v3851 = vadd.f32 %v3849, %v3850
  %v3852 = vsel %vm72, %v3830, 0.0
  %v3853 = vadd.f32 %v3851, %v3852
  %v3854 = vsel %vm72, %v3831, 0.0
  %v3855 = vadd.f32 %v3853, %v3854
  %v3856 = vsel %vm72, %v3832, 0.0
  %v3857 = vadd.f32 %v3855, %v3856
  %v3858 = vsel %vm72, %v3833, 0.0
  %v3859 = vadd.f32 %v3857, %v3858
  %v3860 = vsel %vm72, %v3834, 0.0
  %v3861 = vadd.f32 %v3859, %v3860
  %v3862 = vsel %vm72, %v3835, 0.0
  %v3863 = vadd.f32 %v3861, %v3862
  %v3864 = vsel %vm72, %v3836, 0.0
  %v3865 = vadd.f32 %v3863, %v3864
  %v3866 = vsel %vm72, %v3837, 0.0
  %v3867 = vadd.f32 %v3865, %v3866
  %v3868 = vsel %vm72, %v3838, 0.0
  %v3869 = vadd.f32 %v3867, %v3868
  %v3870 = vrot.slane %v3869, 4
  %v3871 = vadd.f32 %v3869, %v3870
  %v3872 = vrot.slane %v3871, 2
  %v3873 = vadd.f32 %v3871, %v3872
  %v3874 = vrot.slane %v3873, 1
  %v3875 = vadd.f32 %v3873, %v3874
  %v3876 = vmul.f32 %v3875, %v328
  %v3877 = vmul.f32 %v3876, %v3876
  %3879 = vrot.lane.b32.xlu0 %v3877, 16
  %v3880 = vpop.permute.xlu0 %3879
  %v3882 = vsub.f32 %v3876, %v3880
  %v3883 = vmax.f32 %v3882, 0.0
  %v3884 = vadd.f32 %v3883, 1e-05
  %v3885 = vrsqrt.pop %v3884
  %v3887 = vrot.slane %v3885, 3
  %3888 = vrot.lane.b32.xlu0 %v3887, 112
  %v3889 = vpop.permute.xlu0 %3888
  %v3891 = vmul.f32 %v25, %v3889
  %v3892 = vmul.f32 %v3876, %v3891
  %v3894 = vrot.slane %v3892, 2
  %v3896 = vsub.f32 %v26, %v3894
  %v3897 = vlaneseq
  %v3898 = vshrl.u32 %v3897, 7
  %v3899 = vsub.s32 5, %v3898
  %v3900 = vrot.slane %v3891, %v3899
  %v3901 = vmul.f32 %v3681, %v3900
  %v3902 = vmul.f32 %v3684, %v3900
  %v3903 = vmul.f32 %v3689, %v3900
  %v3904 = vmul.f32 %v3692, %v3900
  %v3905 = vmul.f32 %v3697, %v3900
  %v3906 = vmul.f32 %v3700, %v3900
  %v3907 = vmul.f32 %v3705, %v3900
  %v3908 = vmul.f32 %v3708, %v3900
  %v3909 = vmul.f32 %v3713, %v3900
  %v3910 = vmul.f32 %v3716, %v3900
  %v3911 = vmul.f32 %v3721, %v3900
  %v3912 = vmul.f32 %v3724, %v3900
  %v3913 = vmul.f32 %v3729, %v3900
  %v3914 = vmul.f32 %v3732, %v3900
  %v3915 = vmul.f32 %v3737, %v3900
  %v3916 = vmul.f32 %v3740, %v3900
  %v3917 = vlaneseq
  %v3918 = vshrl.u32 %v3917, 7
  %v3919 = vsub.s32 3, %v3918
  %v3920 = vrot.slane %v3896, %v3919
  %v3921 = vadd.f32 %v3901, %v3920
  %v3922 = vadd.f32 %v3902, %v3920
  %v3923 = vadd.f32 %v3903, %v3920
  %v3924 = vadd.f32 %v3904, %v3920
  %v3925 = vadd.f32 %v3905, %v3920
  %v3926 = vadd.f32 %v3906, %v3920
  %v3927 = vadd.f32 %v3907, %v3920
  %v3928 = vadd.f32 %v3908, %v3920
  %v3929 = vadd.f32 %v3909, %v3920
  %v3930 = vadd.f32 %v3910, %v3920
  %v3931 = vadd.f32 %v3911, %v3920
  %v3932 = vadd.f32 %v3912, %v3920
  %v3933 = vadd.f32 %v3913, %v3920
  %v3934 = vadd.f32 %v3914, %v3920
  %v3935 = vadd.f32 %v3915, %v3920
  %v3936 = vadd.f32 %v3916, %v3920
  %v3937 = vmax.f32 %v3921, 0.0
  %v3938 = vmax.f32 %v3922, 0.0
  %v3939 = vmax.f32 %v3923, 0.0
  %v3940 = vmax.f32 %v3924, 0.0
  %v3941 = vmax.f32 %v3925, 0.0
  %v3942 = vmax.f32 %v3926, 0.0
  %v3943 = vmax.f32 %v3927, 0.0
  %v3944 = vmax.f32 %v3928, 0.0
  %v3945 = vmax.f32 %v3929, 0.0
  %v3946 = vmax.f32 %v3930, 0.0
  %v3947 = vmax.f32 %v3931, 0.0
  %v3948 = vmax.f32 %v3932, 0.0
  %v3949 = vmax.f32 %v3933, 0.0
  %v3950 = vmax.f32 %v3934, 0.0
  %v3951 = vmax.f32 %v3935, 0.0
  %v3952 = vmax.f32 %v3936, 0.0
  %v3953 = vpack.c.bf16 %v3938, %v3937
  %v3954 = vpack.c.bf16 %v3940, %v3939
  %v3955 = vpack.c.bf16 %v3942, %v3941
  %v3956 = vpack.c.bf16 %v3944, %v3943
  %v3957 = vpack.c.bf16 %v3946, %v3945
  %v3958 = vpack.c.bf16 %v3948, %v3947
  %v3959 = vpack.c.bf16 %v3950, %v3949
  %v3960 = vpack.c.bf16 %v3952, %v3951
  %v3962 = vsel %vm274, %v3953, 0
  %v3965 = vsel %vm274, %v3954, 0
  %v3968 = vsel %vm274, %v3955, 0
  %v3971 = vsel %vm274, %v3956, 0
  %v3974 = vsel %vm274, %v3957, 0
  %v3977 = vsel %vm274, %v3958, 0
  %v3980 = vsel %vm274, %v3959, 0
  %v3983 = vsel %vm274, %v3960, 0
  %3985 = vmatprep.subr.bf16.mxu0 0
  %3986 = vmatpush1.bf16.msra.mxu0 %v3620
  %3987 = vmatprep.subr.bf16.mxu0 0
  %3988 = vmatpush1.bf16.msra.mxu0 0
  %3989 = vmatprep.subr.bf16.mxu0 0
  %3990 = vmatpush1.bf16.msra.mxu0 0
  %3991 = vmatprep.subr.bf16.mxu0 0
  %3992 = vmatpush1.bf16.msra.mxu0 0
  %3993 = vmatprep.subr.bf16.mxu0 0
  %3994 = vmatpush1.bf16.msra.mxu0 0
  %3995 = vmatprep.subr.bf16.mxu0 0
  %3996 = vmatpush1.bf16.msra.mxu0 0
  %3997 = vmatprep.subr.bf16.mxu0 0
  %3998 = vmatpush1.bf16.msra.mxu0 0
  %3999 = vmatprep.subr.bf16.mxu0 0
  %4000 = vmatpush1.bf16.msra.mxu0 0
  %4001 = vmatprep.subr.bf16.mxu0 0
  %4002 = vmatpush1.bf16.msra.mxu0 0
  %4003 = vmatprep.subr.bf16.mxu0 0
  %4004 = vmatpush1.bf16.msra.mxu0 0
  %4005 = vmatprep.subr.bf16.mxu0 0
  %4006 = vmatpush1.bf16.msra.mxu0 0
  %4007 = vmatprep.subr.bf16.mxu0 0
  %4008 = vmatpush1.bf16.msra.mxu0 0
  %4009 = vmatprep.subr.bf16.mxu0 0
  %4010 = vmatpush1.bf16.msra.mxu0 0
  %4011 = vmatprep.subr.bf16.mxu0 0
  %4012 = vmatpush1.bf16.msra.mxu0 0
  %4013 = vmatprep.subr.bf16.mxu0 0
  %4014 = vmatpush1.bf16.msra.mxu0 0
  %4015 = vmatprep.subr.bf16.mxu0 0
  %4016 = vmatpush1.bf16.msra.mxu0 0
  %4017 = vmatprep.mubr.bf16.mxu0 0
  %4018 = vmatmul.mubr.bf16.gmra.mrb[0].mxu0 %v3962
  %v4019 = vpop.f32.mrb[0].mxu0
  %v4020 = vadd.f32 %v3615, %v4019
  %v4021 = vpop.f32.mrb[0].mxu0
  %v4022 = vpop.f32.mrb[0].mxu0
  %v4023 = vadd.f32 %v3615, %v4022
  %v4024 = vpop.f32.mrb[0].mxu0
  %4025 = vmatprep.mubr.bf16.mxu0 0
  %4026 = vmatmul.mubr.bf16.gmra.mrb[0].mxu0 %v3965
  %v4027 = vpop.f32.mrb[0].mxu0
  %v4028 = vadd.f32 %v3615, %v4027
  %v4029 = vpop.f32.mrb[0].mxu0
  %v4030 = vpop.f32.mrb[0].mxu0
  %v4031 = vadd.f32 %v3615, %v4030
  %v4032 = vpop.f32.mrb[0].mxu0
  %4033 = vmatprep.mubr.bf16.mxu0 0
  %4034 = vmatmul.mubr.bf16.gmra.mrb[0].mxu0 %v3968
  %v4035 = vpop.f32.mrb[0].mxu0
  %v4036 = vadd.f32 %v3615, %v4035
  %v4037 = vpop.f32.mrb[0].mxu0
  %v4038 = vpop.f32.mrb[0].mxu0
  %v4039 = vadd.f32 %v3615, %v4038
  %v4040 = vpop.f32.mrb[0].mxu0
  %4041 = vmatprep.mubr.bf16.mxu0 0
  %4042 = vmatmul.mubr.bf16.gmra.mrb[0].mxu0 %v3971
  %v4043 = vpop.f32.mrb[0].mxu0
  %v4044 = vadd.f32 %v3615, %v4043
  %v4045 = vpop.f32.mrb[0].mxu0
  %v4046 = vpop.f32.mrb[0].mxu0
  %v4047 = vadd.f32 %v3615, %v4046
  %v4048 = vpop.f32.mrb[0].mxu0
  %4049 = vmatprep.mubr.bf16.mxu0 0
  %4050 = vmatmul.mubr.bf16.gmra.mrb[0].mxu0 %v3974
  %v4051 = vpop.f32.mrb[0].mxu0
  %v4052 = vadd.f32 %v3615, %v4051
  %v4053 = vpop.f32.mrb[0].mxu0
  %v4054 = vpop.f32.mrb[0].mxu0
  %v4055 = vadd.f32 %v3615, %v4054
  %v4056 = vpop.f32.mrb[0].mxu0
  %4057 = vmatprep.mubr.bf16.mxu0 0
  %4058 = vmatmul.mubr.bf16.gmra.mrb[0].mxu0 %v3977
  %v4059 = vpop.f32.mrb[0].mxu0
  %v4060 = vadd.f32 %v3615, %v4059
  %v4061 = vpop.f32.mrb[0].mxu0
  %v4062 = vpop.f32.mrb[0].mxu0
  %v4063 = vadd.f32 %v3615, %v4062
  %v4064 = vpop.f32.mrb[0].mxu0
  %4065 = vmatprep.mubr.bf16.mxu0 0
  %4066 = vmatmul.mubr.bf16.gmra.mrb[0].mxu0 %v3980
  %v4067 = vpop.f32.mrb[0].mxu0
  %v4068 = vadd.f32 %v3615, %v4067
  %v4069 = vpop.f32.mrb[0].mxu0
  %v4070 = vpop.f32.mrb[0].mxu0
  %v4071 = vadd.f32 %v3615, %v4070
  %v4072 = vpop.f32.mrb[0].mxu0
  %4073 = vmatprep.mubr.bf16.mxu0 0
  %4074 = vmatmul.mubr.bf16.gmra.mrb[0].mxu0 %v3983
  %v4075 = vpop.f32.mrb[0].mxu0
  %v4076 = vadd.f32 %v3615, %v4075
  %v4077 = vpop.f32.mrb[0].mxu0
  %v4078 = vpop.f32.mrb[0].mxu0
  %v4079 = vadd.f32 %v3615, %v4078
  %v4080 = vpop.f32.mrb[0].mxu0
  %4081 = vdwg.mxu0
  %v4082 = vmax.f32 %v4020, 0.0
  %v4083 = vmax.f32 %v4023, 0.0
  %v4084 = vmax.f32 %v4028, 0.0
  %v4085 = vmax.f32 %v4031, 0.0
  %v4086 = vmax.f32 %v4036, 0.0
  %v4087 = vmax.f32 %v4039, 0.0
  %v4088 = vmax.f32 %v4044, 0.0
  %v4089 = vmax.f32 %v4047, 0.0
  %v4090 = vmax.f32 %v4052, 0.0
  %v4091 = vmax.f32 %v4055, 0.0
  %v4092 = vmax.f32 %v4060, 0.0
  %v4093 = vmax.f32 %v4063, 0.0
  %v4094 = vmax.f32 %v4068, 0.0
  %v4095 = vmax.f32 %v4071, 0.0
  %v4096 = vmax.f32 %v4076, 0.0
  %v4097 = vmax.f32 %v4079, 0.0
  %v4098 = vmul.f32 %v4082, %v4082
  %v4099 = vmul.f32 %v4083, %v4083
  %v4100 = vmul.f32 %v4084, %v4084
  %v4101 = vmul.f32 %v4085, %v4085
  %v4102 = vmul.f32 %v4086, %v4086
  %v4103 = vmul.f32 %v4087, %v4087
  %v4104 = vmul.f32 %v4088, %v4088
  %v4105 = vmul.f32 %v4089, %v4089
  %v4106 = vmul.f32 %v4090, %v4090
  %v4107 = vmul.f32 %v4091, %v4091
  %v4108 = vmul.f32 %v4092, %v4092
  %v4109 = vmul.f32 %v4093, %v4093
  %v4110 = vmul.f32 %v4094, %v4094
  %v4111 = vmul.f32 %v4095, %v4095
  %v4112 = vmul.f32 %v4096, %v4096
  %v4113 = vmul.f32 %v4097, %v4097
  %4130 = vrot.lane.b32.xlu0 %v4098, 16
  %v4131 = vpop.permute.xlu0 %4130
  %4132 = vrot.lane.b32.xlu0 %v4099, 16
  %v4133 = vpop.permute.xlu0 %4132
  %4134 = vrot.lane.b32.xlu0 %v4100, 16
  %v4135 = vpop.permute.xlu0 %4134
  %4136 = vrot.lane.b32.xlu0 %v4101, 16
  %v4137 = vpop.permute.xlu0 %4136
  %4138 = vrot.lane.b32.xlu0 %v4102, 16
  %v4139 = vpop.permute.xlu0 %4138
  %4140 = vrot.lane.b32.xlu0 %v4103, 16
  %v4141 = vpop.permute.xlu0 %4140
  %4142 = vrot.lane.b32.xlu0 %v4104, 16
  %v4143 = vpop.permute.xlu0 %4142
  %4144 = vrot.lane.b32.xlu0 %v4105, 16
  %v4145 = vpop.permute.xlu0 %4144
  %4146 = vrot.lane.b32.xlu0 %v4106, 16
  %v4147 = vpop.permute.xlu0 %4146
  %4148 = vrot.lane.b32.xlu0 %v4107, 16
  %v4149 = vpop.permute.xlu0 %4148
  %4150 = vrot.lane.b32.xlu0 %v4108, 16
  %v4151 = vpop.permute.xlu0 %4150
  %4152 = vrot.lane.b32.xlu0 %v4109, 16
  %v4153 = vpop.permute.xlu0 %4152
  %4154 = vrot.lane.b32.xlu0 %v4110, 16
  %v4155 = vpop.permute.xlu0 %4154
  %4156 = vrot.lane.b32.xlu0 %v4111, 16
  %v4157 = vpop.permute.xlu0 %4156
  %4158 = vrot.lane.b32.xlu0 %v4112, 16
  %v4159 = vpop.permute.xlu0 %4158
  %4160 = vrot.lane.b32.xlu0 %v4113, 16
  %v4161 = vpop.permute.xlu0 %4160
  %v4178 = vsel %vm274, %v4082, %v4131
  %v4179 = vsel %vm274, %v4083, %v4133
  %v4180 = vsel %vm274, %v4084, %v4135
  %v4181 = vsel %vm274, %v4085, %v4137
  %v4182 = vsel %vm274, %v4086, %v4139
  %v4183 = vsel %vm274, %v4087, %v4141
  %v4184 = vsel %vm274, %v4088, %v4143
  %v4185 = vsel %vm274, %v4089, %v4145
  %v4186 = vsel %vm274, %v4090, %v4147
  %v4187 = vsel %vm274, %v4091, %v4149
  %v4188 = vsel %vm274, %v4092, %v4151
  %v4189 = vsel %vm274, %v4093, %v4153
  %v4190 = vsel %vm274, %v4094, %v4155
  %v4191 = vsel %vm274, %v4095, %v4157
  %v4192 = vsel %vm274, %v4096, %v4159
  %v4193 = vsel %vm274, %v4097, %v4161
  %v4194 = vsel %vm72, %v4178, 0.0
  %v4195 = vsel %vm72, %v4179, 0.0
  %v4196 = vadd.f32 %v4194, %v4195
  %v4197 = vsel %vm72, %v4180, 0.0
  %v4198 = vadd.f32 %v4196, %v4197
  %v4199 = vsel %vm72, %v4181, 0.0
  %v4200 = vadd.f32 %v4198, %v4199
  %v4201 = vsel %vm72, %v4182, 0.0
  %v4202 = vadd.f32 %v4200, %v4201
  %v4203 = vsel %vm72, %v4183, 0.0
  %v4204 = vadd.f32 %v4202, %v4203
  %v4205 = vsel %vm72, %v4184, 0.0
  %v4206 = vadd.f32 %v4204, %v4205
  %v4207 = vsel %vm72, %v4185, 0.0
  %v4208 = vadd.f32 %v4206, %v4207
  %v4209 = vsel %vm72, %v4186, 0.0
  %v4210 = vadd.f32 %v4208, %v4209
  %v4211 = vsel %vm72, %v4187, 0.0
  %v4212 = vadd.f32 %v4210, %v4211
  %v4213 = vsel %vm72, %v4188, 0.0
  %v4214 = vadd.f32 %v4212, %v4213
  %v4215 = vsel %vm72, %v4189, 0.0
  %v4216 = vadd.f32 %v4214, %v4215
  %v4217 = vsel %vm72, %v4190, 0.0
  %v4218 = vadd.f32 %v4216, %v4217
  %v4219 = vsel %vm72, %v4191, 0.0
  %v4220 = vadd.f32 %v4218, %v4219
  %v4221 = vsel %vm72, %v4192, 0.0
  %v4222 = vadd.f32 %v4220, %v4221
  %v4223 = vsel %vm72, %v4193, 0.0
  %v4224 = vadd.f32 %v4222, %v4223
  %v4225 = vrot.slane %v4224, 4
  %v4226 = vadd.f32 %v4224, %v4225
  %v4227 = vrot.slane %v4226, 2
  %v4228 = vadd.f32 %v4226, %v4227
  %v4229 = vrot.slane %v4228, 1
  %v4230 = vadd.f32 %v4228, %v4229
  %v4231 = vmul.f32 %v4230, %v328
  %v4232 = vmul.f32 %v4231, %v4231
  %4234 = vrot.lane.b32.xlu0 %v4232, 16
  %v4235 = vpop.permute.xlu0 %4234
  %v4237 = vsub.f32 %v4231, %v4235
  %v4238 = vmax.f32 %v4237, 0.0
  %v4239 = vadd.f32 %v4238, 1e-05
  %v4240 = vrsqrt.pop %v4239
  %v4242 = vrot.slane %v4240, 3
  %4243 = vrot.lane.b32.xlu0 %v4242, 112
  %v4244 = vpop.permute.xlu0 %4243
  %v4246 = vmul.f32 %v25, %v4244
  %v4247 = vmul.f32 %v4231, %v4246
  %v4249 = vrot.slane %v4247, 2
  %v4251 = vsub.f32 %v26, %v4249
  %v4252 = vlaneseq
  %v4253 = vshrl.u32 %v4252, 7
  %v4254 = vsub.s32 5, %v4253
  %v4255 = vrot.slane %v4246, %v4254
  %v4256 = vmul.f32 %v4082, %v4255
  %v4257 = vmul.f32 %v4083, %v4255
  %v4258 = vmul.f32 %v4084, %v4255
  %v4259 = vmul.f32 %v4085, %v4255
  %v4260 = vmul.f32 %v4086, %v4255
  %v4261 = vmul.f32 %v4087, %v4255
  %v4262 = vmul.f32 %v4088, %v4255
  %v4263 = vmul.f32 %v4089, %v4255
  %v4264 = vmul.f32 %v4090, %v4255
  %v4265 = vmul.f32 %v4091, %v4255
  %v4266 = vmul.f32 %v4092, %v4255
  %v4267 = vmul.f32 %v4093, %v4255
  %v4268 = vmul.f32 %v4094, %v4255
  %v4269 = vmul.f32 %v4095, %v4255
  %v4270 = vmul.f32 %v4096, %v4255
  %v4271 = vmul.f32 %v4097, %v4255
  %v4272 = vlaneseq
  %v4273 = vshrl.u32 %v4272, 7
  %v4274 = vsub.s32 3, %v4273
  %v4275 = vrot.slane %v4251, %v4274
  %v4276 = vadd.f32 %v4256, %v4275
  %v4277 = vadd.f32 %v4257, %v4275
  %v4278 = vadd.f32 %v4258, %v4275
  %v4279 = vadd.f32 %v4259, %v4275
  %v4280 = vadd.f32 %v4260, %v4275
  %v4281 = vadd.f32 %v4261, %v4275
  %v4282 = vadd.f32 %v4262, %v4275
  %v4283 = vadd.f32 %v4263, %v4275
  %v4284 = vadd.f32 %v4264, %v4275
  %v4285 = vadd.f32 %v4265, %v4275
  %v4286 = vadd.f32 %v4266, %v4275
  %v4287 = vadd.f32 %v4267, %v4275
  %v4288 = vadd.f32 %v4268, %v4275
  %v4289 = vadd.f32 %v4269, %v4275
  %v4290 = vadd.f32 %v4270, %v4275
  %v4291 = vadd.f32 %v4271, %v4275
  %s4292 = scalar_lea.vmem %s2, 56
  %v4293 = vld [vmem:[%s4292] sm:$0xf]
  %v4294 = vld [vmem:[%s4292 + $0x4] sm:$0xf]
  %v4295 = vlaneseq
  %v4296 = vshrl.u32 %v4295, 7
  %v4297 = vsub.s32 6, %v4296
  %v4298 = vrot.slane %v26, %v4297
  %v4301 = vunpack.c.l.b16 %v4293
  %v4302 = vunpack.c.l.b16 %v4294
  %v4303 = vpack.c.b16 %v4302, %v4301
  %4305 = vmatprep.subr.bf16.mxu0 0
  %4306 = vmatpush1.bf16.msra.mxu0 %v4303
  %4307 = vmatprep.subr.bf16.mxu0 0
  %4308 = vmatpush1.bf16.msra.mxu0 0
  %4309 = vmatprep.subr.bf16.mxu0 0
  %4310 = vmatpush1.bf16.msra.mxu0 0
  %4311 = vmatprep.subr.bf16.mxu0 0
  %4312 = vmatpush1.bf16.msra.mxu0 0
  %4313 = vmatprep.subr.bf16.mxu0 0
  %4314 = vmatpush1.bf16.msra.mxu0 0
  %4315 = vmatprep.subr.bf16.mxu0 0
  %4316 = vmatpush1.bf16.msra.mxu0 0
  %4317 = vmatprep.subr.bf16.mxu0 0
  %4318 = vmatpush1.bf16.msra.mxu0 0
  %4319 = vmatprep.subr.bf16.mxu0 0
  %4320 = vmatpush1.bf16.msra.mxu0 0
  %4321 = vmatprep.subr.bf16.mxu0 0
  %4322 = vmatpush1.bf16.msra.mxu0 0
  %4323 = vmatprep.subr.bf16.mxu0 0
  %4324 = vmatpush1.bf16.msra.mxu0 0
  %4325 = vmatprep.subr.bf16.mxu0 0
  %4326 = vmatpush1.bf16.msra.mxu0 0
  %4327 = vmatprep.subr.bf16.mxu0 0
  %4328 = vmatpush1.bf16.msra.mxu0 0
  %4329 = vmatprep.subr.bf16.mxu0 0
  %4330 = vmatpush1.bf16.msra.mxu0 0
  %4331 = vmatprep.subr.bf16.mxu0 0
  %4332 = vmatpush1.bf16.msra.mxu0 0
  %4333 = vmatprep.subr.bf16.mxu0 0
  %4334 = vmatpush1.bf16.msra.mxu0 0
  %4335 = vmatprep.subr.bf16.mxu0 0
  %4336 = vmatpush1.bf16.msra.mxu0 0
  %4337 = vmatprep.mubr.bf16.mxu0 0
  %4338 = vmatmul.mubr.bf16.gmra.mrb[0].mxu0 %v3623
  %v4339 = vpop.f32.mrb[0].mxu0
  %v4340 = vadd.f32 %v4298, %v4339
  %v4341 = vpop.f32.mrb[0].mxu0
  %v4342 = vpop.f32.mrb[0].mxu0
  %v4343 = vadd.f32 %v4298, %v4342
  %v4344 = vpop.f32.mrb[0].mxu0
  %4345 = vmatprep.mubr.bf16.mxu0 0
  %4346 = vmatmul.mubr.bf16.gmra.mrb[0].mxu0 %v3626
  %v4347 = vpop.f32.mrb[0].mxu0
  %v4348 = vadd.f32 %v4298, %v4347
  %v4349 = vpop.f32.mrb[0].mxu0
  %v4350 = vpop.f32.mrb[0].mxu0
  %v4351 = vadd.f32 %v4298, %v4350
  %v4352 = vpop.f32.mrb[0].mxu0
  %4353 = vmatprep.mubr.bf16.mxu0 0
  %4354 = vmatmul.mubr.bf16.gmra.mrb[0].mxu0 %v3629
  %v4355 = vpop.f32.mrb[0].mxu0
  %v4356 = vadd.f32 %v4298, %v4355
  %v4357 = vpop.f32.mrb[0].mxu0
  %v4358 = vpop.f32.mrb[0].mxu0
  %v4359 = vadd.f32 %v4298, %v4358
  %v4360 = vpop.f32.mrb[0].mxu0
  %4361 = vmatprep.mubr.bf16.mxu0 0
  %4362 = vmatmul.mubr.bf16.gmra.mrb[0].mxu0 %v3632
  %v4363 = vpop.f32.mrb[0].mxu0
  %v4364 = vadd.f32 %v4298, %v4363
  %v4365 = vpop.f32.mrb[0].mxu0
  %v4366 = vpop.f32.mrb[0].mxu0
  %v4367 = vadd.f32 %v4298, %v4366
  %v4368 = vpop.f32.mrb[0].mxu0
  %4369 = vmatprep.mubr.bf16.mxu0 0
  %4370 = vmatmul.mubr.bf16.gmra.mrb[0].mxu0 %v3635
  %v4371 = vpop.f32.mrb[0].mxu0
  %v4372 = vadd.f32 %v4298, %v4371
  %v4373 = vpop.f32.mrb[0].mxu0
  %v4374 = vpop.f32.mrb[0].mxu0
  %v4375 = vadd.f32 %v4298, %v4374
  %v4376 = vpop.f32.mrb[0].mxu0
  %4377 = vmatprep.mubr.bf16.mxu0 0
  %4378 = vmatmul.mubr.bf16.gmra.mrb[0].mxu0 %v3638
  %v4379 = vpop.f32.mrb[0].mxu0
  %v4380 = vadd.f32 %v4298, %v4379
  %v4381 = vpop.f32.mrb[0].mxu0
  %v4382 = vpop.f32.mrb[0].mxu0
  %v4383 = vadd.f32 %v4298, %v4382
  %v4384 = vpop.f32.mrb[0].mxu0
  %4385 = vmatprep.mubr.bf16.mxu0 0
  %4386 = vmatmul.mubr.bf16.gmra.mrb[0].mxu0 %v3641
  %v4387 = vpop.f32.mrb[0].mxu0
  %v4388 = vadd.f32 %v4298, %v4387
  %v4389 = vpop.f32.mrb[0].mxu0
  %v4390 = vpop.f32.mrb[0].mxu0
  %v4391 = vadd.f32 %v4298, %v4390
  %v4392 = vpop.f32.mrb[0].mxu0
  %4393 = vmatprep.mubr.bf16.mxu0 0
  %4394 = vmatmul.mubr.bf16.gmra.mrb[0].mxu0 %v3644
  %v4395 = vpop.f32.mrb[0].mxu0
  %v4396 = vadd.f32 %v4298, %v4395
  %v4397 = vpop.f32.mrb[0].mxu0
  %v4398 = vpop.f32.mrb[0].mxu0
  %v4399 = vadd.f32 %v4298, %v4398
  %v4400 = vpop.f32.mrb[0].mxu0
  %4401 = vdwg.mxu0
  %v4402 = vmul.f32 %v4340, %v4340
  %v4403 = vmul.f32 %v4343, %v4343
  %v4404 = vmul.f32 %v4348, %v4348
  %v4405 = vmul.f32 %v4351, %v4351
  %v4406 = vmul.f32 %v4356, %v4356
  %v4407 = vmul.f32 %v4359, %v4359
  %v4408 = vmul.f32 %v4364, %v4364
  %v4409 = vmul.f32 %v4367, %v4367
  %v4410 = vmul.f32 %v4372, %v4372
  %v4411 = vmul.f32 %v4375, %v4375
  %v4412 = vmul.f32 %v4380, %v4380
  %v4413 = vmul.f32 %v4383, %v4383
  %v4414 = vmul.f32 %v4388, %v4388
  %v4415 = vmul.f32 %v4391, %v4391
  %v4416 = vmul.f32 %v4396, %v4396
  %v4417 = vmul.f32 %v4399, %v4399
  %4434 = vrot.lane.b32.xlu0 %v4402, 16
  %v4435 = vpop.permute.xlu0 %4434
  %4436 = vrot.lane.b32.xlu0 %v4403, 16
  %v4437 = vpop.permute.xlu0 %4436
  %4438 = vrot.lane.b32.xlu0 %v4404, 16
  %v4439 = vpop.permute.xlu0 %4438
  %4440 = vrot.lane.b32.xlu0 %v4405, 16
  %v4441 = vpop.permute.xlu0 %4440
  %4442 = vrot.lane.b32.xlu0 %v4406, 16
  %v4443 = vpop.permute.xlu0 %4442
  %4444 = vrot.lane.b32.xlu0 %v4407, 16
  %v4445 = vpop.permute.xlu0 %4444
  %4446 = vrot.lane.b32.xlu0 %v4408, 16
  %v4447 = vpop.permute.xlu0 %4446
  %4448 = vrot.lane.b32.xlu0 %v4409, 16
  %v4449 = vpop.permute.xlu0 %4448
  %4450 = vrot.lane.b32.xlu0 %v4410, 16
  %v4451 = vpop.permute.xlu0 %4450
  %4452 = vrot.lane.b32.xlu0 %v4411, 16
  %v4453 = vpop.permute.xlu0 %4452
  %4454 = vrot.lane.b32.xlu0 %v4412, 16
  %v4455 = vpop.permute.xlu0 %4454
  %4456 = vrot.lane.b32.xlu0 %v4413, 16
  %v4457 = vpop.permute.xlu0 %4456
  %4458 = vrot.lane.b32.xlu0 %v4414, 16
  %v4459 = vpop.permute.xlu0 %4458
  %4460 = vrot.lane.b32.xlu0 %v4415, 16
  %v4461 = vpop.permute.xlu0 %4460
  %4462 = vrot.lane.b32.xlu0 %v4416, 16
  %v4463 = vpop.permute.xlu0 %4462
  %4464 = vrot.lane.b32.xlu0 %v4417, 16
  %v4465 = vpop.permute.xlu0 %4464
  %v4482 = vsel %vm274, %v4340, %v4435
  %v4483 = vsel %vm274, %v4343, %v4437
  %v4484 = vsel %vm274, %v4348, %v4439
  %v4485 = vsel %vm274, %v4351, %v4441
  %v4486 = vsel %vm274, %v4356, %v4443
  %v4487 = vsel %vm274, %v4359, %v4445
  %v4488 = vsel %vm274, %v4364, %v4447
  %v4489 = vsel %vm274, %v4367, %v4449
  %v4490 = vsel %vm274, %v4372, %v4451
  %v4491 = vsel %vm274, %v4375, %v4453
  %v4492 = vsel %vm274, %v4380, %v4455
  %v4493 = vsel %vm274, %v4383, %v4457
  %v4494 = vsel %vm274, %v4388, %v4459
  %v4495 = vsel %vm274, %v4391, %v4461
  %v4496 = vsel %vm274, %v4396, %v4463
  %v4497 = vsel %vm274, %v4399, %v4465
  %v4498 = vsel %vm72, %v4482, 0.0
  %v4499 = vsel %vm72, %v4483, 0.0
  %v4500 = vadd.f32 %v4498, %v4499
  %v4501 = vsel %vm72, %v4484, 0.0
  %v4502 = vadd.f32 %v4500, %v4501
  %v4503 = vsel %vm72, %v4485, 0.0
  %v4504 = vadd.f32 %v4502, %v4503
  %v4505 = vsel %vm72, %v4486, 0.0
  %v4506 = vadd.f32 %v4504, %v4505
  %v4507 = vsel %vm72, %v4487, 0.0
  %v4508 = vadd.f32 %v4506, %v4507
  %v4509 = vsel %vm72, %v4488, 0.0
  %v4510 = vadd.f32 %v4508, %v4509
  %v4511 = vsel %vm72, %v4489, 0.0
  %v4512 = vadd.f32 %v4510, %v4511
  %v4513 = vsel %vm72, %v4490, 0.0
  %v4514 = vadd.f32 %v4512, %v4513
  %v4515 = vsel %vm72, %v4491, 0.0
  %v4516 = vadd.f32 %v4514, %v4515
  %v4517 = vsel %vm72, %v4492, 0.0
  %v4518 = vadd.f32 %v4516, %v4517
  %v4519 = vsel %vm72, %v4493, 0.0
  %v4520 = vadd.f32 %v4518, %v4519
  %v4521 = vsel %vm72, %v4494, 0.0
  %v4522 = vadd.f32 %v4520, %v4521
  %v4523 = vsel %vm72, %v4495, 0.0
  %v4524 = vadd.f32 %v4522, %v4523
  %v4525 = vsel %vm72, %v4496, 0.0
  %v4526 = vadd.f32 %v4524, %v4525
  %v4527 = vsel %vm72, %v4497, 0.0
  %v4528 = vadd.f32 %v4526, %v4527
  %v4529 = vrot.slane %v4528, 4
  %v4530 = vadd.f32 %v4528, %v4529
  %v4531 = vrot.slane %v4530, 2
  %v4532 = vadd.f32 %v4530, %v4531
  %v4533 = vrot.slane %v4532, 1
  %v4534 = vadd.f32 %v4532, %v4533
  %v4535 = vmul.f32 %v4534, %v328
  %v4536 = vmul.f32 %v4535, %v4535
  %4538 = vrot.lane.b32.xlu0 %v4536, 16
  %v4539 = vpop.permute.xlu0 %4538
  %v4541 = vsub.f32 %v4535, %v4539
  %v4542 = vmax.f32 %v4541, 0.0
  %v4543 = vadd.f32 %v4542, 1e-05
  %v4544 = vrsqrt.pop %v4543
  %4546 = vrot.lane.b32.xlu0 %v4544, 112
  %v4547 = vpop.permute.xlu0 %4546
  %v4549 = vmul.f32 %v27, %v4547
  %v4550 = vmul.f32 %v4535, %v4549
  %v4552 = vrot.slane %v4550, 6
  %v4554 = vsub.f32 %v27, %v4552
  %v4555 = vlaneseq
  %v4556 = vshrl.u32 %v4555, 7
  %v4557 = vsub.s32 0, %v4556
  %v4558 = vrot.slane %v4549, %v4557
  %v4559 = vmul.f32 %v4340, %v4558
  %v4560 = vmul.f32 %v4343, %v4558
  %v4561 = vmul.f32 %v4348, %v4558
  %v4562 = vmul.f32 %v4351, %v4558
  %v4563 = vmul.f32 %v4356, %v4558
  %v4564 = vmul.f32 %v4359, %v4558
  %v4565 = vmul.f32 %v4364, %v4558
  %v4566 = vmul.f32 %v4367, %v4558
  %v4567 = vmul.f32 %v4372, %v4558
  %v4568 = vmul.f32 %v4375, %v4558
  %v4569 = vmul.f32 %v4380, %v4558
  %v4570 = vmul.f32 %v4383, %v4558
  %v4571 = vmul.f32 %v4388, %v4558
  %v4572 = vmul.f32 %v4391, %v4558
  %v4573 = vmul.f32 %v4396, %v4558
  %v4574 = vmul.f32 %v4399, %v4558
  %v4575 = vlaneseq
  %v4576 = vshrl.u32 %v4575, 7
  %v4577 = vsub.s32 2, %v4576
  %v4578 = vrot.slane %v4554, %v4577
  %v4579 = vadd.f32 %v4559, %v4578
  %v4580 = vadd.f32 %v4560, %v4578
  %v4581 = vadd.f32 %v4561, %v4578
  %v4582 = vadd.f32 %v4562, %v4578
  %v4583 = vadd.f32 %v4563, %v4578
  %v4584 = vadd.f32 %v4564, %v4578
  %v4585 = vadd.f32 %v4565, %v4578
  %v4586 = vadd.f32 %v4566, %v4578
  %v4587 = vadd.f32 %v4567, %v4578
  %v4588 = vadd.f32 %v4568, %v4578
  %v4589 = vadd.f32 %v4569, %v4578
  %v4590 = vadd.f32 %v4570, %v4578
  %v4591 = vadd.f32 %v4571, %v4578
  %v4592 = vadd.f32 %v4572, %v4578
  %v4593 = vadd.f32 %v4573, %v4578
  %v4594 = vadd.f32 %v4574, %v4578
  %v4595 = vadd.f32 %v4276, %v4579
  %v4596 = vadd.f32 %v4277, %v4580
  %v4597 = vadd.f32 %v4278, %v4581
  %v4598 = vadd.f32 %v4279, %v4582
  %v4599 = vadd.f32 %v4280, %v4583
  %v4600 = vadd.f32 %v4281, %v4584
  %v4601 = vadd.f32 %v4282, %v4585
  %v4602 = vadd.f32 %v4283, %v4586
  %v4603 = vadd.f32 %v4284, %v4587
  %v4604 = vadd.f32 %v4285, %v4588
  %v4605 = vadd.f32 %v4286, %v4589
  %v4606 = vadd.f32 %v4287, %v4590
  %v4607 = vadd.f32 %v4288, %v4591
  %v4608 = vadd.f32 %v4289, %v4592
  %v4609 = vadd.f32 %v4290, %v4593
  %v4610 = vadd.f32 %v4291, %v4594
  %v4611 = vmax.f32 %v4595, 0.0
  %v4612 = vmax.f32 %v4596, 0.0
  %v4613 = vmax.f32 %v4597, 0.0
  %v4614 = vmax.f32 %v4598, 0.0
  %v4615 = vmax.f32 %v4599, 0.0
  %v4616 = vmax.f32 %v4600, 0.0
  %v4617 = vmax.f32 %v4601, 0.0
  %v4618 = vmax.f32 %v4602, 0.0
  %v4619 = vmax.f32 %v4603, 0.0
  %v4620 = vmax.f32 %v4604, 0.0
  %v4621 = vmax.f32 %v4605, 0.0
  %v4622 = vmax.f32 %v4606, 0.0
  %v4623 = vmax.f32 %v4607, 0.0
  %v4624 = vmax.f32 %v4608, 0.0
  %v4625 = vmax.f32 %v4609, 0.0
  %v4626 = vmax.f32 %v4610, 0.0
  %s4627 = scalar_lea.vmem %s2, 40
  %v4628 = vld [vmem:[%s4627] sm:$0xf]
  %v4629 = vld [vmem:[%s4627 + $0x4] sm:$0xf]
  %v4630 = vpack.c.bf16 %v4612, %v4611
  %v4631 = vpack.c.bf16 %v4614, %v4613
  %v4632 = vpack.c.bf16 %v4616, %v4615
  %v4633 = vpack.c.bf16 %v4618, %v4617
  %v4634 = vpack.c.bf16 %v4620, %v4619
  %v4635 = vpack.c.bf16 %v4622, %v4621
  %v4636 = vpack.c.bf16 %v4624, %v4623
  %v4637 = vpack.c.bf16 %v4626, %v4625
  %v4638 = vlaneseq
  %v4639 = vshrl.u32 %v4638, 7
  %v4640 = vsub.s32 0, %v4639
  %v4641 = vrot.slane %v25, %v4640
  %v4644 = vunpack.c.l.b16 %v4628
  %v4645 = vunpack.c.l.b16 %v4629
  %v4646 = vpack.c.b16 %v4645, %v4644
  %v4649 = vsel %vm274, %v4630, 0
  %v4652 = vsel %vm274, %v4631, 0
  %v4655 = vsel %vm274, %v4632, 0
  %v4658 = vsel %vm274, %v4633, 0
  %v4661 = vsel %vm274, %v4634, 0
  %v4664 = vsel %vm274, %v4635, 0
  %v4667 = vsel %vm274, %v4636, 0
  %v4670 = vsel %vm274, %v4637, 0
  %4672 = vmatprep.subr.bf16.mxu0 0
  %4673 = vmatpush1.bf16.msra.mxu0 %v4646
  %4674 = vmatprep.subr.bf16.mxu0 0
  %4675 = vmatpush1.bf16.msra.mxu0 0
  %4676 = vmatprep.subr.bf16.mxu0 0
  %4677 = vmatpush1.bf16.msra.mxu0 0
  %4678 = vmatprep.subr.bf16.mxu0 0
  %4679 = vmatpush1.bf16.msra.mxu0 0
  %4680 = vmatprep.subr.bf16.mxu0 0
  %4681 = vmatpush1.bf16.msra.mxu0 0
  %4682 = vmatprep.subr.bf16.mxu0 0
  %4683 = vmatpush1.bf16.msra.mxu0 0
  %4684 = vmatprep.subr.bf16.mxu0 0
  %4685 = vmatpush1.bf16.msra.mxu0 0
  %4686 = vmatprep.subr.bf16.mxu0 0
  %4687 = vmatpush1.bf16.msra.mxu0 0
  %4688 = vmatprep.subr.bf16.mxu0 0
  %4689 = vmatpush1.bf16.msra.mxu0 0
  %4690 = vmatprep.subr.bf16.mxu0 0
  %4691 = vmatpush1.bf16.msra.mxu0 0
  %4692 = vmatprep.subr.bf16.mxu0 0
  %4693 = vmatpush1.bf16.msra.mxu0 0
  %4694 = vmatprep.subr.bf16.mxu0 0
  %4695 = vmatpush1.bf16.msra.mxu0 0
  %4696 = vmatprep.subr.bf16.mxu0 0
  %4697 = vmatpush1.bf16.msra.mxu0 0
  %4698 = vmatprep.subr.bf16.mxu0 0
  %4699 = vmatpush1.bf16.msra.mxu0 0
  %4700 = vmatprep.subr.bf16.mxu0 0
  %4701 = vmatpush1.bf16.msra.mxu0 0
  %4702 = vmatprep.subr.bf16.mxu0 0
  %4703 = vmatpush1.bf16.msra.mxu0 0
  %4704 = vmatprep.mubr.bf16.mxu0 0
  %4705 = vmatmul.mubr.bf16.gmra.mrb[0].mxu0 %v4649
  %v4706 = vpop.f32.mrb[0].mxu0
  %v4707 = vadd.f32 %v4641, %v4706
  %v4708 = vpop.f32.mrb[0].mxu0
  %v4709 = vpop.f32.mrb[0].mxu0
  %v4710 = vadd.f32 %v4641, %v4709
  %v4711 = vpop.f32.mrb[0].mxu0
  %4712 = vmatprep.mubr.bf16.mxu0 0
  %4713 = vmatmul.mubr.bf16.gmra.mrb[0].mxu0 %v4652
  %v4714 = vpop.f32.mrb[0].mxu0
  %v4715 = vadd.f32 %v4641, %v4714
  %v4716 = vpop.f32.mrb[0].mxu0
  %v4717 = vpop.f32.mrb[0].mxu0
  %v4718 = vadd.f32 %v4641, %v4717
  %v4719 = vpop.f32.mrb[0].mxu0
  %4720 = vmatprep.mubr.bf16.mxu0 0
  %4721 = vmatmul.mubr.bf16.gmra.mrb[0].mxu0 %v4655
  %v4722 = vpop.f32.mrb[0].mxu0
  %v4723 = vadd.f32 %v4641, %v4722
  %v4724 = vpop.f32.mrb[0].mxu0
  %v4725 = vpop.f32.mrb[0].mxu0
  %v4726 = vadd.f32 %v4641, %v4725
  %v4727 = vpop.f32.mrb[0].mxu0
  %4728 = vmatprep.mubr.bf16.mxu0 0
  %4729 = vmatmul.mubr.bf16.gmra.mrb[0].mxu0 %v4658
  %v4730 = vpop.f32.mrb[0].mxu0
  %v4731 = vadd.f32 %v4641, %v4730
  %v4732 = vpop.f32.mrb[0].mxu0
  %v4733 = vpop.f32.mrb[0].mxu0
  %v4734 = vadd.f32 %v4641, %v4733
  %v4735 = vpop.f32.mrb[0].mxu0
  %4736 = vmatprep.mubr.bf16.mxu0 0
  %4737 = vmatmul.mubr.bf16.gmra.mrb[0].mxu0 %v4661
  %v4738 = vpop.f32.mrb[0].mxu0
  %v4739 = vadd.f32 %v4641, %v4738
  %v4740 = vpop.f32.mrb[0].mxu0
  %v4741 = vpop.f32.mrb[0].mxu0
  %v4742 = vadd.f32 %v4641, %v4741
  %v4743 = vpop.f32.mrb[0].mxu0
  %4744 = vmatprep.mubr.bf16.mxu0 0
  %4745 = vmatmul.mubr.bf16.gmra.mrb[0].mxu0 %v4664
  %v4746 = vpop.f32.mrb[0].mxu0
  %v4747 = vadd.f32 %v4641, %v4746
  %v4748 = vpop.f32.mrb[0].mxu0
  %v4749 = vpop.f32.mrb[0].mxu0
  %v4750 = vadd.f32 %v4641, %v4749
  %v4751 = vpop.f32.mrb[0].mxu0
  %4752 = vmatprep.mubr.bf16.mxu0 0
  %4753 = vmatmul.mubr.bf16.gmra.mrb[0].mxu0 %v4667
  %v4754 = vpop.f32.mrb[0].mxu0
  %v4755 = vadd.f32 %v4641, %v4754
  %v4756 = vpop.f32.mrb[0].mxu0
  %v4757 = vpop.f32.mrb[0].mxu0
  %v4758 = vadd.f32 %v4641, %v4757
  %v4759 = vpop.f32.mrb[0].mxu0
  %4760 = vmatprep.mubr.bf16.mxu0 0
  %4761 = vmatmul.mubr.bf16.gmra.mrb[0].mxu0 %v4670
  %v4762 = vpop.f32.mrb[0].mxu0
  %v4763 = vadd.f32 %v4641, %v4762
  %v4764 = vpop.f32.mrb[0].mxu0
  %v4765 = vpop.f32.mrb[0].mxu0
  %v4766 = vadd.f32 %v4641, %v4765
  %v4767 = vpop.f32.mrb[0].mxu0
  %4768 = vdwg.mxu0
  %v4769 = vmul.f32 %v4707, %v4707
  %v4770 = vmul.f32 %v4710, %v4710
  %v4771 = vmul.f32 %v4715, %v4715
  %v4772 = vmul.f32 %v4718, %v4718
  %v4773 = vmul.f32 %v4723, %v4723
  %v4774 = vmul.f32 %v4726, %v4726
  %v4775 = vmul.f32 %v4731, %v4731
  %v4776 = vmul.f32 %v4734, %v4734
  %v4777 = vmul.f32 %v4739, %v4739
  %v4778 = vmul.f32 %v4742, %v4742
  %v4779 = vmul.f32 %v4747, %v4747
  %v4780 = vmul.f32 %v4750, %v4750
  %v4781 = vmul.f32 %v4755, %v4755
  %v4782 = vmul.f32 %v4758, %v4758
  %v4783 = vmul.f32 %v4763, %v4763
  %v4784 = vmul.f32 %v4766, %v4766
  %4801 = vrot.lane.b32.xlu0 %v4769, 16
  %v4802 = vpop.permute.xlu0 %4801
  %4803 = vrot.lane.b32.xlu0 %v4770, 16
  %v4804 = vpop.permute.xlu0 %4803
  %4805 = vrot.lane.b32.xlu0 %v4771, 16
  %v4806 = vpop.permute.xlu0 %4805
  %4807 = vrot.lane.b32.xlu0 %v4772, 16
  %v4808 = vpop.permute.xlu0 %4807
  %4809 = vrot.lane.b32.xlu0 %v4773, 16
  %v4810 = vpop.permute.xlu0 %4809
  %4811 = vrot.lane.b32.xlu0 %v4774, 16
  %v4812 = vpop.permute.xlu0 %4811
  %4813 = vrot.lane.b32.xlu0 %v4775, 16
  %v4814 = vpop.permute.xlu0 %4813
  %4815 = vrot.lane.b32.xlu0 %v4776, 16
  %v4816 = vpop.permute.xlu0 %4815
  %4817 = vrot.lane.b32.xlu0 %v4777, 16
  %v4818 = vpop.permute.xlu0 %4817
  %4819 = vrot.lane.b32.xlu0 %v4778, 16
  %v4820 = vpop.permute.xlu0 %4819
  %4821 = vrot.lane.b32.xlu0 %v4779, 16
  %v4822 = vpop.permute.xlu0 %4821
  %4823 = vrot.lane.b32.xlu0 %v4780, 16
  %v4824 = vpop.permute.xlu0 %4823
  %4825 = vrot.lane.b32.xlu0 %v4781, 16
  %v4826 = vpop.permute.xlu0 %4825
  %4827 = vrot.lane.b32.xlu0 %v4782, 16
  %v4828 = vpop.permute.xlu0 %4827
  %4829 = vrot.lane.b32.xlu0 %v4783, 16
  %v4830 = vpop.permute.xlu0 %4829
  %4831 = vrot.lane.b32.xlu0 %v4784, 16
  %v4832 = vpop.permute.xlu0 %4831
  %v4849 = vsel %vm274, %v4707, %v4802
  %v4850 = vsel %vm274, %v4710, %v4804
  %v4851 = vsel %vm274, %v4715, %v4806
  %v4852 = vsel %vm274, %v4718, %v4808
  %v4853 = vsel %vm274, %v4723, %v4810
  %v4854 = vsel %vm274, %v4726, %v4812
  %v4855 = vsel %vm274, %v4731, %v4814
  %v4856 = vsel %vm274, %v4734, %v4816
  %v4857 = vsel %vm274, %v4739, %v4818
  %v4858 = vsel %vm274, %v4742, %v4820
  %v4859 = vsel %vm274, %v4747, %v4822
  %v4860 = vsel %vm274, %v4750, %v4824
  %v4861 = vsel %vm274, %v4755, %v4826
  %v4862 = vsel %vm274, %v4758, %v4828
  %v4863 = vsel %vm274, %v4763, %v4830
  %v4864 = vsel %vm274, %v4766, %v4832
  %v4865 = vsel %vm72, %v4849, 0.0
  %v4866 = vsel %vm72, %v4850, 0.0
  %v4867 = vadd.f32 %v4865, %v4866
  %v4868 = vsel %vm72, %v4851, 0.0
  %v4869 = vadd.f32 %v4867, %v4868
  %v4870 = vsel %vm72, %v4852, 0.0
  %v4871 = vadd.f32 %v4869, %v4870
  %v4872 = vsel %vm72, %v4853, 0.0
  %v4873 = vadd.f32 %v4871, %v4872
  %v4874 = vsel %vm72, %v4854, 0.0
  %v4875 = vadd.f32 %v4873, %v4874
  %v4876 = vsel %vm72, %v4855, 0.0
  %v4877 = vadd.f32 %v4875, %v4876
  %v4878 = vsel %vm72, %v4856, 0.0
  %v4879 = vadd.f32 %v4877, %v4878
  %v4880 = vsel %vm72, %v4857, 0.0
  %v4881 = vadd.f32 %v4879, %v4880
  %v4882 = vsel %vm72, %v4858, 0.0
  %v4883 = vadd.f32 %v4881, %v4882
  %v4884 = vsel %vm72, %v4859, 0.0
  %v4885 = vadd.f32 %v4883, %v4884
  %v4886 = vsel %vm72, %v4860, 0.0
  %v4887 = vadd.f32 %v4885, %v4886
  %v4888 = vsel %vm72, %v4861, 0.0
  %v4889 = vadd.f32 %v4887, %v4888
  %v4890 = vsel %vm72, %v4862, 0.0
  %v4891 = vadd.f32 %v4889, %v4890
  %v4892 = vsel %vm72, %v4863, 0.0
  %v4893 = vadd.f32 %v4891, %v4892
  %v4894 = vsel %vm72, %v4864, 0.0
  %v4895 = vadd.f32 %v4893, %v4894
  %v4896 = vrot.slane %v4895, 4
  %v4897 = vadd.f32 %v4895, %v4896
  %v4898 = vrot.slane %v4897, 2
  %v4899 = vadd.f32 %v4897, %v4898
  %v4900 = vrot.slane %v4899, 1
  %v4901 = vadd.f32 %v4899, %v4900
  %v4902 = vmul.f32 %v4901, %v328
  %v4903 = vmul.f32 %v4902, %v4902
  %4905 = vrot.lane.b32.xlu0 %v4903, 16
  %v4906 = vpop.permute.xlu0 %4905
  %v4908 = vsub.f32 %v4902, %v4906
  %v4909 = vmax.f32 %v4908, 0.0
  %v4910 = vadd.f32 %v4909, 1e-05
  %v4911 = vrsqrt.pop %v4910
  %v4913 = vrot.slane %v4911, 2
  %4914 = vrot.lane.b32.xlu0 %v4913, 112
  %v4915 = vpop.permute.xlu0 %4914
  %v4917 = vmul.f32 %v25, %v4915
  %v4918 = vmul.f32 %v4902, %v4917
  %v4920 = vrot.slane %v4918, 2
  %v4922 = vsub.f32 %v26, %v4920
  %v4923 = vlaneseq
  %v4924 = vshrl.u32 %v4923, 7
  %v4925 = vsub.s32 6, %v4924
  %v4926 = vrot.slane %v4917, %v4925
  %v4927 = vmul.f32 %v4707, %v4926
  %v4928 = vmul.f32 %v4710, %v4926
  %v4929 = vmul.f32 %v4715, %v4926
  %v4930 = vmul.f32 %v4718, %v4926
  %v4931 = vmul.f32 %v4723, %v4926
  %v4932 = vmul.f32 %v4726, %v4926
  %v4933 = vmul.f32 %v4731, %v4926
  %v4934 = vmul.f32 %v4734, %v4926
  %v4935 = vmul.f32 %v4739, %v4926
  %v4936 = vmul.f32 %v4742, %v4926
  %v4937 = vmul.f32 %v4747, %v4926
  %v4938 = vmul.f32 %v4750, %v4926
  %v4939 = vmul.f32 %v4755, %v4926
  %v4940 = vmul.f32 %v4758, %v4926
  %v4941 = vmul.f32 %v4763, %v4926
  %v4942 = vmul.f32 %v4766, %v4926
  %v4943 = vlaneseq
  %v4944 = vshrl.u32 %v4943, 7
  %v4945 = vsub.s32 4, %v4944
  %v4946 = vrot.slane %v4922, %v4945
  %v4947 = vadd.f32 %v4927, %v4946
  %v4948 = vadd.f32 %v4928, %v4946
  %v4949 = vadd.f32 %v4929, %v4946
  %v4950 = vadd.f32 %v4930, %v4946
  %v4951 = vadd.f32 %v4931, %v4946
  %v4952 = vadd.f32 %v4932, %v4946
  %v4953 = vadd.f32 %v4933, %v4946
  %v4954 = vadd.f32 %v4934, %v4946
  %v4955 = vadd.f32 %v4935, %v4946
  %v4956 = vadd.f32 %v4936, %v4946
  %v4957 = vadd.f32 %v4937, %v4946
  %v4958 = vadd.f32 %v4938, %v4946
  %v4959 = vadd.f32 %v4939, %v4946
  %v4960 = vadd.f32 %v4940, %v4946
  %v4961 = vadd.f32 %v4941, %v4946
  %v4962 = vadd.f32 %v4942, %v4946
  %v4963 = vmax.f32 %v4947, 0.0
  %v4964 = vmax.f32 %v4948, 0.0
  %v4965 = vmax.f32 %v4949, 0.0
  %v4966 = vmax.f32 %v4950, 0.0
  %v4967 = vmax.f32 %v4951, 0.0
  %v4968 = vmax.f32 %v4952, 0.0
  %v4969 = vmax.f32 %v4953, 0.0
  %v4970 = vmax.f32 %v4954, 0.0
  %v4971 = vmax.f32 %v4955, 0.0
  %v4972 = vmax.f32 %v4956, 0.0
  %v4973 = vmax.f32 %v4957, 0.0
  %v4974 = vmax.f32 %v4958, 0.0
  %v4975 = vmax.f32 %v4959, 0.0
  %v4976 = vmax.f32 %v4960, 0.0
  %v4977 = vmax.f32 %v4961, 0.0
  %v4978 = vmax.f32 %v4962, 0.0
  %v4979 = vpack.c.bf16 %v4964, %v4963
  %v4980 = vpack.c.bf16 %v4966, %v4965
  %v4981 = vpack.c.bf16 %v4968, %v4967
  %v4982 = vpack.c.bf16 %v4970, %v4969
  %v4983 = vpack.c.bf16 %v4972, %v4971
  %v4984 = vpack.c.bf16 %v4974, %v4973
  %v4985 = vpack.c.bf16 %v4976, %v4975
  %v4986 = vpack.c.bf16 %v4978, %v4977
  %v4988 = vsel %vm274, %v4979, 0
  %v4991 = vsel %vm274, %v4980, 0
  %v4994 = vsel %vm274, %v4981, 0
  %v4997 = vsel %vm274, %v4982, 0
  %v5000 = vsel %vm274, %v4983, 0
  %v5003 = vsel %vm274, %v4984, 0
  %v5006 = vsel %vm274, %v4985, 0
  %v5009 = vsel %vm274, %v4986, 0
  %5011 = vmatprep.subr.bf16.mxu0 0
  %5012 = vmatpush1.bf16.msra.mxu0 %v4646
  %5013 = vmatprep.subr.bf16.mxu0 0
  %5014 = vmatpush1.bf16.msra.mxu0 0
  %5015 = vmatprep.subr.bf16.mxu0 0
  %5016 = vmatpush1.bf16.msra.mxu0 0
  %5017 = vmatprep.subr.bf16.mxu0 0
  %5018 = vmatpush1.bf16.msra.mxu0 0
  %5019 = vmatprep.subr.bf16.mxu0 0
  %5020 = vmatpush1.bf16.msra.mxu0 0
  %5021 = vmatprep.subr.bf16.mxu0 0
  %5022 = vmatpush1.bf16.msra.mxu0 0
  %5023 = vmatprep.subr.bf16.mxu0 0
  %5024 = vmatpush1.bf16.msra.mxu0 0
  %5025 = vmatprep.subr.bf16.mxu0 0
  %5026 = vmatpush1.bf16.msra.mxu0 0
  %5027 = vmatprep.subr.bf16.mxu0 0
  %5028 = vmatpush1.bf16.msra.mxu0 0
  %5029 = vmatprep.subr.bf16.mxu0 0
  %5030 = vmatpush1.bf16.msra.mxu0 0
  %5031 = vmatprep.subr.bf16.mxu0 0
  %5032 = vmatpush1.bf16.msra.mxu0 0
  %5033 = vmatprep.subr.bf16.mxu0 0
  %5034 = vmatpush1.bf16.msra.mxu0 0
  %5035 = vmatprep.subr.bf16.mxu0 0
  %5036 = vmatpush1.bf16.msra.mxu0 0
  %5037 = vmatprep.subr.bf16.mxu0 0
  %5038 = vmatpush1.bf16.msra.mxu0 0
  %5039 = vmatprep.subr.bf16.mxu0 0
  %5040 = vmatpush1.bf16.msra.mxu0 0
  %5041 = vmatprep.subr.bf16.mxu0 0
  %5042 = vmatpush1.bf16.msra.mxu0 0
  %5043 = vmatprep.mubr.bf16.mxu0 0
  %5044 = vmatmul.mubr.bf16.gmra.mrb[0].mxu0 %v4988
  %v5045 = vpop.f32.mrb[0].mxu0
  %v5046 = vadd.f32 %v4641, %v5045
  %v5047 = vpop.f32.mrb[0].mxu0
  %v5048 = vpop.f32.mrb[0].mxu0
  %v5049 = vadd.f32 %v4641, %v5048
  %v5050 = vpop.f32.mrb[0].mxu0
  %5051 = vmatprep.mubr.bf16.mxu0 0
  %5052 = vmatmul.mubr.bf16.gmra.mrb[0].mxu0 %v4991
  %v5053 = vpop.f32.mrb[0].mxu0
  %v5054 = vadd.f32 %v4641, %v5053
  %v5055 = vpop.f32.mrb[0].mxu0
  %v5056 = vpop.f32.mrb[0].mxu0
  %v5057 = vadd.f32 %v4641, %v5056
  %v5058 = vpop.f32.mrb[0].mxu0
  %5059 = vmatprep.mubr.bf16.mxu0 0
  %5060 = vmatmul.mubr.bf16.gmra.mrb[0].mxu0 %v4994
  %v5061 = vpop.f32.mrb[0].mxu0
  %v5062 = vadd.f32 %v4641, %v5061
  %v5063 = vpop.f32.mrb[0].mxu0
  %v5064 = vpop.f32.mrb[0].mxu0
  %v5065 = vadd.f32 %v4641, %v5064
  %v5066 = vpop.f32.mrb[0].mxu0
  %5067 = vmatprep.mubr.bf16.mxu0 0
  %5068 = vmatmul.mubr.bf16.gmra.mrb[0].mxu0 %v4997
  %v5069 = vpop.f32.mrb[0].mxu0
  %v5070 = vadd.f32 %v4641, %v5069
  %v5071 = vpop.f32.mrb[0].mxu0
  %v5072 = vpop.f32.mrb[0].mxu0
  %v5073 = vadd.f32 %v4641, %v5072
  %v5074 = vpop.f32.mrb[0].mxu0
  %5075 = vmatprep.mubr.bf16.mxu0 0
  %5076 = vmatmul.mubr.bf16.gmra.mrb[0].mxu0 %v5000
  %v5077 = vpop.f32.mrb[0].mxu0
  %v5078 = vadd.f32 %v4641, %v5077
  %v5079 = vpop.f32.mrb[0].mxu0
  %v5080 = vpop.f32.mrb[0].mxu0
  %v5081 = vadd.f32 %v4641, %v5080
  %v5082 = vpop.f32.mrb[0].mxu0
  %5083 = vmatprep.mubr.bf16.mxu0 0
  %5084 = vmatmul.mubr.bf16.gmra.mrb[0].mxu0 %v5003
  %v5085 = vpop.f32.mrb[0].mxu0
  %v5086 = vadd.f32 %v4641, %v5085
  %v5087 = vpop.f32.mrb[0].mxu0
  %v5088 = vpop.f32.mrb[0].mxu0
  %v5089 = vadd.f32 %v4641, %v5088
  %v5090 = vpop.f32.mrb[0].mxu0
  %5091 = vmatprep.mubr.bf16.mxu0 0
  %5092 = vmatmul.mubr.bf16.gmra.mrb[0].mxu0 %v5006
  %v5093 = vpop.f32.mrb[0].mxu0
  %v5094 = vadd.f32 %v4641, %v5093
  %v5095 = vpop.f32.mrb[0].mxu0
  %v5096 = vpop.f32.mrb[0].mxu0
  %v5097 = vadd.f32 %v4641, %v5096
  %v5098 = vpop.f32.mrb[0].mxu0
  %5099 = vmatprep.mubr.bf16.mxu0 0
  %5100 = vmatmul.mubr.bf16.gmra.mrb[0].mxu0 %v5009
  %v5101 = vpop.f32.mrb[0].mxu0
  %v5102 = vadd.f32 %v4641, %v5101
  %v5103 = vpop.f32.mrb[0].mxu0
  %v5104 = vpop.f32.mrb[0].mxu0
  %v5105 = vadd.f32 %v4641, %v5104
  %v5106 = vpop.f32.mrb[0].mxu0
  %5107 = vdwg.mxu0
  %v5108 = vmax.f32 %v5046, 0.0
  %v5109 = vmax.f32 %v5049, 0.0
  %v5110 = vmax.f32 %v5054, 0.0
  %v5111 = vmax.f32 %v5057, 0.0
  %v5112 = vmax.f32 %v5062, 0.0
  %v5113 = vmax.f32 %v5065, 0.0
  %v5114 = vmax.f32 %v5070, 0.0
  %v5115 = vmax.f32 %v5073, 0.0
  %v5116 = vmax.f32 %v5078, 0.0
  %v5117 = vmax.f32 %v5081, 0.0
  %v5118 = vmax.f32 %v5086, 0.0
  %v5119 = vmax.f32 %v5089, 0.0
  %v5120 = vmax.f32 %v5094, 0.0
  %v5121 = vmax.f32 %v5097, 0.0
  %v5122 = vmax.f32 %v5102, 0.0
  %v5123 = vmax.f32 %v5105, 0.0
  %v5124 = vmul.f32 %v5108, %v5108
  %v5125 = vmul.f32 %v5109, %v5109
  %v5126 = vmul.f32 %v5110, %v5110
  %v5127 = vmul.f32 %v5111, %v5111
  %v5128 = vmul.f32 %v5112, %v5112
  %v5129 = vmul.f32 %v5113, %v5113
  %v5130 = vmul.f32 %v5114, %v5114
  %v5131 = vmul.f32 %v5115, %v5115
  %v5132 = vmul.f32 %v5116, %v5116
  %v5133 = vmul.f32 %v5117, %v5117
  %v5134 = vmul.f32 %v5118, %v5118
  %v5135 = vmul.f32 %v5119, %v5119
  %v5136 = vmul.f32 %v5120, %v5120
  %v5137 = vmul.f32 %v5121, %v5121
  %v5138 = vmul.f32 %v5122, %v5122
  %v5139 = vmul.f32 %v5123, %v5123
  %5156 = vrot.lane.b32.xlu0 %v5124, 16
  %v5157 = vpop.permute.xlu0 %5156
  %5158 = vrot.lane.b32.xlu0 %v5125, 16
  %v5159 = vpop.permute.xlu0 %5158
  %5160 = vrot.lane.b32.xlu0 %v5126, 16
  %v5161 = vpop.permute.xlu0 %5160
  %5162 = vrot.lane.b32.xlu0 %v5127, 16
  %v5163 = vpop.permute.xlu0 %5162
  %5164 = vrot.lane.b32.xlu0 %v5128, 16
  %v5165 = vpop.permute.xlu0 %5164
  %5166 = vrot.lane.b32.xlu0 %v5129, 16
  %v5167 = vpop.permute.xlu0 %5166
  %5168 = vrot.lane.b32.xlu0 %v5130, 16
  %v5169 = vpop.permute.xlu0 %5168
  %5170 = vrot.lane.b32.xlu0 %v5131, 16
  %v5171 = vpop.permute.xlu0 %5170
  %5172 = vrot.lane.b32.xlu0 %v5132, 16
  %v5173 = vpop.permute.xlu0 %5172
  %5174 = vrot.lane.b32.xlu0 %v5133, 16
  %v5175 = vpop.permute.xlu0 %5174
  %5176 = vrot.lane.b32.xlu0 %v5134, 16
  %v5177 = vpop.permute.xlu0 %5176
  %5178 = vrot.lane.b32.xlu0 %v5135, 16
  %v5179 = vpop.permute.xlu0 %5178
  %5180 = vrot.lane.b32.xlu0 %v5136, 16
  %v5181 = vpop.permute.xlu0 %5180
  %5182 = vrot.lane.b32.xlu0 %v5137, 16
  %v5183 = vpop.permute.xlu0 %5182
  %5184 = vrot.lane.b32.xlu0 %v5138, 16
  %v5185 = vpop.permute.xlu0 %5184
  %5186 = vrot.lane.b32.xlu0 %v5139, 16
  %v5187 = vpop.permute.xlu0 %5186
  %v5204 = vsel %vm274, %v5108, %v5157
  %v5205 = vsel %vm274, %v5109, %v5159
  %v5206 = vsel %vm274, %v5110, %v5161
  %v5207 = vsel %vm274, %v5111, %v5163
  %v5208 = vsel %vm274, %v5112, %v5165
  %v5209 = vsel %vm274, %v5113, %v5167
  %v5210 = vsel %vm274, %v5114, %v5169
  %v5211 = vsel %vm274, %v5115, %v5171
  %v5212 = vsel %vm274, %v5116, %v5173
  %v5213 = vsel %vm274, %v5117, %v5175
  %v5214 = vsel %vm274, %v5118, %v5177
  %v5215 = vsel %vm274, %v5119, %v5179
  %v5216 = vsel %vm274, %v5120, %v5181
  %v5217 = vsel %vm274, %v5121, %v5183
  %v5218 = vsel %vm274, %v5122, %v5185
  %v5219 = vsel %vm274, %v5123, %v5187
  %v5220 = vsel %vm72, %v5204, 0.0
  %v5221 = vsel %vm72, %v5205, 0.0
  %v5222 = vadd.f32 %v5220, %v5221
  %v5223 = vsel %vm72, %v5206, 0.0
  %v5224 = vadd.f32 %v5222, %v5223
  %v5225 = vsel %vm72, %v5207, 0.0
  %v5226 = vadd.f32 %v5224, %v5225
  %v5227 = vsel %vm72, %v5208, 0.0
  %v5228 = vadd.f32 %v5226, %v5227
  %v5229 = vsel %vm72, %v5209, 0.0
  %v5230 = vadd.f32 %v5228, %v5229
  %v5231 = vsel %vm72, %v5210, 0.0
  %v5232 = vadd.f32 %v5230, %v5231
  %v5233 = vsel %vm72, %v5211, 0.0
  %v5234 = vadd.f32 %v5232, %v5233
  %v5235 = vsel %vm72, %v5212, 0.0
  %v5236 = vadd.f32 %v5234, %v5235
  %v5237 = vsel %vm72, %v5213, 0.0
  %v5238 = vadd.f32 %v5236, %v5237
  %v5239 = vsel %vm72, %v5214, 0.0
  %v5240 = vadd.f32 %v5238, %v5239
  %v5241 = vsel %vm72, %v5215, 0.0
  %v5242 = vadd.f32 %v5240, %v5241
  %v5243 = vsel %vm72, %v5216, 0.0
  %v5244 = vadd.f32 %v5242, %v5243
  %v5245 = vsel %vm72, %v5217, 0.0
  %v5246 = vadd.f32 %v5244, %v5245
  %v5247 = vsel %vm72, %v5218, 0.0
  %v5248 = vadd.f32 %v5246, %v5247
  %v5249 = vsel %vm72, %v5219, 0.0
  %v5250 = vadd.f32 %v5248, %v5249
  %v5251 = vrot.slane %v5250, 4
  %v5252 = vadd.f32 %v5250, %v5251
  %v5253 = vrot.slane %v5252, 2
  %v5254 = vadd.f32 %v5252, %v5253
  %v5255 = vrot.slane %v5254, 1
  %v5256 = vadd.f32 %v5254, %v5255
  %v5257 = vmul.f32 %v5256, %v328
  %v5258 = vmul.f32 %v5257, %v5257
  %5260 = vrot.lane.b32.xlu0 %v5258, 16
  %v5261 = vpop.permute.xlu0 %5260
  %v5263 = vsub.f32 %v5257, %v5261
  %v5264 = vmax.f32 %v5263, 0.0
  %v5265 = vadd.f32 %v5264, 1e-05
  %v5266 = vrsqrt.pop %v5265
  %v5268 = vrot.slane %v5266, 2
  %5269 = vrot.lane.b32.xlu0 %v5268, 112
  %v5270 = vpop.permute.xlu0 %5269
  %v5272 = vmul.f32 %v25, %v5270
  %v5273 = vmul.f32 %v5257, %v5272
  %v5275 = vrot.slane %v5273, 2
  %v5277 = vsub.f32 %v26, %v5275
  %v5278 = vlaneseq
  %v5279 = vshrl.u32 %v5278, 7
  %v5280 = vsub.s32 6, %v5279
  %v5281 = vrot.slane %v5272, %v5280
  %v5282 = vmul.f32 %v5108, %v5281
  %v5283 = vmul.f32 %v5109, %v5281
  %v5284 = vmul.f32 %v5110, %v5281
  %v5285 = vmul.f32 %v5111, %v5281
  %v5286 = vmul.f32 %v5112, %v5281
  %v5287 = vmul.f32 %v5113, %v5281
  %v5288 = vmul.f32 %v5114, %v5281
  %v5289 = vmul.f32 %v5115, %v5281
  %v5290 = vmul.f32 %v5116, %v5281
  %v5291 = vmul.f32 %v5117, %v5281
  %v5292 = vmul.f32 %v5118, %v5281
  %v5293 = vmul.f32 %v5119, %v5281
  %v5294 = vmul.f32 %v5120, %v5281
  %v5295 = vmul.f32 %v5121, %v5281
  %v5296 = vmul.f32 %v5122, %v5281
  %v5297 = vmul.f32 %v5123, %v5281
  %v5298 = vlaneseq
  %v5299 = vshrl.u32 %v5298, 7
  %v5300 = vsub.s32 4, %v5299
  %v5301 = vrot.slane %v5277, %v5300
  %v5302 = vadd.f32 %v5282, %v5301
  %v5303 = vadd.f32 %v5283, %v5301
  %v5304 = vadd.f32 %v5284, %v5301
  %v5305 = vadd.f32 %v5285, %v5301
  %v5306 = vadd.f32 %v5286, %v5301
  %v5307 = vadd.f32 %v5287, %v5301
  %v5308 = vadd.f32 %v5288, %v5301
  %v5309 = vadd.f32 %v5289, %v5301
  %v5310 = vadd.f32 %v5290, %v5301
  %v5311 = vadd.f32 %v5291, %v5301
  %v5312 = vadd.f32 %v5292, %v5301
  %v5313 = vadd.f32 %v5293, %v5301
  %v5314 = vadd.f32 %v5294, %v5301
  %v5315 = vadd.f32 %v5295, %v5301
  %v5316 = vadd.f32 %v5296, %v5301
  %v5317 = vadd.f32 %v5297, %v5301
  %v5318 = vadd.f32 %v5302, %v4611
  %v5319 = vadd.f32 %v5303, %v4612
  %v5320 = vadd.f32 %v5304, %v4613
  %v5321 = vadd.f32 %v5305, %v4614
  %v5322 = vadd.f32 %v5306, %v4615
  %v5323 = vadd.f32 %v5307, %v4616
  %v5324 = vadd.f32 %v5308, %v4617
  %v5325 = vadd.f32 %v5309, %v4618
  %v5326 = vadd.f32 %v5310, %v4619
  %v5327 = vadd.f32 %v5311, %v4620
  %v5328 = vadd.f32 %v5312, %v4621
  %v5329 = vadd.f32 %v5313, %v4622
  %v5330 = vadd.f32 %v5314, %v4623
  %v5331 = vadd.f32 %v5315, %v4624
  %v5332 = vadd.f32 %v5316, %v4625
  %v5333 = vadd.f32 %v5317, %v4626
  %v5334 = vmax.f32 %v5318, 0.0
  %v5335 = vmax.f32 %v5319, 0.0
  %v5336 = vmax.f32 %v5320, 0.0
  %v5337 = vmax.f32 %v5321, 0.0
  %v5338 = vmax.f32 %v5322, 0.0
  %v5339 = vmax.f32 %v5323, 0.0
  %v5340 = vmax.f32 %v5324, 0.0
  %v5341 = vmax.f32 %v5325, 0.0
  %v5342 = vmax.f32 %v5326, 0.0
  %v5343 = vmax.f32 %v5327, 0.0
  %v5344 = vmax.f32 %v5328, 0.0
  %v5345 = vmax.f32 %v5329, 0.0
  %v5346 = vmax.f32 %v5330, 0.0
  %v5347 = vmax.f32 %v5331, 0.0
  %v5348 = vmax.f32 %v5332, 0.0
  %v5349 = vmax.f32 %v5333, 0.0
  %v5350 = vld [vmem:[%s4] sm:$0xff]
  %v5351 = vld [vmem:[%s4 + $0x8] sm:$0xff]
  %v5352 = vld [vmem:[%s5] sm:$0x1]
  %v5354 = vlaneseq
  %v5355 = vshrl.u32 %v5354, 7
  %v5356 = vsub.s32 0, %v5355
  %v5357 = vrot.slane %v5352, %v5356
  %v5360 = vsel %vm274, %v5334, 0
  %v5363 = vsel %vm274, %v5335, 0
  %v5366 = vsel %vm274, %v5336, 0
  %v5369 = vsel %vm274, %v5337, 0
  %v5372 = vsel %vm274, %v5338, 0
  %v5375 = vsel %vm274, %v5339, 0
  %v5378 = vsel %vm274, %v5340, 0
  %v5381 = vsel %vm274, %v5341, 0
  %v5384 = vsel %vm274, %v5342, 0
  %v5387 = vsel %vm274, %v5343, 0
  %v5390 = vsel %vm274, %v5344, 0
  %v5393 = vsel %vm274, %v5345, 0
  %v5396 = vsel %vm274, %v5346, 0
  %v5399 = vsel %vm274, %v5347, 0
  %v5402 = vsel %vm274, %v5348, 0
  %v5405 = vsel %vm274, %v5349, 0
  %5407 = vmatprep.subr.mxu0 0.0
  %5408 = vmatpush1.msra.mxu0 %v5350
  %5409 = vmatprep.subr.mxu0 0.0
  %5410 = vmatpush1.msra.mxu0 %v5351
  %5411 = vmatprep.subr.mxu0 0.0
  %5412 = vmatpush1.msra.mxu0 0.0
  %5413 = vmatprep.subr.mxu0 0.0
  %5414 = vmatpush1.msra.mxu0 0.0
  %5415 = vmatprep.subr.mxu0 0.0
  %5416 = vmatpush1.msra.mxu0 0.0
  %5417 = vmatprep.subr.mxu0 0.0
  %5418 = vmatpush1.msra.mxu0 0.0
  %5419 = vmatprep.subr.mxu0 0.0
  %5420 = vmatpush1.msra.mxu0 0.0
  %5421 = vmatprep.subr.mxu0 0.0
  %5422 = vmatpush1.msra.mxu0 0.0
  %5423 = vmatprep.subr.mxu0 0.0
  %5424 = vmatpush1.msra.mxu0 0.0
  %5425 = vmatprep.subr.mxu0 0.0
  %5426 = vmatpush1.msra.mxu0 0.0
  %5427 = vmatprep.subr.mxu0 0.0
  %5428 = vmatpush1.msra.mxu0 0.0
  %5429 = vmatprep.subr.mxu0 0.0
  %5430 = vmatpush1.msra.mxu0 0.0
  %5431 = vmatprep.subr.mxu0 0.0
  %5432 = vmatpush1.msra.mxu0 0.0
  %5433 = vmatprep.subr.mxu0 0.0
  %5434 = vmatpush1.msra.mxu0 0.0
  %5435 = vmatprep.subr.mxu0 0.0
  %5436 = vmatpush1.msra.mxu0 0.0
  %5437 = vmatprep.subr.mxu0 0.0
  %5438 = vmatpush1.msra.mxu0 0.0
  %5439 = vmatprep.subr.mxu0 0.0
  %5440 = vmatpush1.msra.mxu0 0.0
  %5441 = vmatprep.subr.mxu0 0.0
  %5442 = vmatpush1.msra.mxu0 0.0
  %5443 = vmatprep.subr.mxu0 0.0
  %5444 = vmatpush1.msra.mxu0 0.0
  %5445 = vmatprep.subr.mxu0 0.0
  %5446 = vmatpush1.msra.mxu0 0.0
  %5447 = vmatprep.subr.mxu0 0.0
  %5448 = vmatpush1.msra.mxu0 0.0
  %5449 = vmatprep.subr.mxu0 0.0
  %5450 = vmatpush1.msra.mxu0 0.0
  %5451 = vmatprep.subr.mxu0 0.0
  %5452 = vmatpush1.msra.mxu0 0.0
  %5453 = vmatprep.subr.mxu0 0.0
  %5454 = vmatpush1.msra.mxu0 0.0
  %5455 = vmatprep.subr.mxu0 0.0
  %5456 = vmatpush1.msra.mxu0 0.0
  %5457 = vmatprep.subr.mxu0 0.0
  %5458 = vmatpush1.msra.mxu0 0.0
  %5459 = vmatprep.subr.mxu0 0.0
  %5460 = vmatpush1.msra.mxu0 0.0
  %5461 = vmatprep.subr.mxu0 0.0
  %5462 = vmatpush1.msra.mxu0 0.0
  %5463 = vmatprep.subr.mxu0 0.0
  %5464 = vmatpush1.msra.mxu0 0.0
  %5465 = vmatprep.subr.mxu0 0.0
  %5466 = vmatpush1.msra.mxu0 0.0
  %5467 = vmatprep.subr.mxu0 0.0
  %5468 = vmatpush1.msra.mxu0 0.0
  %5469 = vmatprep.subr.mxu0 0.0
  %5470 = vmatpush1.msra.mxu0 0.0
  %5471 = vmatprep.mubr.f32.mxu0 0.0
  %5472 = vmatmul.mubr.f32.gmra.mrb[0].mxu0 %v5360
  %v5473 = vpop.f32.mrb[0].mxu0
  %v5474 = vadd.f32 %v5357, %v5473
  %v5475 = vpop.f32.mrb[0].mxu0
  %5476 = vmatprep.mubr.f32.mxu0 0.0
  %5477 = vmatmul.mubr.f32.gmra.mrb[0].mxu0 %v5363
  %v5478 = vpop.f32.mrb[0].mxu0
  %v5479 = vadd.f32 %v5357, %v5478
  %v5480 = vpop.f32.mrb[0].mxu0
  %5481 = vmatprep.mubr.f32.mxu0 0.0
  %5482 = vmatmul.mubr.f32.gmra.mrb[0].mxu0 %v5366
  %v5483 = vpop.f32.mrb[0].mxu0
  %v5484 = vadd.f32 %v5357, %v5483
  %v5485 = vpop.f32.mrb[0].mxu0
  %5486 = vmatprep.mubr.f32.mxu0 0.0
  %5487 = vmatmul.mubr.f32.gmra.mrb[0].mxu0 %v5369
  %v5488 = vpop.f32.mrb[0].mxu0
  %v5489 = vadd.f32 %v5357, %v5488
  %v5490 = vpop.f32.mrb[0].mxu0
  %5491 = vmatprep.mubr.f32.mxu0 0.0
  %5492 = vmatmul.mubr.f32.gmra.mrb[0].mxu0 %v5372
  %v5493 = vpop.f32.mrb[0].mxu0
  %v5494 = vadd.f32 %v5357, %v5493
  %v5495 = vpop.f32.mrb[0].mxu0
  %5496 = vmatprep.mubr.f32.mxu0 0.0
  %5497 = vmatmul.mubr.f32.gmra.mrb[0].mxu0 %v5375
  %v5498 = vpop.f32.mrb[0].mxu0
  %v5499 = vadd.f32 %v5357, %v5498
  %v5500 = vpop.f32.mrb[0].mxu0
  %5501 = vmatprep.mubr.f32.mxu0 0.0
  %5502 = vmatmul.mubr.f32.gmra.mrb[0].mxu0 %v5378
  %v5503 = vpop.f32.mrb[0].mxu0
  %v5504 = vadd.f32 %v5357, %v5503
  %v5505 = vpop.f32.mrb[0].mxu0
  %5506 = vmatprep.mubr.f32.mxu0 0.0
  %5507 = vmatmul.mubr.f32.gmra.mrb[0].mxu0 %v5381
  %v5508 = vpop.f32.mrb[0].mxu0
  %v5509 = vadd.f32 %v5357, %v5508
  %v5510 = vpop.f32.mrb[0].mxu0
  %5511 = vmatprep.mubr.f32.mxu0 0.0
  %5512 = vmatmul.mubr.f32.gmra.mrb[0].mxu0 %v5384
  %v5513 = vpop.f32.mrb[0].mxu0
  %v5514 = vadd.f32 %v5357, %v5513
  %v5515 = vpop.f32.mrb[0].mxu0
  %5516 = vmatprep.mubr.f32.mxu0 0.0
  %5517 = vmatmul.mubr.f32.gmra.mrb[0].mxu0 %v5387
  %v5518 = vpop.f32.mrb[0].mxu0
  %v5519 = vadd.f32 %v5357, %v5518
  %v5520 = vpop.f32.mrb[0].mxu0
  %5521 = vmatprep.mubr.f32.mxu0 0.0
  %5522 = vmatmul.mubr.f32.gmra.mrb[0].mxu0 %v5390
  %v5523 = vpop.f32.mrb[0].mxu0
  %v5524 = vadd.f32 %v5357, %v5523
  %v5525 = vpop.f32.mrb[0].mxu0
  %5526 = vmatprep.mubr.f32.mxu0 0.0
  %5527 = vmatmul.mubr.f32.gmra.mrb[0].mxu0 %v5393
  %v5528 = vpop.f32.mrb[0].mxu0
  %v5529 = vadd.f32 %v5357, %v5528
  %v5530 = vpop.f32.mrb[0].mxu0
  %5531 = vmatprep.mubr.f32.mxu0 0.0
  %5532 = vmatmul.mubr.f32.gmra.mrb[0].mxu0 %v5396
  %v5533 = vpop.f32.mrb[0].mxu0
  %v5534 = vadd.f32 %v5357, %v5533
  %v5535 = vpop.f32.mrb[0].mxu0
  %5536 = vmatprep.mubr.f32.mxu0 0.0
  %5537 = vmatmul.mubr.f32.gmra.mrb[0].mxu0 %v5399
  %v5538 = vpop.f32.mrb[0].mxu0
  %v5539 = vadd.f32 %v5357, %v5538
  %v5540 = vpop.f32.mrb[0].mxu0
  %5541 = vmatprep.mubr.f32.mxu0 0.0
  %5542 = vmatmul.mubr.f32.gmra.mrb[0].mxu0 %v5402
  %v5543 = vpop.f32.mrb[0].mxu0
  %v5544 = vadd.f32 %v5357, %v5543
  %v5545 = vpop.f32.mrb[0].mxu0
  %5546 = vmatprep.mubr.f32.mxu0 0.0
  %5547 = vmatmul.mubr.f32.gmra.mrb[0].mxu0 %v5405
  %v5548 = vpop.f32.mrb[0].mxu0
  %v5549 = vadd.f32 %v5357, %v5548
  %v5550 = vpop.f32.mrb[0].mxu0
  %5551 = vdwg.mxu0
  %v5552 = vlaneseq
  %v5553 = vand.u32 %v5552, 127
  %vm5554 = vcmp.ge.s32.totalorder %v5553, 1
  %vm5555 = vcmp.le.s32.totalorder %v5553, 6
  %vm5556 = vmand %vm5554, %vm5555
  %v5557 = vsel %vm5556, %v5474, -1e+30
  %v5558 = vsel %vm5556, %v5479, -1e+30
  %v5559 = vsel %vm5556, %v5484, -1e+30
  %v5560 = vsel %vm5556, %v5489, -1e+30
  %v5561 = vsel %vm5556, %v5494, -1e+30
  %v5562 = vsel %vm5556, %v5499, -1e+30
  %v5563 = vsel %vm5556, %v5504, -1e+30
  %v5564 = vsel %vm5556, %v5509, -1e+30
  %v5565 = vsel %vm5556, %v5514, -1e+30
  %v5566 = vsel %vm5556, %v5519, -1e+30
  %v5567 = vsel %vm5556, %v5524, -1e+30
  %v5568 = vsel %vm5556, %v5529, -1e+30
  %v5569 = vsel %vm5556, %v5534, -1e+30
  %v5570 = vsel %vm5556, %v5539, -1e+30
  %v5571 = vsel %vm5556, %v5544, -1e+30
  %v5572 = vsel %vm5556, %v5549, -1e+30
  %5573 = vmax.xlane.f32.xlu0 %v5557
  %v5574 = vpop.xlane.xlu0 %5573
  %5575 = vmax.xlane.f32.xlu0 %v5558
  %v5576 = vpop.xlane.xlu0 %5575
  %5577 = vmax.xlane.f32.xlu0 %v5559
  %v5578 = vpop.xlane.xlu0 %5577
  %5579 = vmax.xlane.f32.xlu0 %v5560
  %v5580 = vpop.xlane.xlu0 %5579
  %5581 = vmax.xlane.f32.xlu0 %v5561
  %v5582 = vpop.xlane.xlu0 %5581
  %5583 = vmax.xlane.f32.xlu0 %v5562
  %v5584 = vpop.xlane.xlu0 %5583
  %5585 = vmax.xlane.f32.xlu0 %v5563
  %v5586 = vpop.xlane.xlu0 %5585
  %5587 = vmax.xlane.f32.xlu0 %v5564
  %v5588 = vpop.xlane.xlu0 %5587
  %5589 = vmax.xlane.f32.xlu0 %v5565
  %v5590 = vpop.xlane.xlu0 %5589
  %5591 = vmax.xlane.f32.xlu0 %v5566
  %v5592 = vpop.xlane.xlu0 %5591
  %5593 = vmax.xlane.f32.xlu0 %v5567
  %v5594 = vpop.xlane.xlu0 %5593
  %5595 = vmax.xlane.f32.xlu0 %v5568
  %v5596 = vpop.xlane.xlu0 %5595
  %5597 = vmax.xlane.f32.xlu0 %v5569
  %v5598 = vpop.xlane.xlu0 %5597
  %5599 = vmax.xlane.f32.xlu0 %v5570
  %v5600 = vpop.xlane.xlu0 %5599
  %5601 = vmax.xlane.f32.xlu0 %v5571
  %v5602 = vpop.xlane.xlu0 %5601
  %5603 = vmax.xlane.f32.xlu0 %v5572
  %v5604 = vpop.xlane.xlu0 %5603
  %v5605 = vsub.f32 %v5557, %v5574
  %v5606 = vsub.f32 %v5558, %v5576
  %v5607 = vsub.f32 %v5559, %v5578
  %v5608 = vsub.f32 %v5560, %v5580
  %v5609 = vsub.f32 %v5561, %v5582
  %v5610 = vsub.f32 %v5562, %v5584
  %v5611 = vsub.f32 %v5563, %v5586
  %v5612 = vsub.f32 %v5564, %v5588
  %v5613 = vsub.f32 %v5565, %v5590
  %v5614 = vsub.f32 %v5566, %v5592
  %v5615 = vsub.f32 %v5567, %v5594
  %v5616 = vsub.f32 %v5568, %v5596
  %v5617 = vsub.f32 %v5569, %v5598
  %v5618 = vsub.f32 %v5570, %v5600
  %v5619 = vsub.f32 %v5571, %v5602
  %v5620 = vsub.f32 %v5572, %v5604
  %v5621 = vmul.f32 %v5605, 1.442695
  %v5622 = vpow.pop %v5621
  %v5623 = vmul.f32 %v5606, 1.442695
  %v5624 = vpow.pop %v5623
  %v5625 = vmul.f32 %v5607, 1.442695
  %v5626 = vpow.pop %v5625
  %v5627 = vmul.f32 %v5608, 1.442695
  %v5628 = vpow.pop %v5627
  %v5629 = vmul.f32 %v5609, 1.442695
  %v5630 = vpow.pop %v5629
  %v5631 = vmul.f32 %v5610, 1.442695
  %v5632 = vpow.pop %v5631
  %v5633 = vmul.f32 %v5611, 1.442695
  %v5634 = vpow.pop %v5633
  %v5635 = vmul.f32 %v5612, 1.442695
  %v5636 = vpow.pop %v5635
  %v5637 = vmul.f32 %v5613, 1.442695
  %v5638 = vpow.pop %v5637
  %v5639 = vmul.f32 %v5614, 1.442695
  %v5640 = vpow.pop %v5639
  %v5641 = vmul.f32 %v5615, 1.442695
  %v5642 = vpow.pop %v5641
  %v5643 = vmul.f32 %v5616, 1.442695
  %v5644 = vpow.pop %v5643
  %v5645 = vmul.f32 %v5617, 1.442695
  %v5646 = vpow.pop %v5645
  %v5647 = vmul.f32 %v5618, 1.442695
  %v5648 = vpow.pop %v5647
  %v5649 = vmul.f32 %v5619, 1.442695
  %v5650 = vpow.pop %v5649
  %v5651 = vmul.f32 %v5620, 1.442695
  %v5652 = vpow.pop %v5651
  %5653 = vadd.xlane.f32.xlu0 %v5622
  %v5654 = vpop.xlane.xlu0 %5653
  %5655 = vadd.xlane.f32.xlu0 %v5624
  %v5656 = vpop.xlane.xlu0 %5655
  %5657 = vadd.xlane.f32.xlu0 %v5626
  %v5658 = vpop.xlane.xlu0 %5657
  %5659 = vadd.xlane.f32.xlu0 %v5628
  %v5660 = vpop.xlane.xlu0 %5659
  %5661 = vadd.xlane.f32.xlu0 %v5630
  %v5662 = vpop.xlane.xlu0 %5661
  %5663 = vadd.xlane.f32.xlu0 %v5632
  %v5664 = vpop.xlane.xlu0 %5663
  %5665 = vadd.xlane.f32.xlu0 %v5634
  %v5666 = vpop.xlane.xlu0 %5665
  %5667 = vadd.xlane.f32.xlu0 %v5636
  %v5668 = vpop.xlane.xlu0 %5667
  %5669 = vadd.xlane.f32.xlu0 %v5638
  %v5670 = vpop.xlane.xlu0 %5669
  %5671 = vadd.xlane.f32.xlu0 %v5640
  %v5672 = vpop.xlane.xlu0 %5671
  %5673 = vadd.xlane.f32.xlu0 %v5642
  %v5674 = vpop.xlane.xlu0 %5673
  %5675 = vadd.xlane.f32.xlu0 %v5644
  %v5676 = vpop.xlane.xlu0 %5675
  %5677 = vadd.xlane.f32.xlu0 %v5646
  %v5678 = vpop.xlane.xlu0 %5677
  %5679 = vadd.xlane.f32.xlu0 %v5648
  %v5680 = vpop.xlane.xlu0 %5679
  %5681 = vadd.xlane.f32.xlu0 %v5650
  %v5682 = vpop.xlane.xlu0 %5681
  %5683 = vadd.xlane.f32.xlu0 %v5652
  %v5684 = vpop.xlane.xlu0 %5683
  %v5685 = vlog2.pop %v5654
  %v5686 = vmul.f32 %v5685, 0.6931472
  %v5687 = vlog2.pop %v5656
  %v5688 = vmul.f32 %v5687, 0.6931472
  %v5689 = vlog2.pop %v5658
  %v5690 = vmul.f32 %v5689, 0.6931472
  %v5691 = vlog2.pop %v5660
  %v5692 = vmul.f32 %v5691, 0.6931472
  %v5693 = vlog2.pop %v5662
  %v5694 = vmul.f32 %v5693, 0.6931472
  %v5695 = vlog2.pop %v5664
  %v5696 = vmul.f32 %v5695, 0.6931472
  %v5697 = vlog2.pop %v5666
  %v5698 = vmul.f32 %v5697, 0.6931472
  %v5699 = vlog2.pop %v5668
  %v5700 = vmul.f32 %v5699, 0.6931472
  %v5701 = vlog2.pop %v5670
  %v5702 = vmul.f32 %v5701, 0.6931472
  %v5703 = vlog2.pop %v5672
  %v5704 = vmul.f32 %v5703, 0.6931472
  %v5705 = vlog2.pop %v5674
  %v5706 = vmul.f32 %v5705, 0.6931472
  %v5707 = vlog2.pop %v5676
  %v5708 = vmul.f32 %v5707, 0.6931472
  %v5709 = vlog2.pop %v5678
  %v5710 = vmul.f32 %v5709, 0.6931472
  %v5711 = vlog2.pop %v5680
  %v5712 = vmul.f32 %v5711, 0.6931472
  %v5713 = vlog2.pop %v5682
  %v5714 = vmul.f32 %v5713, 0.6931472
  %v5715 = vlog2.pop %v5684
  %v5716 = vmul.f32 %v5715, 0.6931472
  %v5717 = vsub.f32 %v5474, %v5574
  %v5718 = vsub.f32 %v5479, %v5576
  %v5719 = vsub.f32 %v5484, %v5578
  %v5720 = vsub.f32 %v5489, %v5580
  %v5721 = vsub.f32 %v5494, %v5582
  %v5722 = vsub.f32 %v5499, %v5584
  %v5723 = vsub.f32 %v5504, %v5586
  %v5724 = vsub.f32 %v5509, %v5588
  %v5725 = vsub.f32 %v5514, %v5590
  %v5726 = vsub.f32 %v5519, %v5592
  %v5727 = vsub.f32 %v5524, %v5594
  %v5728 = vsub.f32 %v5529, %v5596
  %v5729 = vsub.f32 %v5534, %v5598
  %v5730 = vsub.f32 %v5539, %v5600
  %v5731 = vsub.f32 %v5544, %v5602
  %v5732 = vsub.f32 %v5549, %v5604
  %v5733 = vsub.f32 %v5717, %v5686
  %v5734 = vsub.f32 %v5718, %v5688
  %v5735 = vsub.f32 %v5719, %v5690
  %v5736 = vsub.f32 %v5720, %v5692
  %v5737 = vsub.f32 %v5721, %v5694
  %v5738 = vsub.f32 %v5722, %v5696
  %v5739 = vsub.f32 %v5723, %v5698
  %v5740 = vsub.f32 %v5724, %v5700
  %v5741 = vsub.f32 %v5725, %v5702
  %v5742 = vsub.f32 %v5726, %v5704
  %v5743 = vsub.f32 %v5727, %v5706
  %v5744 = vsub.f32 %v5728, %v5708
  %v5745 = vsub.f32 %v5729, %v5710
  %v5746 = vsub.f32 %v5730, %v5712
  %v5747 = vsub.f32 %v5731, %v5714
  %v5748 = vsub.f32 %v5732, %v5716
  %vm5749 = vcmp.eq.s32.totalorder %v5553, 0
  %v5750 = vsel %vm5749, %v5474, %v5733
  %v5751 = vsel %vm5749, %v5479, %v5734
  %v5752 = vsel %vm5749, %v5484, %v5735
  %v5753 = vsel %vm5749, %v5489, %v5736
  %v5754 = vsel %vm5749, %v5494, %v5737
  %v5755 = vsel %vm5749, %v5499, %v5738
  %v5756 = vsel %vm5749, %v5504, %v5739
  %v5757 = vsel %vm5749, %v5509, %v5740
  %v5758 = vsel %vm5749, %v5514, %v5741
  %v5759 = vsel %vm5749, %v5519, %v5742
  %v5760 = vsel %vm5749, %v5524, %v5743
  %v5761 = vsel %vm5749, %v5529, %v5744
  %v5762 = vsel %vm5749, %v5534, %v5745
  %v5763 = vsel %vm5749, %v5539, %v5746
  %v5764 = vsel %vm5749, %v5544, %v5747
  %v5765 = vsel %vm5749, %v5549, %v5748
  %5766 = vst [vmem:[%s6] sm:$0xff] %v5750
  %5767 = vst [vmem:[%s6 + $0x8] sm:$0xff] %v5751
  %5768 = vst [vmem:[%s6 + $0x10] sm:$0xff] %v5752
  %5769 = vst [vmem:[%s6 + $0x18] sm:$0xff] %v5753
  %5770 = vst [vmem:[%s6 + $0x20] sm:$0xff] %v5754
  %5771 = vst [vmem:[%s6 + $0x28] sm:$0xff] %v5755
  %5772 = vst [vmem:[%s6 + $0x30] sm:$0xff] %v5756
  %5773 = vst [vmem:[%s6 + $0x38] sm:$0xff] %v5757
  %5774 = vst [vmem:[%s6 + $0x40] sm:$0xff] %v5758
  %5775 = vst [vmem:[%s6 + $0x48] sm:$0xff] %v5759
  %5776 = vst [vmem:[%s6 + $0x50] sm:$0xff] %v5760
  %5777 = vst [vmem:[%s6 + $0x58] sm:$0xff] %v5761
  %5778 = vst [vmem:[%s6 + $0x60] sm:$0xff] %v5762
  %5779 = vst [vmem:[%s6 + $0x68] sm:$0xff] %v5763
  %5780 = vst [vmem:[%s6 + $0x70] sm:$0xff] %v5764
  %5781 = vst [vmem:[%s6 + $0x78] sm:$0xff] %v5765
  // Predicated region
  $region26: #{actor_critic_forward.1} parent=0 // pred_check
    _
  $region27: #{actor_critic_forward.1} parent=0 // pred_check_branch
    %5783 = sbr.rel (0) target = $region29
  $region28: #{actor_critic_forward.1} parent=0 // pred_region
    _
  $region29: #{actor_critic_forward.1} parent=0 // pred_fallthru
    _
  // Predicated region
  $region30: #{actor_critic_forward.1} parent=0 // pred_check
    _
  $region31: #{actor_critic_forward.1} parent=0 // pred_check_branch
    %5785 = sbr.rel (0) target = $region33
  $region32: #{actor_critic_forward.1} parent=0 // pred_region
    _
  $region33: #{actor_critic_forward.1} parent=0 // pred_fallthru
    _

</llo_original>
